<compile_context>
chip_gen: v7x
topology: tpu7x:2x2x1
jax: 0.10.0
libtpu: 0.0.40
codegen_flags: <defaults>
</compile_context>

<pallas_src>
import math

import jax
import jax.numpy as jnp
from jax.experimental import pallas as pl
from jax.experimental.pallas import tpu as pltpu

# ---- problem sizes (small, consistent with the module) ----
B, S, D = 2, 8, 32          # batch, seq, hidden
H = 4                       # n_heads
HD = D // H                 # head_dim
F = 2048                    # FeedForwardLayer default intermediate_dim
EPS = 1e-6                  # LayerNorm eps
NEG = -1000000000.0         # masked_fill value


def _layernorm(x, alpha, beta):
    """Module-style LayerNorm: unbiased std, (x-mean)/(std+eps)."""
    d = x.shape[-1]
    mean = jnp.mean(x, axis=-1, keepdims=True)
    var = jnp.sum((x - mean) ** 2, axis=-1, keepdims=True) / (d - 1)
    return alpha * (x - mean) / (jnp.sqrt(var) + EPS) + beta


def encoder_kernel(x_ref, bias_ref,
                   wqkv_ref, bqkv_ref, wo_ref, bo_ref,
                   a1_ref, be1_ref, a2_ref, be2_ref,
                   w1_ref, b1_ref, w2_ref, b2_ref,
                   out_ref):
    x = x_ref[...]              # (B*S, D) f32
    bias = bias_ref[...]        # (B*H*S, S) additive mask bias (0 / -1e9)

    # ---- norm1 ----
    h = _layernorm(x, a1_ref[...], be1_ref[...])

    # ---- fused q/k/v projection: (B*S, D) @ (D, 3D), bf16 in / f32 acc ----
    # 1/sqrt(head_dim) is already folded into the q columns of wqkv/bqkv.
    qkv = jnp.dot(h.astype(jnp.bfloat16), wqkv_ref[...],
                  preferred_element_type=jnp.float32) + bqkv_ref[...]
    q = qkv[:, 0 * D:1 * D]
    k = qkv[:, 1 * D:2 * D]
    v = qkv[:, 2 * D:3 * D]

    kT = k.T                    # (D, B*S) -- single XLU transpose

    # ---- per-(batch, head) logits kept in vregs, stacked to (B*H*S, S) ----
    logit_tiles = []
    for b in range(B):                      # static, fully unrolled (tiny)
        rq = slice(b * S, (b + 1) * S)
        for hh in range(H):
            cq = slice(hh * HD, (hh + 1) * HD)
            logit_tiles.append(jnp.dot(q[rq, cq], kT[cq, rq],
                                       preferred_element_type=jnp.float32))
    logits = jnp.concatenate(logit_tiles, axis=0) + bias   # (B*H*S, S)

    # ---- softmax, done once for all batches/heads ----
    m = jnp.max(logits, axis=-1, keepdims=True)
    p = jnp.exp(logits - m)
    attn = p * pl.reciprocal(jnp.sum(p, axis=-1, keepdims=True), approx=True)

    # ---- per-(batch, head) context, assembled with register-level concat ----
    row_blocks = []
    for b in range(B):
        rv = slice(b * S, (b + 1) * S)
        head_ctx = []
        for hh in range(H):
            cv = slice(hh * HD, (hh + 1) * HD)
            a_bh = attn[(b * H + hh) * S:(b * H + hh + 1) * S, :]   # (S, S)
            head_ctx.append(jnp.dot(a_bh, v[rv, cv],
                                    preferred_element_type=jnp.float32))
        row_blocks.append(jnp.concatenate(head_ctx, axis=1))        # (S, D)
    ctx = jnp.concatenate(row_blocks, axis=0)                       # (B*S, D)

    # ---- output projection (bf16 in / f32 acc) ----
    attn_out = jnp.dot(ctx.astype(jnp.bfloat16), wo_ref[...],
                       preferred_element_type=jnp.float32) + bo_ref[...]

    # ---- residual 1 ----
    x1 = x + attn_out

    # ---- norm2 + feed-forward (bf16 weights, f32 acc / f32 elementwise) ----
    h2 = _layernorm(x1, a2_ref[...], be2_ref[...])
    ff = jnp.dot(h2.astype(jnp.bfloat16), w1_ref[...],
                 preferred_element_type=jnp.float32) + b1_ref[...]
    ff = jnp.maximum(ff, 0.0)
    ff = jnp.dot(ff.astype(jnp.bfloat16), w2_ref[...],
                 preferred_element_type=jnp.float32) + b2_ref[...]

    # ---- residual 2 ----
    out_ref[...] = x1 + ff


def transformer_encoder_layer(x, mask2d, params):
    (wq, bq, wk, bk, wv, bv, wo, bo, a1, be1, a2, be2, w1, b1, w2, b2) = params

    # Wrapper-side packing (cheap one-time XLA ops).
    scale = 1.0 / math.sqrt(HD)
    wqkv = jnp.concatenate([wq * scale, wk, wv], axis=1).astype(jnp.bfloat16)
    bqkv = jnp.concatenate([bq * scale, bk, bv], axis=1)      # (1, 3D) f32
    wob = wo.astype(jnp.bfloat16)
    w1b = w1.astype(jnp.bfloat16)                             # (D, F) bf16
    w2b = w2.astype(jnp.bfloat16)                             # (F, D) bf16
    # additive mask bias: 0 where attend, -1e9 where masked, shared over batch
    mask_bias = jnp.tile((mask2d - 1.0) * 1.0e9, (B * H, 1))  # (B*H*S, S)

    x_flat = x.reshape(B * S, D)

    fused = (wqkv, bqkv, wob, bo, a1, be1, a2, be2, w1b, b1, w2b, b2)

    def full_spec(arr):
        nd = arr.ndim
        return pl.BlockSpec(arr.shape, lambda i, _nd=nd: (0,) * _nd)

    in_specs = [full_spec(x_flat), full_spec(mask_bias)] + [full_spec(p) for p in fused]

    out_flat = pl.pallas_call(
        encoder_kernel,
        out_shape=jax.ShapeDtypeStruct((B * S, D), jnp.float32),
        grid_spec=pltpu.PrefetchScalarGridSpec(
            num_scalar_prefetch=0,
            grid=(1,),                                   # single grid step
            in_specs=in_specs,
            out_specs=pl.BlockSpec((B * S, D), lambda i: (0, 0)),
            scratch_shapes=[]),
        compiler_params=pltpu.CompilerParams(
            dimension_semantics=("arbitrary",)),
    )(x_flat, mask_bias, *fused)

    return out_flat.reshape(B, S, D)


def reference(x, mask2d, params):
    """Plain-JAX f32 mirror of the PyTorch forward (dropout = identity)."""
    (wq, bq, wk, bk, wv, bv, wo, bo, a1, be1, a2, be2, w1, b1, w2, b2) = params

    def ln(t, alpha, beta):
        mean = t.mean(-1, keepdims=True)
        var = ((t - mean) ** 2).sum(-1, keepdims=True) / (t.shape[-1] - 1)
        return alpha * (t - mean) / (jnp.sqrt(var) + EPS) + beta

    h = ln(x, a1, be1)
    q = h @ wq + bq
    k = h @ wk + bk
    v = h @ wv + bv
    split = lambda t: t.reshape(B, S, H, HD).transpose(0, 2, 1, 3)
    qh, kh, vh = split(q), split(k), split(v)
    logits = jnp.einsum("bhqd,bhkd->bhqk", qh, kh) / math.sqrt(HD)
    logits = jnp.where(mask2d[None, None] == 0, NEG, logits)
    attn = jax.nn.softmax(logits, axis=-1)
    ctx = jnp.einsum("bhqk,bhkd->bhqd", attn, vh).transpose(0, 2, 1, 3).reshape(B, S, D)
    x1 = x + (ctx @ wo + bo)
    h2 = ln(x1, a2, be2)
    ff = jnp.maximum(h2 @ w1 + b1, 0.0) @ w2 + b2
    return x1 + ff


def init_params(key):
    ks = jax.random.split(key, 16)
    nrm = lambda k, shape, s=0.05: (s * jax.random.normal(k, shape)).astype(jnp.float32)
    wq = nrm(ks[0], (D, D)); bq = nrm(ks[1], (1, D))
    wk = nrm(ks[2], (D, D)); bk = nrm(ks[3], (1, D))
    wv = nrm(ks[4], (D, D)); bv = nrm(ks[5], (1, D))
    wo = nrm(ks[6], (D, D)); bo = nrm(ks[7], (1, D))
    a1 = jnp.ones((1, D), jnp.float32) + nrm(ks[8], (1, D), 0.01)
    be1 = nrm(ks[9], (1, D), 0.01)
    a2 = jnp.ones((1, D), jnp.float32) + nrm(ks[10], (1, D), 0.01)
    be2 = nrm(ks[11], (1, D), 0.01)
    w1 = nrm(ks[12], (D, F)); b1 = nrm(ks[13], (1, F))
    w2 = nrm(ks[14], (F, D), 0.02); b2 = nrm(ks[15], (1, D))
    return (wq, bq, wk, bk, wv, bv, wo, bo, a1, be1, a2, be2, w1, b1, w2, b2)


if __name__ == "__main__":
    key = jax.random.PRNGKey(0)
    k_x, k_p = jax.random.split(key)

    x = jax.random.normal(k_x, (B, S, D), dtype=jnp.float32)
    # causal mask (1 = attend, 0 = masked), identical for every batch element
    mask2d = jnp.tril(jnp.ones((S, S), jnp.float32))
    params = init_params(k_p)

    out = jax.block_until_ready(transformer_encoder_layer(x, mask2d, params))
    ref = jax.block_until_ready(reference(x, mask2d, params))

    assert out.shape == (B, S, D)
    # bf16 MXU operands + approx reciprocal + additive (vs. replace) mask bias
    # introduce ~1e-3 abs error; 2e-2 tolerance comfortably covers it.
    max_err = float(jnp.max(jnp.abs(out - ref)))
    assert max_err < 2e-2, f"mismatch vs reference: max abs err = {max_err}"

    print("KERNEL_OK")
</pallas_src>

<mosaic_0001>
module attributes {stable_mosaic.version = 11 : i64} {
  func.func @encoder_kernel(%arg0: i32, %arg1: memref<16x32xf32, #tpu.memory_space<vmem>>, %arg2: memref<64x8xf32, #tpu.memory_space<vmem>>, %arg3: memref<32x96xbf16, #tpu.memory_space<vmem>>, %arg4: memref<1x96xf32, #tpu.memory_space<vmem>>, %arg5: memref<32x32xbf16, #tpu.memory_space<vmem>>, %arg6: memref<1x32xf32, #tpu.memory_space<vmem>>, %arg7: memref<1x32xf32, #tpu.memory_space<vmem>>, %arg8: memref<1x32xf32, #tpu.memory_space<vmem>>, %arg9: memref<1x32xf32, #tpu.memory_space<vmem>>, %arg10: memref<1x32xf32, #tpu.memory_space<vmem>>, %arg11: memref<32x2048xbf16, #tpu.memory_space<vmem>>, %arg12: memref<1x2048xf32, #tpu.memory_space<vmem>>, %arg13: memref<2048x32xbf16, #tpu.memory_space<vmem>>, %arg14: memref<1x32xf32, #tpu.memory_space<vmem>>, %arg15: memref<16x32xf32, #tpu.memory_space<vmem>>) attributes {dimension_semantics = [#tpu.dimension_semantics<arbitrary>], iteration_bounds = array<i64: 1>, scalar_prefetch = 0 : i64, scratch_operands = 0 : i64, tpu.core_type = #tpu.core_type<tc>, window_params = [{pipeline_mode = #tpu.pipeline_mode<synchronous>, transform_indices = @transform_0, window_bounds = array<i64: 16, 32>}, {pipeline_mode = #tpu.pipeline_mode<synchronous>, transform_indices = @transform_1, window_bounds = array<i64: 64, 8>}, {pipeline_mode = #tpu.pipeline_mode<synchronous>, transform_indices = @transform_2, window_bounds = array<i64: 32, 96>}, {pipeline_mode = #tpu.pipeline_mode<synchronous>, transform_indices = @transform_3, window_bounds = array<i64: 1, 96>}, {pipeline_mode = #tpu.pipeline_mode<synchronous>, transform_indices = @transform_4, window_bounds = array<i64: 32, 32>}, {pipeline_mode = #tpu.pipeline_mode<synchronous>, transform_indices = @transform_5, window_bounds = array<i64: 1, 32>}, {pipeline_mode = #tpu.pipeline_mode<synchronous>, transform_indices = @transform_6, window_bounds = array<i64: 1, 32>}, {pipeline_mode = #tpu.pipeline_mode<synchronous>, transform_indices = @transform_7, window_bounds = array<i64: 1, 32>}, {pipeline_mode = #tpu.pipeline_mode<synchronous>, transform_indices = @transform_8, window_bounds = array<i64: 1, 32>}, {pipeline_mode = #tpu.pipeline_mode<synchronous>, transform_indices = @transform_9, window_bounds = array<i64: 1, 32>}, {pipeline_mode = #tpu.pipeline_mode<synchronous>, transform_indices = @transform_10, window_bounds = array<i64: 32, 2048>}, {pipeline_mode = #tpu.pipeline_mode<synchronous>, transform_indices = @transform_11, window_bounds = array<i64: 1, 2048>}, {pipeline_mode = #tpu.pipeline_mode<synchronous>, transform_indices = @transform_12, window_bounds = array<i64: 2048, 32>}, {pipeline_mode = #tpu.pipeline_mode<synchronous>, transform_indices = @transform_13, window_bounds = array<i64: 1, 32>}, {pipeline_mode = #tpu.pipeline_mode<synchronous>, transform_indices = @transform_14, window_bounds = array<i64: 16, 32>}]} {
    %c0 = arith.constant 0 : index
    %c0_0 = arith.constant 0 : index
    %0 = vector.load %arg1[%c0, %c0_0] : memref<16x32xf32, #tpu.memory_space<vmem>>, vector<16x32xf32>
    %c0_1 = arith.constant 0 : index
    %c0_2 = arith.constant 0 : index
    %1 = vector.load %arg2[%c0_1, %c0_2] : memref<64x8xf32, #tpu.memory_space<vmem>>, vector<64x8xf32>
    %c0_3 = arith.constant 0 : index
    %c0_4 = arith.constant 0 : index
    %2 = vector.load %arg7[%c0_3, %c0_4] : memref<1x32xf32, #tpu.memory_space<vmem>>, vector<1x32xf32>
    %c0_5 = arith.constant 0 : index
    %c0_6 = arith.constant 0 : index
    %3 = vector.load %arg8[%c0_5, %c0_6] : memref<1x32xf32, #tpu.memory_space<vmem>>, vector<1x32xf32>
    %cst = arith.constant dense<0.000000e+00> : vector<16xf32>
    %4 = vector.multi_reduction <add>, %0, %cst [1] : vector<16x32xf32> to vector<16xf32>
    %5 = vector.shape_cast %4 : vector<16xf32> to vector<16x1xf32>
    %cst_7 = arith.constant 3.200000e+01 : f32
    %6 = vector.broadcast %cst_7 : f32 to vector<16x1xf32>
    %7 = arith.divf %5, %6 : vector<16x1xf32>
    %8 = vector.broadcast %7 : vector<16x1xf32> to vector<16x32xf32>
    %9 = arith.subf %0, %8 : vector<16x32xf32>
    %10 = arith.mulf %9, %9 : vector<16x32xf32>
    %cst_8 = arith.constant dense<0.000000e+00> : vector<16xf32>
    %11 = vector.multi_reduction <add>, %10, %cst_8 [1] : vector<16x32xf32> to vector<16xf32>
    %12 = vector.shape_cast %11 : vector<16xf32> to vector<16x1xf32>
    %cst_9 = arith.constant 3.100000e+01 : f32
    %13 = vector.broadcast %cst_9 : f32 to vector<16x1xf32>
    %14 = arith.divf %12, %13 : vector<16x1xf32>
    %15 = vector.broadcast %7 : vector<16x1xf32> to vector<16x32xf32>
    %16 = arith.subf %0, %15 : vector<16x32xf32>
    %17 = vector.broadcast %2 : vector<1x32xf32> to vector<16x32xf32>
    %18 = arith.mulf %17, %16 : vector<16x32xf32>
    %19 = math.sqrt %14 : vector<16x1xf32>
    %cst_10 = arith.constant 9.99999997E-7 : f32
    %20 = vector.broadcast %cst_10 : f32 to vector<16x1xf32>
    %21 = arith.addf %19, %20 : vector<16x1xf32>
    %22 = vector.broadcast %21 : vector<16x1xf32> to vector<16x32xf32>
    %23 = arith.divf %18, %22 : vector<16x32xf32>
    %24 = vector.broadcast %3 : vector<1x32xf32> to vector<16x32xf32>
    %25 = arith.addf %23, %24 : vector<16x32xf32>
    %26 = arith.truncf %25 : vector<16x32xf32> to vector<16x32xbf16>
    %c0_11 = arith.constant 0 : index
    %c0_12 = arith.constant 0 : index
    %27 = vector.load %arg3[%c0_11, %c0_12] : memref<32x96xbf16, #tpu.memory_space<vmem>>, vector<32x96xbf16>
    %cst_13 = arith.constant dense<0.000000e+00> : vector<16x96xf32>
    %28 = tpu.matmul %26, %27, %cst_13 {dimension_numbers = #tpu.dot_dimension_numbers<[1], [0], [0], [1], [0, 0, 1, 1], [], []>} : vector<16x32xbf16>, vector<32x96xbf16>, vector<16x96xf32> -> vector<16x96xf32>
    %c0_14 = arith.constant 0 : index
    %c0_15 = arith.constant 0 : index
    %29 = vector.load %arg4[%c0_14, %c0_15] : memref<1x96xf32, #tpu.memory_space<vmem>>, vector<1x96xf32>
    %30 = vector.broadcast %29 : vector<1x96xf32> to vector<16x96xf32>
    %31 = arith.addf %28, %30 : vector<16x96xf32>
    %32 = vector.extract_strided_slice %31 {offsets = [0, 0], sizes = [16, 32], strides = [1, 1]} : vector<16x96xf32> to vector<16x32xf32>
    %33 = vector.extract_strided_slice %31 {offsets = [0, 32], sizes = [16, 32], strides = [1, 1]} : vector<16x96xf32> to vector<16x32xf32>
    %34 = vector.extract_strided_slice %31 {offsets = [0, 64], sizes = [16, 32], strides = [1, 1]} : vector<16x96xf32> to vector<16x32xf32>
    %35 = tpu.transpose %33, [1, 0] : vector<16x32xf32> -> vector<32x16xf32>
    %36 = vector.extract_strided_slice %32 {offsets = [0, 0], sizes = [8, 8], strides = [1, 1]} : vector<16x32xf32> to vector<8x8xf32>
    %37 = vector.extract_strided_slice %35 {offsets = [0, 0], sizes = [8, 8], strides = [1, 1]} : vector<32x16xf32> to vector<8x8xf32>
    %cst_16 = arith.constant dense<0.000000e+00> : vector<8x8xf32>
    %38 = tpu.matmul %36, %37, %cst_16 {dimension_numbers = #tpu.dot_dimension_numbers<[1], [0], [0], [1], [0, 0, 1, 1], [], []>} : vector<8x8xf32>, vector<8x8xf32>, vector<8x8xf32> -> vector<8x8xf32>
    %39 = vector.extract_strided_slice %32 {offsets = [0, 8], sizes = [8, 8], strides = [1, 1]} : vector<16x32xf32> to vector<8x8xf32>
    %40 = vector.extract_strided_slice %35 {offsets = [8, 0], sizes = [8, 8], strides = [1, 1]} : vector<32x16xf32> to vector<8x8xf32>
    %cst_17 = arith.constant dense<0.000000e+00> : vector<8x8xf32>
    %41 = tpu.matmul %39, %40, %cst_17 {dimension_numbers = #tpu.dot_dimension_numbers<[1], [0], [0], [1], [0, 0, 1, 1], [], []>} : vector<8x8xf32>, vector<8x8xf32>, vector<8x8xf32> -> vector<8x8xf32>
    %42 = vector.extract_strided_slice %32 {offsets = [0, 16], sizes = [8, 8], strides = [1, 1]} : vector<16x32xf32> to vector<8x8xf32>
    %43 = vector.extract_strided_slice %35 {offsets = [16, 0], sizes = [8, 8], strides = [1, 1]} : vector<32x16xf32> to vector<8x8xf32>
    %cst_18 = arith.constant dense<0.000000e+00> : vector<8x8xf32>
    %44 = tpu.matmul %42, %43, %cst_18 {dimension_numbers = #tpu.dot_dimension_numbers<[1], [0], [0], [1], [0, 0, 1, 1], [], []>} : vector<8x8xf32>, vector<8x8xf32>, vector<8x8xf32> -> vector<8x8xf32>
    %45 = vector.extract_strided_slice %32 {offsets = [0, 24], sizes = [8, 8], strides = [1, 1]} : vector<16x32xf32> to vector<8x8xf32>
    %46 = vector.extract_strided_slice %35 {offsets = [24, 0], sizes = [8, 8], strides = [1, 1]} : vector<32x16xf32> to vector<8x8xf32>
    %cst_19 = arith.constant dense<0.000000e+00> : vector<8x8xf32>
    %47 = tpu.matmul %45, %46, %cst_19 {dimension_numbers = #tpu.dot_dimension_numbers<[1], [0], [0], [1], [0, 0, 1, 1], [], []>} : vector<8x8xf32>, vector<8x8xf32>, vector<8x8xf32> -> vector<8x8xf32>
    %48 = vector.extract_strided_slice %32 {offsets = [8, 0], sizes = [8, 8], strides = [1, 1]} : vector<16x32xf32> to vector<8x8xf32>
    %49 = vector.extract_strided_slice %35 {offsets = [0, 8], sizes = [8, 8], strides = [1, 1]} : vector<32x16xf32> to vector<8x8xf32>
    %cst_20 = arith.constant dense<0.000000e+00> : vector<8x8xf32>
    %50 = tpu.matmul %48, %49, %cst_20 {dimension_numbers = #tpu.dot_dimension_numbers<[1], [0], [0], [1], [0, 0, 1, 1], [], []>} : vector<8x8xf32>, vector<8x8xf32>, vector<8x8xf32> -> vector<8x8xf32>
    %51 = vector.extract_strided_slice %32 {offsets = [8, 8], sizes = [8, 8], strides = [1, 1]} : vector<16x32xf32> to vector<8x8xf32>
    %52 = vector.extract_strided_slice %35 {offsets = [8, 8], sizes = [8, 8], strides = [1, 1]} : vector<32x16xf32> to vector<8x8xf32>
    %cst_21 = arith.constant dense<0.000000e+00> : vector<8x8xf32>
    %53 = tpu.matmul %51, %52, %cst_21 {dimension_numbers = #tpu.dot_dimension_numbers<[1], [0], [0], [1], [0, 0, 1, 1], [], []>} : vector<8x8xf32>, vector<8x8xf32>, vector<8x8xf32> -> vector<8x8xf32>
    %54 = vector.extract_strided_slice %32 {offsets = [8, 16], sizes = [8, 8], strides = [1, 1]} : vector<16x32xf32> to vector<8x8xf32>
    %55 = vector.extract_strided_slice %35 {offsets = [16, 8], sizes = [8, 8], strides = [1, 1]} : vector<32x16xf32> to vector<8x8xf32>
    %cst_22 = arith.constant dense<0.000000e+00> : vector<8x8xf32>
    %56 = tpu.matmul %54, %55, %cst_22 {dimension_numbers = #tpu.dot_dimension_numbers<[1], [0], [0], [1], [0, 0, 1, 1], [], []>} : vector<8x8xf32>, vector<8x8xf32>, vector<8x8xf32> -> vector<8x8xf32>
    %57 = vector.extract_strided_slice %32 {offsets = [8, 24], sizes = [8, 8], strides = [1, 1]} : vector<16x32xf32> to vector<8x8xf32>
    %58 = vector.extract_strided_slice %35 {offsets = [24, 8], sizes = [8, 8], strides = [1, 1]} : vector<32x16xf32> to vector<8x8xf32>
    %cst_23 = arith.constant dense<0.000000e+00> : vector<8x8xf32>
    %59 = tpu.matmul %57, %58, %cst_23 {dimension_numbers = #tpu.dot_dimension_numbers<[1], [0], [0], [1], [0, 0, 1, 1], [], []>} : vector<8x8xf32>, vector<8x8xf32>, vector<8x8xf32> -> vector<8x8xf32>
    %60 = tpu.concatenate %38, %41, %44, %47, %50, %53, %56, %59 in 0 : vector<8x8xf32>, vector<8x8xf32>, vector<8x8xf32>, vector<8x8xf32>, vector<8x8xf32>, vector<8x8xf32>, vector<8x8xf32>, vector<8x8xf32> -> vector<64x8xf32>
    %61 = arith.addf %60, %1 : vector<64x8xf32>
    %cst_24 = arith.constant dense<0xFF800000> : vector<64xf32>
    %62 = vector.multi_reduction <maximumf>, %61, %cst_24 [1] : vector<64x8xf32> to vector<64xf32>
    %63 = vector.shape_cast %62 : vector<64xf32> to vector<64x1xf32>
    %64 = vector.broadcast %63 : vector<64x1xf32> to vector<64x8xf32>
    %65 = arith.subf %61, %64 : vector<64x8xf32>
    %66 = math.exp %65 : vector<64x8xf32>
    %cst_25 = arith.constant dense<0.000000e+00> : vector<64xf32>
    %67 = vector.multi_reduction <add>, %66, %cst_25 [1] : vector<64x8xf32> to vector<64xf32>
    %68 = vector.shape_cast %67 : vector<64xf32> to vector<64x1xf32>
    %69 = tpu.reciprocal %68 {approx = true} : vector<64x1xf32> -> vector<64x1xf32>
    %70 = vector.broadcast %69 : vector<64x1xf32> to vector<64x8xf32>
    %71 = arith.mulf %66, %70 : vector<64x8xf32>
    %72 = vector.extract_strided_slice %71 {offsets = [0, 0], sizes = [8, 8], strides = [1, 1]} : vector<64x8xf32> to vector<8x8xf32>
    %73 = vector.extract_strided_slice %34 {offsets = [0, 0], sizes = [8, 8], strides = [1, 1]} : vector<16x32xf32> to vector<8x8xf32>
    %cst_26 = arith.constant dense<0.000000e+00> : vector<8x8xf32>
    %74 = tpu.matmul %72, %73, %cst_26 {dimension_numbers = #tpu.dot_dimension_numbers<[1], [0], [0], [1], [0, 0, 1, 1], [], []>} : vector<8x8xf32>, vector<8x8xf32>, vector<8x8xf32> -> vector<8x8xf32>
    %75 = vector.extract_strided_slice %71 {offsets = [8, 0], sizes = [8, 8], strides = [1, 1]} : vector<64x8xf32> to vector<8x8xf32>
    %76 = vector.extract_strided_slice %34 {offsets = [0, 8], sizes = [8, 8], strides = [1, 1]} : vector<16x32xf32> to vector<8x8xf32>
    %cst_27 = arith.constant dense<0.000000e+00> : vector<8x8xf32>
    %77 = tpu.matmul %75, %76, %cst_27 {dimension_numbers = #tpu.dot_dimension_numbers<[1], [0], [0], [1], [0, 0, 1, 1], [], []>} : vector<8x8xf32>, vector<8x8xf32>, vector<8x8xf32> -> vector<8x8xf32>
    %78 = vector.extract_strided_slice %71 {offsets = [16, 0], sizes = [8, 8], strides = [1, 1]} : vector<64x8xf32> to vector<8x8xf32>
    %79 = vector.extract_strided_slice %34 {offsets = [0, 16], sizes = [8, 8], strides = [1, 1]} : vector<16x32xf32> to vector<8x8xf32>
    %cst_28 = arith.constant dense<0.000000e+00> : vector<8x8xf32>
    %80 = tpu.matmul %78, %79, %cst_28 {dimension_numbers = #tpu.dot_dimension_numbers<[1], [0], [0], [1], [0, 0, 1, 1], [], []>} : vector<8x8xf32>, vector<8x8xf32>, vector<8x8xf32> -> vector<8x8xf32>
    %81 = vector.extract_strided_slice %71 {offsets = [24, 0], sizes = [8, 8], strides = [1, 1]} : vector<64x8xf32> to vector<8x8xf32>
    %82 = vector.extract_strided_slice %34 {offsets = [0, 24], sizes = [8, 8], strides = [1, 1]} : vector<16x32xf32> to vector<8x8xf32>
    %cst_29 = arith.constant dense<0.000000e+00> : vector<8x8xf32>
    %83 = tpu.matmul %81, %82, %cst_29 {dimension_numbers = #tpu.dot_dimension_numbers<[1], [0], [0], [1], [0, 0, 1, 1], [], []>} : vector<8x8xf32>, vector<8x8xf32>, vector<8x8xf32> -> vector<8x8xf32>
    %84 = tpu.concatenate %74, %77, %80, %83 in 1 : vector<8x8xf32>, vector<8x8xf32>, vector<8x8xf32>, vector<8x8xf32> -> vector<8x32xf32>
    %85 = vector.extract_strided_slice %71 {offsets = [32, 0], sizes = [8, 8], strides = [1, 1]} : vector<64x8xf32> to vector<8x8xf32>
    %86 = vector.extract_strided_slice %34 {offsets = [8, 0], sizes = [8, 8], strides = [1, 1]} : vector<16x32xf32> to vector<8x8xf32>
    %cst_30 = arith.constant dense<0.000000e+00> : vector<8x8xf32>
    %87 = tpu.matmul %85, %86, %cst_30 {dimension_numbers = #tpu.dot_dimension_numbers<[1], [0], [0], [1], [0, 0, 1, 1], [], []>} : vector<8x8xf32>, vector<8x8xf32>, vector<8x8xf32> -> vector<8x8xf32>
    %88 = vector.extract_strided_slice %71 {offsets = [40, 0], sizes = [8, 8], strides = [1, 1]} : vector<64x8xf32> to vector<8x8xf32>
    %89 = vector.extract_strided_slice %34 {offsets = [8, 8], sizes = [8, 8], strides = [1, 1]} : vector<16x32xf32> to vector<8x8xf32>
    %cst_31 = arith.constant dense<0.000000e+00> : vector<8x8xf32>
    %90 = tpu.matmul %88, %89, %cst_31 {dimension_numbers = #tpu.dot_dimension_numbers<[1], [0], [0], [1], [0, 0, 1, 1], [], []>} : vector<8x8xf32>, vector<8x8xf32>, vector<8x8xf32> -> vector<8x8xf32>
    %91 = vector.extract_strided_slice %71 {offsets = [48, 0], sizes = [8, 8], strides = [1, 1]} : vector<64x8xf32> to vector<8x8xf32>
    %92 = vector.extract_strided_slice %34 {offsets = [8, 16], sizes = [8, 8], strides = [1, 1]} : vector<16x32xf32> to vector<8x8xf32>
    %cst_32 = arith.constant dense<0.000000e+00> : vector<8x8xf32>
    %93 = tpu.matmul %91, %92, %cst_32 {dimension_numbers = #tpu.dot_dimension_numbers<[1], [0], [0], [1], [0, 0, 1, 1], [], []>} : vector<8x8xf32>, vector<8x8xf32>, vector<8x8xf32> -> vector<8x8xf32>
    %94 = vector.extract_strided_slice %71 {offsets = [56, 0], sizes = [8, 8], strides = [1, 1]} : vector<64x8xf32> to vector<8x8xf32>
    %95 = vector.extract_strided_slice %34 {offsets = [8, 24], sizes = [8, 8], strides = [1, 1]} : vector<16x32xf32> to vector<8x8xf32>
    %cst_33 = arith.constant dense<0.000000e+00> : vector<8x8xf32>
    %96 = tpu.matmul %94, %95, %cst_33 {dimension_numbers = #tpu.dot_dimension_numbers<[1], [0], [0], [1], [0, 0, 1, 1], [], []>} : vector<8x8xf32>, vector<8x8xf32>, vector<8x8xf32> -> vector<8x8xf32>
    %97 = tpu.concatenate %87, %90, %93, %96 in 1 : vector<8x8xf32>, vector<8x8xf32>, vector<8x8xf32>, vector<8x8xf32> -> vector<8x32xf32>
    %98 = tpu.concatenate %84, %97 in 0 : vector<8x32xf32>, vector<8x32xf32> -> vector<16x32xf32>
    %99 = arith.truncf %98 : vector<16x32xf32> to vector<16x32xbf16>
    %c0_34 = arith.constant 0 : index
    %c0_35 = arith.constant 0 : index
    %100 = vector.load %arg5[%c0_34, %c0_35] : memref<32x32xbf16, #tpu.memory_space<vmem>>, vector<32x32xbf16>
    %cst_36 = arith.constant dense<0.000000e+00> : vector<16x32xf32>
    %101 = tpu.matmul %99, %100, %cst_36 {dimension_numbers = #tpu.dot_dimension_numbers<[1], [0], [0], [1], [0, 0, 1, 1], [], []>} : vector<16x32xbf16>, vector<32x32xbf16>, vector<16x32xf32> -> vector<16x32xf32>
    %c0_37 = arith.constant 0 : index
    %c0_38 = arith.constant 0 : index
    %102 = vector.load %arg6[%c0_37, %c0_38] : memref<1x32xf32, #tpu.memory_space<vmem>>, vector<1x32xf32>
    %103 = vector.broadcast %102 : vector<1x32xf32> to vector<16x32xf32>
    %104 = arith.addf %101, %103 : vector<16x32xf32>
    %105 = arith.addf %0, %104 : vector<16x32xf32>
    %c0_39 = arith.constant 0 : index
    %c0_40 = arith.constant 0 : index
    %106 = vector.load %arg9[%c0_39, %c0_40] : memref<1x32xf32, #tpu.memory_space<vmem>>, vector<1x32xf32>
    %c0_41 = arith.constant 0 : index
    %c0_42 = arith.constant 0 : index
    %107 = vector.load %arg10[%c0_41, %c0_42] : memref<1x32xf32, #tpu.memory_space<vmem>>, vector<1x32xf32>
    %cst_43 = arith.constant dense<0.000000e+00> : vector<16xf32>
    %108 = vector.multi_reduction <add>, %105, %cst_43 [1] : vector<16x32xf32> to vector<16xf32>
    %109 = vector.shape_cast %108 : vector<16xf32> to vector<16x1xf32>
    %cst_44 = arith.constant 3.200000e+01 : f32
    %110 = vector.broadcast %cst_44 : f32 to vector<16x1xf32>
    %111 = arith.divf %109, %110 : vector<16x1xf32>
    %112 = vector.broadcast %111 : vector<16x1xf32> to vector<16x32xf32>
    %113 = arith.subf %105, %112 : vector<16x32xf32>
    %114 = arith.mulf %113, %113 : vector<16x32xf32>
    %cst_45 = arith.constant dense<0.000000e+00> : vector<16xf32>
    %115 = vector.multi_reduction <add>, %114, %cst_45 [1] : vector<16x32xf32> to vector<16xf32>
    %116 = vector.shape_cast %115 : vector<16xf32> to vector<16x1xf32>
    %cst_46 = arith.constant 3.100000e+01 : f32
    %117 = vector.broadcast %cst_46 : f32 to vector<16x1xf32>
    %118 = arith.divf %116, %117 : vector<16x1xf32>
    %119 = vector.broadcast %111 : vector<16x1xf32> to vector<16x32xf32>
    %120 = arith.subf %105, %119 : vector<16x32xf32>
    %121 = vector.broadcast %106 : vector<1x32xf32> to vector<16x32xf32>
    %122 = arith.mulf %121, %120 : vector<16x32xf32>
    %123 = math.sqrt %118 : vector<16x1xf32>
    %cst_47 = arith.constant 9.99999997E-7 : f32
    %124 = vector.broadcast %cst_47 : f32 to vector<16x1xf32>
    %125 = arith.addf %123, %124 : vector<16x1xf32>
    %126 = vector.broadcast %125 : vector<16x1xf32> to vector<16x32xf32>
    %127 = arith.divf %122, %126 : vector<16x32xf32>
    %128 = vector.broadcast %107 : vector<1x32xf32> to vector<16x32xf32>
    %129 = arith.addf %127, %128 : vector<16x32xf32>
    %130 = arith.truncf %129 : vector<16x32xf32> to vector<16x32xbf16>
    %c0_48 = arith.constant 0 : index
    %c0_49 = arith.constant 0 : index
    %131 = vector.load %arg11[%c0_48, %c0_49] : memref<32x2048xbf16, #tpu.memory_space<vmem>>, vector<32x2048xbf16>
    %cst_50 = arith.constant dense<0.000000e+00> : vector<16x2048xf32>
    %132 = tpu.matmul %130, %131, %cst_50 {dimension_numbers = #tpu.dot_dimension_numbers<[1], [0], [0], [1], [0, 0, 1, 1], [], []>} : vector<16x32xbf16>, vector<32x2048xbf16>, vector<16x2048xf32> -> vector<16x2048xf32>
    %c0_51 = arith.constant 0 : index
    %c0_52 = arith.constant 0 : index
    %133 = vector.load %arg12[%c0_51, %c0_52] : memref<1x2048xf32, #tpu.memory_space<vmem>>, vector<1x2048xf32>
    %134 = vector.broadcast %133 : vector<1x2048xf32> to vector<16x2048xf32>
    %135 = arith.addf %132, %134 : vector<16x2048xf32>
    %cst_53 = arith.constant 0.000000e+00 : f32
    %136 = vector.broadcast %cst_53 : f32 to vector<16x2048xf32>
    %137 = arith.maximumf %135, %136 : vector<16x2048xf32>
    %138 = arith.truncf %137 : vector<16x2048xf32> to vector<16x2048xbf16>
    %c0_54 = arith.constant 0 : index
    %c0_55 = arith.constant 0 : index
    %139 = vector.load %arg13[%c0_54, %c0_55] : memref<2048x32xbf16, #tpu.memory_space<vmem>>, vector<2048x32xbf16>
    %cst_56 = arith.constant dense<0.000000e+00> : vector<16x32xf32>
    %140 = tpu.matmul %138, %139, %cst_56 {dimension_numbers = #tpu.dot_dimension_numbers<[1], [0], [0], [1], [0, 0, 1, 1], [], []>} : vector<16x2048xbf16>, vector<2048x32xbf16>, vector<16x32xf32> -> vector<16x32xf32>
    %c0_57 = arith.constant 0 : index
    %c0_58 = arith.constant 0 : index
    %141 = vector.load %arg14[%c0_57, %c0_58] : memref<1x32xf32, #tpu.memory_space<vmem>>, vector<1x32xf32>
    %142 = vector.broadcast %141 : vector<1x32xf32> to vector<16x32xf32>
    %143 = arith.addf %140, %142 : vector<16x32xf32>
    %144 = arith.addf %105, %143 : vector<16x32xf32>
    %c0_59 = arith.constant 0 : index
    %c0_60 = arith.constant 0 : index
    %145 = vector.load %arg15[%c0_59, %c0_60] : memref<16x32xf32, #tpu.memory_space<vmem>>, vector<16x32xf32>
    tpu.vector_store %arg15[%c0_59, %c0_60], %144 {strides = array<i32>} : memref<16x32xf32, #tpu.memory_space<vmem>>, vector<16x32xf32>,
    return
  }
  func.func @transform_0(%arg0: i32) -> (i32, i32) {
    %c0_i32 = arith.constant 0 : i32
    %c0_i32_0 = arith.constant 0 : i32
    %c0_i32_1 = arith.constant 0 : i32
    return %c0_i32, %c0_i32_0 : i32, i32
  }
  func.func @transform_1(%arg0: i32) -> (i32, i32) {
    %c0_i32 = arith.constant 0 : i32
    %c0_i32_0 = arith.constant 0 : i32
    %c0_i32_1 = arith.constant 0 : i32
    return %c0_i32, %c0_i32_0 : i32, i32
  }
  func.func @transform_2(%arg0: i32) -> (i32, i32) {
    %c0_i32 = arith.constant 0 : i32
    %c0_i32_0 = arith.constant 0 : i32
    %c0_i32_1 = arith.constant 0 : i32
    return %c0_i32, %c0_i32_0 : i32, i32
  }
  func.func @transform_3(%arg0: i32) -> (i32, i32) {
    %c0_i32 = arith.constant 0 : i32
    %c0_i32_0 = arith.constant 0 : i32
    %c0_i32_1 = arith.constant 0 : i32
    return %c0_i32, %c0_i32_0 : i32, i32
  }
  func.func @transform_4(%arg0: i32) -> (i32, i32) {
    %c0_i32 = arith.constant 0 : i32
    %c0_i32_0 = arith.constant 0 : i32
    %c0_i32_1 = arith.constant 0 : i32
    return %c0_i32, %c0_i32_0 : i32, i32
  }
  func.func @transform_5(%arg0: i32) -> (i32, i32) {
    %c0_i32 = arith.constant 0 : i32
    %c0_i32_0 = arith.constant 0 : i32
    %c0_i32_1 = arith.constant 0 : i32
    return %c0_i32, %c0_i32_0 : i32, i32
  }
  func.func @transform_6(%arg0: i32) -> (i32, i32) {
    %c0_i32 = arith.constant 0 : i32
    %c0_i32_0 = arith.constant 0 : i32
    %c0_i32_1 = arith.constant 0 : i32
    return %c0_i32, %c0_i32_0 : i32, i32
  }
  func.func @transform_7(%arg0: i32) -> (i32, i32) {
    %c0_i32 = arith.constant 0 : i32
    %c0_i32_0 = arith.constant 0 : i32
    %c0_i32_1 = arith.constant 0 : i32
    return %c0_i32, %c0_i32_0 : i32, i32
  }
  func.func @transform_8(%arg0: i32) -> (i32, i32) {
    %c0_i32 = arith.constant 0 : i32
    %c0_i32_0 = arith.constant 0 : i32
    %c0_i32_1 = arith.constant 0 : i32
    return %c0_i32, %c0_i32_0 : i32, i32
  }
  func.func @transform_9(%arg0: i32) -> (i32, i32) {
    %c0_i32 = arith.constant 0 : i32
    %c0_i32_0 = arith.constant 0 : i32
    %c0_i32_1 = arith.constant 0 : i32
    return %c0_i32, %c0_i32_0 : i32, i32
  }
  func.func @transform_10(%arg0: i32) -> (i32, i32) {
    %c0_i32 = arith.constant 0 : i32
    %c0_i32_0 = arith.constant 0 : i32
    %c0_i32_1 = arith.constant 0 : i32
    return %c0_i32, %c0_i32_0 : i32, i32
  }
  func.func @transform_11(%arg0: i32) -> (i32, i32) {
    %c0_i32 = arith.constant 0 : i32
    %c0_i32_0 = arith.constant 0 : i32
    %c0_i32_1 = arith.constant 0 : i32
    return %c0_i32, %c0_i32_0 : i32, i32
  }
  func.func @transform_12(%arg0: i32) -> (i32, i32) {
    %c0_i32 = arith.constant 0 : i32
    %c0_i32_0 = arith.constant 0 : i32
    %c0_i32_1 = arith.constant 0 : i32
    return %c0_i32, %c0_i32_0 : i32, i32
  }
  func.func @transform_13(%arg0: i32) -> (i32, i32) {
    %c0_i32 = arith.constant 0 : i32
    %c0_i32_0 = arith.constant 0 : i32
    %c0_i32_1 = arith.constant 0 : i32
    return %c0_i32, %c0_i32_0 : i32, i32
  }
  func.func @transform_14(%arg0: i32) -> (i32, i32) {
    %c0_i32 = arith.constant 0 : i32
    %c0_i32_0 = arith.constant 0 : i32
    %c0_i32_1 = arith.constant 0 : i32
    return %c0_i32, %c0_i32_0 : i32, i32
  }
}

</mosaic_0001>

<llo_original>
// kernel: tpu_custom_call.1
$region0: #{tpu_custom_call.1}
  #allocation0 [shape = 'u32[]', space=smem, size = 0x4, offset = 0x4, fixed_abs, tag = 'smem constant byte address 0x4 - core index']
  #allocation1 [shape = 'u32[144,128]{1,0:T(1,128)}', space=vmem, size = 0x12000, scoped, tag = 'internal scratch']
  %s0 = inlined_call_operand.vmem [shape: f32[16,32], index: 0, kind: input, shape index: {}]
  %s1 = inlined_call_operand.vmem [shape: f32[64,8], index: 1, kind: input, shape index: {}]
  %s2 = inlined_call_operand.vmem [shape: bf16[32,96], index: 2, kind: input, shape index: {}]
  %s3 = inlined_call_operand.vmem [shape: f32[1,96], index: 3, kind: input, shape index: {}]
  %s4 = inlined_call_operand.vmem [shape: bf16[32,32], index: 4, kind: input, shape index: {}]
  %s5 = inlined_call_operand.vmem [shape: f32[1,32], index: 5, kind: input, shape index: {}]
  %s6 = inlined_call_operand.vmem [shape: f32[1,32], index: 6, kind: input, shape index: {}]
  %s7 = inlined_call_operand.vmem [shape: f32[1,32], index: 7, kind: input, shape index: {}]
  %s8 = inlined_call_operand.vmem [shape: f32[1,32], index: 8, kind: input, shape index: {}]
  %s9 = inlined_call_operand.vmem [shape: f32[1,32], index: 9, kind: input, shape index: {}]
  %s10 = inlined_call_operand.vmem [shape: bf16[32,2048], index: 10, kind: input, shape index: {}]
  %s11 = inlined_call_operand.vmem [shape: f32[1,2048], index: 11, kind: input, shape index: {}]
  %s12 = inlined_call_operand.vmem [shape: bf16[2048,32], index: 12, kind: input, shape index: {}]
  %s13 = inlined_call_operand.vmem [shape: f32[1,32], index: 13, kind: input, shape index: {}]
  %s14 = inlined_call_operand.hbm [shape: f32[16,32], index: 14, kind: output, shape index: {}]
  %s15 = sld [smem:[#allocation0]]
  $region66: #{tpu_custom_call.1} parent=0
    _
  %s17 = ssub.s32 1, %s15
  %s18 = scalar_select 0, %s17, %s15
  $region1: #{tpu_custom_call.1} parent=0
    #allocation2 [shape = 'u8[8192]{0}', space=vmem, size = 0x2000, scoped, tag = 'output window, operand 0, single buffered']
    #allocation3 [shape = 's32[1]{0}', space=sflag, size = 0x4, scoped, tag = 'scoped memory for tpu_custom_call.1']
    %19 = vsyncpa [#allocation3], 0
    // Predicated region
    $region2: #{tpu_custom_call.1} parent=1 // pred_check
      _
    $region3: #{tpu_custom_call.1} parent=1 // pred_check_branch
      %21 = sbr.rel (0) target = $region5
    $region4: #{tpu_custom_call.1} parent=1 // pred_region
      _
    $region5: #{tpu_custom_call.1} parent=1 // pred_fallthru
      _
    // Predicated region
    $region6: #{tpu_custom_call.1} parent=1 // pred_check
      _
    $region7: #{tpu_custom_call.1} parent=1 // pred_check_branch
      %23 = sbr.rel (0) target = $region9
    $region8: #{tpu_custom_call.1} parent=1 // pred_region
      _
    $region9: #{tpu_custom_call.1} parent=1 // pred_fallthru
      _
    // Predicated region
    $region10: #{tpu_custom_call.1} parent=1 // pred_check
      _
    $region11: #{tpu_custom_call.1} parent=1 // pred_check_branch
      %25 = sbr.rel (0) target = $region13
    $region12: #{tpu_custom_call.1} parent=1 // pred_region
      _
    $region13: #{tpu_custom_call.1} parent=1 // pred_fallthru
      _
    // Predicated region
    $region14: #{tpu_custom_call.1} parent=1 // pred_check
      _
    $region15: #{tpu_custom_call.1} parent=1 // pred_check_branch
      %27 = sbr.rel (0) target = $region17
    $region16: #{tpu_custom_call.1} parent=1 // pred_region
      _
    $region17: #{tpu_custom_call.1} parent=1 // pred_fallthru
      _
    // Predicated region
    $region18: #{tpu_custom_call.1} parent=1 // pred_check
      _
    $region19: #{tpu_custom_call.1} parent=1 // pred_check_branch
      %29 = sbr.rel (0) target = $region21
    $region20: #{tpu_custom_call.1} parent=1 // pred_region
      _
    $region21: #{tpu_custom_call.1} parent=1 // pred_fallthru
      _
    // Predicated region
    $region22: #{tpu_custom_call.1} parent=1 // pred_check
      _
    $region23: #{tpu_custom_call.1} parent=1 // pred_check_branch
      %31 = sbr.rel (0) target = $region25
    $region24: #{tpu_custom_call.1} parent=1 // pred_region
      _
    $region25: #{tpu_custom_call.1} parent=1 // pred_fallthru
      _
    // Predicated region
    $region26: #{tpu_custom_call.1} parent=1 // pred_check
      _
    $region27: #{tpu_custom_call.1} parent=1 // pred_check_branch
      %33 = sbr.rel (0) target = $region29
    $region28: #{tpu_custom_call.1} parent=1 // pred_region
      _
    $region29: #{tpu_custom_call.1} parent=1 // pred_fallthru
      _
    // Predicated region
    $region30: #{tpu_custom_call.1} parent=1 // pred_check
      _
    $region31: #{tpu_custom_call.1} parent=1 // pred_check_branch
      %35 = sbr.rel (0) target = $region33
    $region32: #{tpu_custom_call.1} parent=1 // pred_region
      _
    $region33: #{tpu_custom_call.1} parent=1 // pred_fallthru
      _
    // Predicated region
    $region34: #{tpu_custom_call.1} parent=1 // pred_check
      _
    $region35: #{tpu_custom_call.1} parent=1 // pred_check_branch
      %37 = sbr.rel (0) target = $region37
    $region36: #{tpu_custom_call.1} parent=1 // pred_region
      _
    $region37: #{tpu_custom_call.1} parent=1 // pred_fallthru
      _
    // Predicated region
    $region38: #{tpu_custom_call.1} parent=1 // pred_check
      _
    $region39: #{tpu_custom_call.1} parent=1 // pred_check_branch
      %39 = sbr.rel (0) target = $region41
    $region40: #{tpu_custom_call.1} parent=1 // pred_region
      _
    $region41: #{tpu_custom_call.1} parent=1 // pred_fallthru
      _
    // Predicated region
    $region42: #{tpu_custom_call.1} parent=1 // pred_check
      _
    $region43: #{tpu_custom_call.1} parent=1 // pred_check_branch
      %41 = sbr.rel (0) target = $region45
    $region44: #{tpu_custom_call.1} parent=1 // pred_region
      _
    $region45: #{tpu_custom_call.1} parent=1 // pred_fallthru
      _
    // Predicated region
    $region46: #{tpu_custom_call.1} parent=1 // pred_check
      _
    $region47: #{tpu_custom_call.1} parent=1 // pred_check_branch
      %43 = sbr.rel (0) target = $region49
    $region48: #{tpu_custom_call.1} parent=1 // pred_region
      _
    $region49: #{tpu_custom_call.1} parent=1 // pred_fallthru
      _
    // Predicated region
    $region50: #{tpu_custom_call.1} parent=1 // pred_check
      _
    $region51: #{tpu_custom_call.1} parent=1 // pred_check_branch
      %45 = sbr.rel (0) target = $region53
    $region52: #{tpu_custom_call.1} parent=1 // pred_region
      _
    $region53: #{tpu_custom_call.1} parent=1 // pred_fallthru
      _
    // Predicated region
    $region54: #{tpu_custom_call.1} parent=1 // pred_check
      _
    $region55: #{tpu_custom_call.1} parent=1 // pred_check_branch
      %47 = sbr.rel (0) target = $region57
    $region56: #{tpu_custom_call.1} parent=1 // pred_region
      _
    $region57: #{tpu_custom_call.1} parent=1 // pred_fallthru
      _
    %v49 = vld [vmem:[%s0] sm:$0xff]
    %v50 = vld [vmem:[%s0 + $0x8] sm:$0xff]
    %v51 = vld [vmem:[%s1] sm:$0xff]
    %v52 = vld [vmem:[%s1 + $0x8] sm:$0xff]
    %v53 = vld [vmem:[%s1 + $0x10] sm:$0xff]
    %v54 = vld [vmem:[%s1 + $0x18] sm:$0xff]
    %v55 = vld [vmem:[%s1 + $0x20] sm:$0xff]
    %v56 = vld [vmem:[%s1 + $0x28] sm:$0xff]
    %v57 = vld [vmem:[%s1 + $0x30] sm:$0xff]
    %v58 = vld [vmem:[%s1 + $0x38] sm:$0xff]
    %v59 = vld [vmem:[%s6] sm:$0x1]
    %v60 = vld [vmem:[%s7] sm:$0x1]
    %vm61 = vcmask 261120
    %v62 = vsel %vm61, %v49, 0.0
    %63 = vadd.xlane.f32.xlu0 %v62
    %v64 = vpop.xlane.xlu0 %63
    %v65 = vsel %vm61, %v50, 0.0
    %66 = vadd.xlane.f32.xlu0 %v65
    %v67 = vpop.xlane.xlu0 %66
    %v68 = vrcp.pop 32.0
    %v69 = vmul.f32 %v64, %v68
    %v70 = vmul.f32 %v67, %v68
    %v71 = vsub.f32 %v49, %v69
    %v72 = vsub.f32 %v50, %v70
    %v73 = vmul.f32 %v71, %v71
    %v74 = vmul.f32 %v72, %v72
    %v75 = vsel %vm61, %v73, 0.0
    %76 = vadd.xlane.f32.xlu0 %v75
    %v77 = vpop.xlane.xlu0 %76
    %v78 = vsel %vm61, %v74, 0.0
    %79 = vadd.xlane.f32.xlu0 %v78
    %v80 = vpop.xlane.xlu0 %79
    %v81 = vrcp.pop 31.0
    %v82 = vmul.f32 %v77, %v81
    %v83 = vmul.f32 %v80, %v81
    %v85 = vlaneseq
    %v86 = vshrl.u32 %v85, 7
    %v87 = vsub.s32 0, %v86
    %v88 = vrot.slane %v59, %v87
    %v90 = vmul.f32 %v88, %v71
    %v91 = vmul.f32 %v88, %v72
    %v92 = vrsqrt.pop %v82
    %v93 = vmul.f32 %v82, %v92
    %vm94 = vcmp.eq.f32.partialorder %v82, inf
    %v95 = vsel %vm94, %v82, %v93
    %vm96 = vcmp.eq.f32.partialorder %v82, 0.0
    %v97 = vand.u32 %v82, 2147483648
    %v98 = vsel %vm96, %v97, %v95
    %v99 = vrsqrt.pop %v83
    %v100 = vmul.f32 %v83, %v99
    %vm101 = vcmp.eq.f32.partialorder %v83, inf
    %v102 = vsel %vm101, %v83, %v100
    %vm103 = vcmp.eq.f32.partialorder %v83, 0.0
    %v104 = vand.u32 %v83, 2147483648
    %v105 = vsel %vm103, %v104, %v102
    %v106 = vadd.f32 %v98, 1e-06
    %v107 = vadd.f32 %v105, 1e-06
    %v108 = vrcp.pop %v106
    %v109 = vmul.f32 %v90, %v108
    %v110 = vrcp.pop %v107
    %v111 = vmul.f32 %v91, %v110
    %v113 = vlaneseq
    %v114 = vshrl.u32 %v113, 7
    %v115 = vsub.s32 0, %v114
    %v116 = vrot.slane %v60, %v115
    %v118 = vadd.f32 %v109, %v116
    %v119 = vadd.f32 %v111, %v116
    %v120 = vpack.c.bf16 %v119, %v118
    %v121 = vld [vmem:[%s2] sm:$0xf]
    %v122 = vld [vmem:[%s2 + $0x4] sm:$0xf]
    %v123 = vld [vmem:[%s2 + $0x8] sm:$0xf]
    %v124 = vld [vmem:[%s2 + $0xc] sm:$0xf]
    %v125 = vld [vmem:[%s3] sm:$0x1]
    %v127 = vlaneseq
    %v128 = vshrl.u32 %v127, 7
    %v129 = vsub.s32 0, %v128
    %v130 = vrot.slane %v125, %v129
    %v136 = vunpack.c.l.b16 %v121
    %v137 = vunpack.c.l.b16 %v122
    %v138 = vunpack.c.l.b16 %v123
    %v139 = vunpack.c.l.b16 %v124
    %v140 = vpack.c.b16 %v137, %v136
    %v141 = vpack.c.b16 %v139, %v138
    %v145 = vsel %vm61, %v120, 0
    %147 = vmatprep.subr.bf16.mxu0 0
    %148 = vmatpush1.bf16.msra.mxu0 %v140
    %149 = vmatprep.subr.bf16.mxu0 0
    %150 = vmatpush1.bf16.msra.mxu0 %v141
    %151 = vmatprep.subr.bf16.mxu0 0
    %152 = vmatpush1.bf16.msra.mxu0 0
    %153 = vmatprep.subr.bf16.mxu0 0
    %154 = vmatpush1.bf16.msra.mxu0 0
    %155 = vmatprep.subr.bf16.mxu0 0
    %156 = vmatpush1.bf16.msra.mxu0 0
    %157 = vmatprep.subr.bf16.mxu0 0
    %158 = vmatpush1.bf16.msra.mxu0 0
    %159 = vmatprep.subr.bf16.mxu0 0
    %160 = vmatpush1.bf16.msra.mxu0 0
    %161 = vmatprep.subr.bf16.mxu0 0
    %162 = vmatpush1.bf16.msra.mxu0 0
    %163 = vmatprep.subr.bf16.mxu0 0
    %164 = vmatpush1.bf16.msra.mxu0 0
    %165 = vmatprep.subr.bf16.mxu0 0
    %166 = vmatpush1.bf16.msra.mxu0 0
    %167 = vmatprep.subr.bf16.mxu0 0
    %168 = vmatpush1.bf16.msra.mxu0 0
    %169 = vmatprep.subr.bf16.mxu0 0
    %170 = vmatpush1.bf16.msra.mxu0 0
    %171 = vmatprep.subr.bf16.mxu0 0
    %172 = vmatpush1.bf16.msra.mxu0 0
    %173 = vmatprep.subr.bf16.mxu0 0
    %174 = vmatpush1.bf16.msra.mxu0 0
    %175 = vmatprep.subr.bf16.mxu0 0
    %176 = vmatpush1.bf16.msra.mxu0 0
    %177 = vmatprep.subr.bf16.mxu0 0
    %178 = vmatpush1.bf16.msra.mxu0 0
    %179 = vmatprep.mubr.bf16.mxu0 0
    %180 = vmatmul.mubr.bf16.gmra.mrb[0].mxu0 %v145
    %v181 = vpop.f32.mrb[0].mxu0
    %v182 = vadd.f32 %v130, %v181
    %v183 = vpop.f32.mrb[0].mxu0
    %v184 = vpop.f32.mrb[0].mxu0
    %v185 = vadd.f32 %v130, %v184
    %v186 = vpop.f32.mrb[0].mxu0
    %187 = vdwg.mxu0
    %189 = vrot.lane.b32.xlu0 %v182, 96
    %v190 = vpop.permute.xlu0 %189
    %vm191 = vcmask 64512
    %v192 = vsel %vm191, %v182, 0
    %v194 = vsel %vm191, %v190, 0
    %196 = vmatprep.subr.mxu0 0.0
    %197 = vmatpush1.xpose.msra.mxu0 %v194
    %198 = vmatprep.subr.mxu0 0.0
    %199 = vmatpush1.xpose.msra.mxu0 0.0
    %200 = vmatprep.subr.mxu0 0.0
    %201 = vmatpush1.xpose.msra.mxu0 0.0
    %202 = vmatprep.subr.mxu0 0.0
    %203 = vmatpush1.xpose.msra.mxu0 0.0
    %204 = vmatprep.subr.mxu0 0.0
    %205 = vmatpush1.xpose.msra.mxu0 0.0
    %206 = vmatprep.subr.mxu0 0.0
    %207 = vmatpush1.xpose.msra.mxu0 0.0
    %208 = vmatprep.subr.mxu0 0.0
    %209 = vmatpush1.xpose.msra.mxu0 0.0
    %210 = vmatprep.subr.mxu0 0.0
    %211 = vmatpush1.xpose.msra.mxu0 0.0
    %212 = vmatprep.subr.mxu0 0.0
    %213 = vmatpush1.xpose.msra.mxu0 0.0
    %214 = vmatprep.subr.mxu0 0.0
    %215 = vmatpush1.xpose.msra.mxu0 0.0
    %216 = vmatprep.subr.mxu0 0.0
    %217 = vmatpush1.xpose.msra.mxu0 0.0
    %218 = vmatprep.subr.mxu0 0.0
    %219 = vmatpush1.xpose.msra.mxu0 0.0
    %220 = vmatprep.subr.mxu0 0.0
    %221 = vmatpush1.xpose.msra.mxu0 0.0
    %222 = vmatprep.subr.mxu0 0.0
    %223 = vmatpush1.xpose.msra.mxu0 0.0
    %224 = vmatprep.subr.mxu0 0.0
    %225 = vmatpush1.xpose.msra.mxu0 0.0
    %226 = vmatprep.subr.mxu0 0.0
    %227 = vmatpush1.xpose.msra.mxu0 0.0
    %228 = vmatprep.subr.mxu0 0.0
    %229 = vmatpush1.xpose.msra.mxu0 0.0
    %230 = vmatprep.subr.mxu0 0.0
    %231 = vmatpush1.xpose.msra.mxu0 0.0
    %232 = vmatprep.subr.mxu0 0.0
    %233 = vmatpush1.xpose.msra.mxu0 0.0
    %234 = vmatprep.subr.mxu0 0.0
    %235 = vmatpush1.xpose.msra.mxu0 0.0
    %236 = vmatprep.subr.mxu0 0.0
    %237 = vmatpush1.xpose.msra.mxu0 0.0
    %238 = vmatprep.subr.mxu0 0.0
    %239 = vmatpush1.xpose.msra.mxu0 0.0
    %240 = vmatprep.subr.mxu0 0.0
    %241 = vmatpush1.xpose.msra.mxu0 0.0
    %242 = vmatprep.subr.mxu0 0.0
    %243 = vmatpush1.xpose.msra.mxu0 0.0
    %244 = vmatprep.subr.mxu0 0.0
    %245 = vmatpush1.xpose.msra.mxu0 0.0
    %246 = vmatprep.subr.mxu0 0.0
    %247 = vmatpush1.xpose.msra.mxu0 0.0
    %248 = vmatprep.subr.mxu0 0.0
    %249 = vmatpush1.xpose.msra.mxu0 0.0
    %250 = vmatprep.subr.mxu0 0.0
    %251 = vmatpush1.xpose.msra.mxu0 0.0
    %252 = vmatprep.subr.mxu0 0.0
    %253 = vmatpush1.xpose.msra.mxu0 0.0
    %254 = vmatprep.subr.mxu0 0.0
    %255 = vmatpush1.xpose.msra.mxu0 0.0
    %256 = vmatprep.subr.mxu0 0.0
    %257 = vmatpush1.xpose.msra.mxu0 0.0
    %258 = vmatprep.subr.mxu0 0.0
    %259 = vmatpush1.xpose.msra.mxu0 0.0
    %260 = vmatprep.mubr.f32.mxu0 0.0
    %261 = vmatmul.mubr.f32.gmra.mrb[0].mxu0 %v192
    %v262 = vpop.f32.mrb[0].mxu0
    %v263 = vadd.f32 0.0, %v262
    %v264 = vpop.f32.mrb[0].mxu0
    %265 = vdwg.mxu0
    %266 = vrot.lane.b32.xlu0 %v182, 120
    %v267 = vpop.permute.xlu0 %266
    %268 = vrot.lane.b32.xlu0 %v182, 88
    %v269 = vpop.permute.xlu0 %268
    %v270 = vsel %vm191, %v267, 0
    %v272 = vsel %vm191, %v269, 0
    %274 = vmatprep.subr.mxu0 0.0
    %275 = vmatpush1.xpose.msra.mxu0 %v272
    %276 = vmatprep.subr.mxu0 0.0
    %277 = vmatpush1.xpose.msra.mxu0 0.0
    %278 = vmatprep.subr.mxu0 0.0
    %279 = vmatpush1.xpose.msra.mxu0 0.0
    %280 = vmatprep.subr.mxu0 0.0
    %281 = vmatpush1.xpose.msra.mxu0 0.0
    %282 = vmatprep.subr.mxu0 0.0
    %283 = vmatpush1.xpose.msra.mxu0 0.0
    %284 = vmatprep.subr.mxu0 0.0
    %285 = vmatpush1.xpose.msra.mxu0 0.0
    %286 = vmatprep.subr.mxu0 0.0
    %287 = vmatpush1.xpose.msra.mxu0 0.0
    %288 = vmatprep.subr.mxu0 0.0
    %289 = vmatpush1.xpose.msra.mxu0 0.0
    %290 = vmatprep.subr.mxu0 0.0
    %291 = vmatpush1.xpose.msra.mxu0 0.0
    %292 = vmatprep.subr.mxu0 0.0
    %293 = vmatpush1.xpose.msra.mxu0 0.0
    %294 = vmatprep.subr.mxu0 0.0
    %295 = vmatpush1.xpose.msra.mxu0 0.0
    %296 = vmatprep.subr.mxu0 0.0
    %297 = vmatpush1.xpose.msra.mxu0 0.0
    %298 = vmatprep.subr.mxu0 0.0
    %299 = vmatpush1.xpose.msra.mxu0 0.0
    %300 = vmatprep.subr.mxu0 0.0
    %301 = vmatpush1.xpose.msra.mxu0 0.0
    %302 = vmatprep.subr.mxu0 0.0
    %303 = vmatpush1.xpose.msra.mxu0 0.0
    %304 = vmatprep.subr.mxu0 0.0
    %305 = vmatpush1.xpose.msra.mxu0 0.0
    %306 = vmatprep.subr.mxu0 0.0
    %307 = vmatpush1.xpose.msra.mxu0 0.0
    %308 = vmatprep.subr.mxu0 0.0
    %309 = vmatpush1.xpose.msra.mxu0 0.0
    %310 = vmatprep.subr.mxu0 0.0
    %311 = vmatpush1.xpose.msra.mxu0 0.0
    %312 = vmatprep.subr.mxu0 0.0
    %313 = vmatpush1.xpose.msra.mxu0 0.0
    %314 = vmatprep.subr.mxu0 0.0
    %315 = vmatpush1.xpose.msra.mxu0 0.0
    %316 = vmatprep.subr.mxu0 0.0
    %317 = vmatpush1.xpose.msra.mxu0 0.0
    %318 = vmatprep.subr.mxu0 0.0
    %319 = vmatpush1.xpose.msra.mxu0 0.0
    %320 = vmatprep.subr.mxu0 0.0
    %321 = vmatpush1.xpose.msra.mxu0 0.0
    %322 = vmatprep.subr.mxu0 0.0
    %323 = vmatpush1.xpose.msra.mxu0 0.0
    %324 = vmatprep.subr.mxu0 0.0
    %325 = vmatpush1.xpose.msra.mxu0 0.0
    %326 = vmatprep.subr.mxu0 0.0
    %327 = vmatpush1.xpose.msra.mxu0 0.0
    %328 = vmatprep.subr.mxu0 0.0
    %329 = vmatpush1.xpose.msra.mxu0 0.0
    %330 = vmatprep.subr.mxu0 0.0
    %331 = vmatpush1.xpose.msra.mxu0 0.0
    %332 = vmatprep.subr.mxu0 0.0
    %333 = vmatpush1.xpose.msra.mxu0 0.0
    %334 = vmatprep.subr.mxu0 0.0
    %335 = vmatpush1.xpose.msra.mxu0 0.0
    %336 = vmatprep.subr.mxu0 0.0
    %337 = vmatpush1.xpose.msra.mxu0 0.0
    %338 = vmatprep.mubr.f32.mxu0 0.0
    %339 = vmatmul.mubr.f32.gmra.mrb[0].mxu0 %v270
    %v340 = vpop.f32.mrb[0].mxu0
    %v341 = vadd.f32 0.0, %v340
    %v342 = vpop.f32.mrb[0].mxu0
    %343 = vdwg.mxu0
    %344 = vrot.lane.b32.xlu0 %v182, 112
    %v345 = vpop.permute.xlu0 %344
    %346 = vrot.lane.b32.xlu0 %v182, 80
    %v347 = vpop.permute.xlu0 %346
    %v348 = vsel %vm191, %v345, 0
    %v350 = vsel %vm191, %v347, 0
    %352 = vmatprep.subr.mxu0 0.0
    %353 = vmatpush1.xpose.msra.mxu0 %v350
    %354 = vmatprep.subr.mxu0 0.0
    %355 = vmatpush1.xpose.msra.mxu0 0.0
    %356 = vmatprep.subr.mxu0 0.0
    %357 = vmatpush1.xpose.msra.mxu0 0.0
    %358 = vmatprep.subr.mxu0 0.0
    %359 = vmatpush1.xpose.msra.mxu0 0.0
    %360 = vmatprep.subr.mxu0 0.0
    %361 = vmatpush1.xpose.msra.mxu0 0.0
    %362 = vmatprep.subr.mxu0 0.0
    %363 = vmatpush1.xpose.msra.mxu0 0.0
    %364 = vmatprep.subr.mxu0 0.0
    %365 = vmatpush1.xpose.msra.mxu0 0.0
    %366 = vmatprep.subr.mxu0 0.0
    %367 = vmatpush1.xpose.msra.mxu0 0.0
    %368 = vmatprep.subr.mxu0 0.0
    %369 = vmatpush1.xpose.msra.mxu0 0.0
    %370 = vmatprep.subr.mxu0 0.0
    %371 = vmatpush1.xpose.msra.mxu0 0.0
    %372 = vmatprep.subr.mxu0 0.0
    %373 = vmatpush1.xpose.msra.mxu0 0.0
    %374 = vmatprep.subr.mxu0 0.0
    %375 = vmatpush1.xpose.msra.mxu0 0.0
    %376 = vmatprep.subr.mxu0 0.0
    %377 = vmatpush1.xpose.msra.mxu0 0.0
    %378 = vmatprep.subr.mxu0 0.0
    %379 = vmatpush1.xpose.msra.mxu0 0.0
    %380 = vmatprep.subr.mxu0 0.0
    %381 = vmatpush1.xpose.msra.mxu0 0.0
    %382 = vmatprep.subr.mxu0 0.0
    %383 = vmatpush1.xpose.msra.mxu0 0.0
    %384 = vmatprep.subr.mxu0 0.0
    %385 = vmatpush1.xpose.msra.mxu0 0.0
    %386 = vmatprep.subr.mxu0 0.0
    %387 = vmatpush1.xpose.msra.mxu0 0.0
    %388 = vmatprep.subr.mxu0 0.0
    %389 = vmatpush1.xpose.msra.mxu0 0.0
    %390 = vmatprep.subr.mxu0 0.0
    %391 = vmatpush1.xpose.msra.mxu0 0.0
    %392 = vmatprep.subr.mxu0 0.0
    %393 = vmatpush1.xpose.msra.mxu0 0.0
    %394 = vmatprep.subr.mxu0 0.0
    %395 = vmatpush1.xpose.msra.mxu0 0.0
    %396 = vmatprep.subr.mxu0 0.0
    %397 = vmatpush1.xpose.msra.mxu0 0.0
    %398 = vmatprep.subr.mxu0 0.0
    %399 = vmatpush1.xpose.msra.mxu0 0.0
    %400 = vmatprep.subr.mxu0 0.0
    %401 = vmatpush1.xpose.msra.mxu0 0.0
    %402 = vmatprep.subr.mxu0 0.0
    %403 = vmatpush1.xpose.msra.mxu0 0.0
    %404 = vmatprep.subr.mxu0 0.0
    %405 = vmatpush1.xpose.msra.mxu0 0.0
    %406 = vmatprep.subr.mxu0 0.0
    %407 = vmatpush1.xpose.msra.mxu0 0.0
    %408 = vmatprep.subr.mxu0 0.0
    %409 = vmatpush1.xpose.msra.mxu0 0.0
    %410 = vmatprep.subr.mxu0 0.0
    %411 = vmatpush1.xpose.msra.mxu0 0.0
    %412 = vmatprep.subr.mxu0 0.0
    %413 = vmatpush1.xpose.msra.mxu0 0.0
    %414 = vmatprep.subr.mxu0 0.0
    %415 = vmatpush1.xpose.msra.mxu0 0.0
    %416 = vmatprep.mubr.f32.mxu0 0.0
    %417 = vmatmul.mubr.f32.gmra.mrb[0].mxu0 %v348
    %v418 = vpop.f32.mrb[0].mxu0
    %v419 = vadd.f32 0.0, %v418
    %v420 = vpop.f32.mrb[0].mxu0
    %421 = vdwg.mxu0
    %422 = vrot.lane.b32.xlu0 %v182, 104
    %v423 = vpop.permute.xlu0 %422
    %424 = vrot.lane.b32.xlu0 %v182, 72
    %v425 = vpop.permute.xlu0 %424
    %v426 = vsel %vm191, %v423, 0
    %v428 = vsel %vm191, %v425, 0
    %430 = vmatprep.subr.mxu0 0.0
    %431 = vmatpush1.xpose.msra.mxu0 %v428
    %432 = vmatprep.subr.mxu0 0.0
    %433 = vmatpush1.xpose.msra.mxu0 0.0
    %434 = vmatprep.subr.mxu0 0.0
    %435 = vmatpush1.xpose.msra.mxu0 0.0
    %436 = vmatprep.subr.mxu0 0.0
    %437 = vmatpush1.xpose.msra.mxu0 0.0
    %438 = vmatprep.subr.mxu0 0.0
    %439 = vmatpush1.xpose.msra.mxu0 0.0
    %440 = vmatprep.subr.mxu0 0.0
    %441 = vmatpush1.xpose.msra.mxu0 0.0
    %442 = vmatprep.subr.mxu0 0.0
    %443 = vmatpush1.xpose.msra.mxu0 0.0
    %444 = vmatprep.subr.mxu0 0.0
    %445 = vmatpush1.xpose.msra.mxu0 0.0
    %446 = vmatprep.subr.mxu0 0.0
    %447 = vmatpush1.xpose.msra.mxu0 0.0
    %448 = vmatprep.subr.mxu0 0.0
    %449 = vmatpush1.xpose.msra.mxu0 0.0
    %450 = vmatprep.subr.mxu0 0.0
    %451 = vmatpush1.xpose.msra.mxu0 0.0
    %452 = vmatprep.subr.mxu0 0.0
    %453 = vmatpush1.xpose.msra.mxu0 0.0
    %454 = vmatprep.subr.mxu0 0.0
    %455 = vmatpush1.xpose.msra.mxu0 0.0
    %456 = vmatprep.subr.mxu0 0.0
    %457 = vmatpush1.xpose.msra.mxu0 0.0
    %458 = vmatprep.subr.mxu0 0.0
    %459 = vmatpush1.xpose.msra.mxu0 0.0
    %460 = vmatprep.subr.mxu0 0.0
    %461 = vmatpush1.xpose.msra.mxu0 0.0
    %462 = vmatprep.subr.mxu0 0.0
    %463 = vmatpush1.xpose.msra.mxu0 0.0
    %464 = vmatprep.subr.mxu0 0.0
    %465 = vmatpush1.xpose.msra.mxu0 0.0
    %466 = vmatprep.subr.mxu0 0.0
    %467 = vmatpush1.xpose.msra.mxu0 0.0
    %468 = vmatprep.subr.mxu0 0.0
    %469 = vmatpush1.xpose.msra.mxu0 0.0
    %470 = vmatprep.subr.mxu0 0.0
    %471 = vmatpush1.xpose.msra.mxu0 0.0
    %472 = vmatprep.subr.mxu0 0.0
    %473 = vmatpush1.xpose.msra.mxu0 0.0
    %474 = vmatprep.subr.mxu0 0.0
    %475 = vmatpush1.xpose.msra.mxu0 0.0
    %476 = vmatprep.subr.mxu0 0.0
    %477 = vmatpush1.xpose.msra.mxu0 0.0
    %478 = vmatprep.subr.mxu0 0.0
    %479 = vmatpush1.xpose.msra.mxu0 0.0
    %480 = vmatprep.subr.mxu0 0.0
    %481 = vmatpush1.xpose.msra.mxu0 0.0
    %482 = vmatprep.subr.mxu0 0.0
    %483 = vmatpush1.xpose.msra.mxu0 0.0
    %484 = vmatprep.subr.mxu0 0.0
    %485 = vmatpush1.xpose.msra.mxu0 0.0
    %486 = vmatprep.subr.mxu0 0.0
    %487 = vmatpush1.xpose.msra.mxu0 0.0
    %488 = vmatprep.subr.mxu0 0.0
    %489 = vmatpush1.xpose.msra.mxu0 0.0
    %490 = vmatprep.subr.mxu0 0.0
    %491 = vmatpush1.xpose.msra.mxu0 0.0
    %492 = vmatprep.subr.mxu0 0.0
    %493 = vmatpush1.xpose.msra.mxu0 0.0
    %494 = vmatprep.mubr.f32.mxu0 0.0
    %495 = vmatmul.mubr.f32.gmra.mrb[0].mxu0 %v426
    %v496 = vpop.f32.mrb[0].mxu0
    %v497 = vadd.f32 0.0, %v496
    %v498 = vpop.f32.mrb[0].mxu0
    %499 = vdwg.mxu0
    %501 = vrot.lane.b32.xlu0 %v185, 96
    %v502 = vpop.permute.xlu0 %501
    %v503 = vsel %vm191, %v185, 0
    %v505 = vsel %vm191, %v502, 0
    %507 = vmatprep.subr.mxu0 0.0
    %508 = vmatpush1.xpose.msra.mxu0 %v505
    %509 = vmatprep.subr.mxu0 0.0
    %510 = vmatpush1.xpose.msra.mxu0 0.0
    %511 = vmatprep.subr.mxu0 0.0
    %512 = vmatpush1.xpose.msra.mxu0 0.0
    %513 = vmatprep.subr.mxu0 0.0
    %514 = vmatpush1.xpose.msra.mxu0 0.0
    %515 = vmatprep.subr.mxu0 0.0
    %516 = vmatpush1.xpose.msra.mxu0 0.0
    %517 = vmatprep.subr.mxu0 0.0
    %518 = vmatpush1.xpose.msra.mxu0 0.0
    %519 = vmatprep.subr.mxu0 0.0
    %520 = vmatpush1.xpose.msra.mxu0 0.0
    %521 = vmatprep.subr.mxu0 0.0
    %522 = vmatpush1.xpose.msra.mxu0 0.0
    %523 = vmatprep.subr.mxu0 0.0
    %524 = vmatpush1.xpose.msra.mxu0 0.0
    %525 = vmatprep.subr.mxu0 0.0
    %526 = vmatpush1.xpose.msra.mxu0 0.0
    %527 = vmatprep.subr.mxu0 0.0
    %528 = vmatpush1.xpose.msra.mxu0 0.0
    %529 = vmatprep.subr.mxu0 0.0
    %530 = vmatpush1.xpose.msra.mxu0 0.0
    %531 = vmatprep.subr.mxu0 0.0
    %532 = vmatpush1.xpose.msra.mxu0 0.0
    %533 = vmatprep.subr.mxu0 0.0
    %534 = vmatpush1.xpose.msra.mxu0 0.0
    %535 = vmatprep.subr.mxu0 0.0
    %536 = vmatpush1.xpose.msra.mxu0 0.0
    %537 = vmatprep.subr.mxu0 0.0
    %538 = vmatpush1.xpose.msra.mxu0 0.0
    %539 = vmatprep.subr.mxu0 0.0
    %540 = vmatpush1.xpose.msra.mxu0 0.0
    %541 = vmatprep.subr.mxu0 0.0
    %542 = vmatpush1.xpose.msra.mxu0 0.0
    %543 = vmatprep.subr.mxu0 0.0
    %544 = vmatpush1.xpose.msra.mxu0 0.0
    %545 = vmatprep.subr.mxu0 0.0
    %546 = vmatpush1.xpose.msra.mxu0 0.0
    %547 = vmatprep.subr.mxu0 0.0
    %548 = vmatpush1.xpose.msra.mxu0 0.0
    %549 = vmatprep.subr.mxu0 0.0
    %550 = vmatpush1.xpose.msra.mxu0 0.0
    %551 = vmatprep.subr.mxu0 0.0
    %552 = vmatpush1.xpose.msra.mxu0 0.0
    %553 = vmatprep.subr.mxu0 0.0
    %554 = vmatpush1.xpose.msra.mxu0 0.0
    %555 = vmatprep.subr.mxu0 0.0
    %556 = vmatpush1.xpose.msra.mxu0 0.0
    %557 = vmatprep.subr.mxu0 0.0
    %558 = vmatpush1.xpose.msra.mxu0 0.0
    %559 = vmatprep.subr.mxu0 0.0
    %560 = vmatpush1.xpose.msra.mxu0 0.0
    %561 = vmatprep.subr.mxu0 0.0
    %562 = vmatpush1.xpose.msra.mxu0 0.0
    %563 = vmatprep.subr.mxu0 0.0
    %564 = vmatpush1.xpose.msra.mxu0 0.0
    %565 = vmatprep.subr.mxu0 0.0
    %566 = vmatpush1.xpose.msra.mxu0 0.0
    %567 = vmatprep.subr.mxu0 0.0
    %568 = vmatpush1.xpose.msra.mxu0 0.0
    %569 = vmatprep.subr.mxu0 0.0
    %570 = vmatpush1.xpose.msra.mxu0 0.0
    %571 = vmatprep.mubr.f32.mxu0 0.0
    %572 = vmatmul.mubr.f32.gmra.mrb[0].mxu0 %v503
    %v573 = vpop.f32.mrb[0].mxu0
    %v574 = vadd.f32 0.0, %v573
    %v575 = vpop.f32.mrb[0].mxu0
    %576 = vdwg.mxu0
    %577 = vrot.lane.b32.xlu0 %v185, 120
    %v578 = vpop.permute.xlu0 %577
    %579 = vrot.lane.b32.xlu0 %v185, 88
    %v580 = vpop.permute.xlu0 %579
    %v581 = vsel %vm191, %v578, 0
    %v583 = vsel %vm191, %v580, 0
    %585 = vmatprep.subr.mxu0 0.0
    %586 = vmatpush1.xpose.msra.mxu0 %v583
    %587 = vmatprep.subr.mxu0 0.0
    %588 = vmatpush1.xpose.msra.mxu0 0.0
    %589 = vmatprep.subr.mxu0 0.0
    %590 = vmatpush1.xpose.msra.mxu0 0.0
    %591 = vmatprep.subr.mxu0 0.0
    %592 = vmatpush1.xpose.msra.mxu0 0.0
    %593 = vmatprep.subr.mxu0 0.0
    %594 = vmatpush1.xpose.msra.mxu0 0.0
    %595 = vmatprep.subr.mxu0 0.0
    %596 = vmatpush1.xpose.msra.mxu0 0.0
    %597 = vmatprep.subr.mxu0 0.0
    %598 = vmatpush1.xpose.msra.mxu0 0.0
    %599 = vmatprep.subr.mxu0 0.0
    %600 = vmatpush1.xpose.msra.mxu0 0.0
    %601 = vmatprep.subr.mxu0 0.0
    %602 = vmatpush1.xpose.msra.mxu0 0.0
    %603 = vmatprep.subr.mxu0 0.0
    %604 = vmatpush1.xpose.msra.mxu0 0.0
    %605 = vmatprep.subr.mxu0 0.0
    %606 = vmatpush1.xpose.msra.mxu0 0.0
    %607 = vmatprep.subr.mxu0 0.0
    %608 = vmatpush1.xpose.msra.mxu0 0.0
    %609 = vmatprep.subr.mxu0 0.0
    %610 = vmatpush1.xpose.msra.mxu0 0.0
    %611 = vmatprep.subr.mxu0 0.0
    %612 = vmatpush1.xpose.msra.mxu0 0.0
    %613 = vmatprep.subr.mxu0 0.0
    %614 = vmatpush1.xpose.msra.mxu0 0.0
    %615 = vmatprep.subr.mxu0 0.0
    %616 = vmatpush1.xpose.msra.mxu0 0.0
    %617 = vmatprep.subr.mxu0 0.0
    %618 = vmatpush1.xpose.msra.mxu0 0.0
    %619 = vmatprep.subr.mxu0 0.0
    %620 = vmatpush1.xpose.msra.mxu0 0.0
    %621 = vmatprep.subr.mxu0 0.0
    %622 = vmatpush1.xpose.msra.mxu0 0.0
    %623 = vmatprep.subr.mxu0 0.0
    %624 = vmatpush1.xpose.msra.mxu0 0.0
    %625 = vmatprep.subr.mxu0 0.0
    %626 = vmatpush1.xpose.msra.mxu0 0.0
    %627 = vmatprep.subr.mxu0 0.0
    %628 = vmatpush1.xpose.msra.mxu0 0.0
    %629 = vmatprep.subr.mxu0 0.0
    %630 = vmatpush1.xpose.msra.mxu0 0.0
    %631 = vmatprep.subr.mxu0 0.0
    %632 = vmatpush1.xpose.msra.mxu0 0.0
    %633 = vmatprep.subr.mxu0 0.0
    %634 = vmatpush1.xpose.msra.mxu0 0.0
    %635 = vmatprep.subr.mxu0 0.0
    %636 = vmatpush1.xpose.msra.mxu0 0.0
    %637 = vmatprep.subr.mxu0 0.0
    %638 = vmatpush1.xpose.msra.mxu0 0.0
    %639 = vmatprep.subr.mxu0 0.0
    %640 = vmatpush1.xpose.msra.mxu0 0.0
    %641 = vmatprep.subr.mxu0 0.0
    %642 = vmatpush1.xpose.msra.mxu0 0.0
    %643 = vmatprep.subr.mxu0 0.0
    %644 = vmatpush1.xpose.msra.mxu0 0.0
    %645 = vmatprep.subr.mxu0 0.0
    %646 = vmatpush1.xpose.msra.mxu0 0.0
    %647 = vmatprep.subr.mxu0 0.0
    %648 = vmatpush1.xpose.msra.mxu0 0.0
    %649 = vmatprep.mubr.f32.mxu0 0.0
    %650 = vmatmul.mubr.f32.gmra.mrb[0].mxu0 %v581
    %v651 = vpop.f32.mrb[0].mxu0
    %v652 = vadd.f32 0.0, %v651
    %v653 = vpop.f32.mrb[0].mxu0
    %654 = vdwg.mxu0
    %655 = vrot.lane.b32.xlu0 %v185, 112
    %v656 = vpop.permute.xlu0 %655
    %657 = vrot.lane.b32.xlu0 %v185, 80
    %v658 = vpop.permute.xlu0 %657
    %v659 = vsel %vm191, %v656, 0
    %v661 = vsel %vm191, %v658, 0
    %663 = vmatprep.subr.mxu0 0.0
    %664 = vmatpush1.xpose.msra.mxu0 %v661
    %665 = vmatprep.subr.mxu0 0.0
    %666 = vmatpush1.xpose.msra.mxu0 0.0
    %667 = vmatprep.subr.mxu0 0.0
    %668 = vmatpush1.xpose.msra.mxu0 0.0
    %669 = vmatprep.subr.mxu0 0.0
    %670 = vmatpush1.xpose.msra.mxu0 0.0
    %671 = vmatprep.subr.mxu0 0.0
    %672 = vmatpush1.xpose.msra.mxu0 0.0
    %673 = vmatprep.subr.mxu0 0.0
    %674 = vmatpush1.xpose.msra.mxu0 0.0
    %675 = vmatprep.subr.mxu0 0.0
    %676 = vmatpush1.xpose.msra.mxu0 0.0
    %677 = vmatprep.subr.mxu0 0.0
    %678 = vmatpush1.xpose.msra.mxu0 0.0
    %679 = vmatprep.subr.mxu0 0.0
    %680 = vmatpush1.xpose.msra.mxu0 0.0
    %681 = vmatprep.subr.mxu0 0.0
    %682 = vmatpush1.xpose.msra.mxu0 0.0
    %683 = vmatprep.subr.mxu0 0.0
    %684 = vmatpush1.xpose.msra.mxu0 0.0
    %685 = vmatprep.subr.mxu0 0.0
    %686 = vmatpush1.xpose.msra.mxu0 0.0
    %687 = vmatprep.subr.mxu0 0.0
    %688 = vmatpush1.xpose.msra.mxu0 0.0
    %689 = vmatprep.subr.mxu0 0.0
    %690 = vmatpush1.xpose.msra.mxu0 0.0
    %691 = vmatprep.subr.mxu0 0.0
    %692 = vmatpush1.xpose.msra.mxu0 0.0
    %693 = vmatprep.subr.mxu0 0.0
    %694 = vmatpush1.xpose.msra.mxu0 0.0
    %695 = vmatprep.subr.mxu0 0.0
    %696 = vmatpush1.xpose.msra.mxu0 0.0
    %697 = vmatprep.subr.mxu0 0.0
    %698 = vmatpush1.xpose.msra.mxu0 0.0
    %699 = vmatprep.subr.mxu0 0.0
    %700 = vmatpush1.xpose.msra.mxu0 0.0
    %701 = vmatprep.subr.mxu0 0.0
    %702 = vmatpush1.xpose.msra.mxu0 0.0
    %703 = vmatprep.subr.mxu0 0.0
    %704 = vmatpush1.xpose.msra.mxu0 0.0
    %705 = vmatprep.subr.mxu0 0.0
    %706 = vmatpush1.xpose.msra.mxu0 0.0
    %707 = vmatprep.subr.mxu0 0.0
    %708 = vmatpush1.xpose.msra.mxu0 0.0
    %709 = vmatprep.subr.mxu0 0.0
    %710 = vmatpush1.xpose.msra.mxu0 0.0
    %711 = vmatprep.subr.mxu0 0.0
    %712 = vmatpush1.xpose.msra.mxu0 0.0
    %713 = vmatprep.subr.mxu0 0.0
    %714 = vmatpush1.xpose.msra.mxu0 0.0
    %715 = vmatprep.subr.mxu0 0.0
    %716 = vmatpush1.xpose.msra.mxu0 0.0
    %717 = vmatprep.subr.mxu0 0.0
    %718 = vmatpush1.xpose.msra.mxu0 0.0
    %719 = vmatprep.subr.mxu0 0.0
    %720 = vmatpush1.xpose.msra.mxu0 0.0
    %721 = vmatprep.subr.mxu0 0.0
    %722 = vmatpush1.xpose.msra.mxu0 0.0
    %723 = vmatprep.subr.mxu0 0.0
    %724 = vmatpush1.xpose.msra.mxu0 0.0
    %725 = vmatprep.subr.mxu0 0.0
    %726 = vmatpush1.xpose.msra.mxu0 0.0
    %727 = vmatprep.mubr.f32.mxu0 0.0
    %728 = vmatmul.mubr.f32.gmra.mrb[0].mxu0 %v659
    %v729 = vpop.f32.mrb[0].mxu0
    %v730 = vadd.f32 0.0, %v729
    %v731 = vpop.f32.mrb[0].mxu0
    %732 = vdwg.mxu0
    %733 = vrot.lane.b32.xlu0 %v185, 104
    %v734 = vpop.permute.xlu0 %733
    %735 = vrot.lane.b32.xlu0 %v185, 72
    %v736 = vpop.permute.xlu0 %735
    %v737 = vsel %vm191, %v734, 0
    %v739 = vsel %vm191, %v736, 0
    %741 = vmatprep.subr.mxu0 0.0
    %742 = vmatpush1.xpose.msra.mxu0 %v739
    %743 = vmatprep.subr.mxu0 0.0
    %744 = vmatpush1.xpose.msra.mxu0 0.0
    %745 = vmatprep.subr.mxu0 0.0
    %746 = vmatpush1.xpose.msra.mxu0 0.0
    %747 = vmatprep.subr.mxu0 0.0
    %748 = vmatpush1.xpose.msra.mxu0 0.0
    %749 = vmatprep.subr.mxu0 0.0
    %750 = vmatpush1.xpose.msra.mxu0 0.0
    %751 = vmatprep.subr.mxu0 0.0
    %752 = vmatpush1.xpose.msra.mxu0 0.0
    %753 = vmatprep.subr.mxu0 0.0
    %754 = vmatpush1.xpose.msra.mxu0 0.0
    %755 = vmatprep.subr.mxu0 0.0
    %756 = vmatpush1.xpose.msra.mxu0 0.0
    %757 = vmatprep.subr.mxu0 0.0
    %758 = vmatpush1.xpose.msra.mxu0 0.0
    %759 = vmatprep.subr.mxu0 0.0
    %760 = vmatpush1.xpose.msra.mxu0 0.0
    %761 = vmatprep.subr.mxu0 0.0
    %762 = vmatpush1.xpose.msra.mxu0 0.0
    %763 = vmatprep.subr.mxu0 0.0
    %764 = vmatpush1.xpose.msra.mxu0 0.0
    %765 = vmatprep.subr.mxu0 0.0
    %766 = vmatpush1.xpose.msra.mxu0 0.0
    %767 = vmatprep.subr.mxu0 0.0
    %768 = vmatpush1.xpose.msra.mxu0 0.0
    %769 = vmatprep.subr.mxu0 0.0
    %770 = vmatpush1.xpose.msra.mxu0 0.0
    %771 = vmatprep.subr.mxu0 0.0
    %772 = vmatpush1.xpose.msra.mxu0 0.0
    %773 = vmatprep.subr.mxu0 0.0
    %774 = vmatpush1.xpose.msra.mxu0 0.0
    %775 = vmatprep.subr.mxu0 0.0
    %776 = vmatpush1.xpose.msra.mxu0 0.0
    %777 = vmatprep.subr.mxu0 0.0
    %778 = vmatpush1.xpose.msra.mxu0 0.0
    %779 = vmatprep.subr.mxu0 0.0
    %780 = vmatpush1.xpose.msra.mxu0 0.0
    %781 = vmatprep.subr.mxu0 0.0
    %782 = vmatpush1.xpose.msra.mxu0 0.0
    %783 = vmatprep.subr.mxu0 0.0
    %784 = vmatpush1.xpose.msra.mxu0 0.0
    %785 = vmatprep.subr.mxu0 0.0
    %786 = vmatpush1.xpose.msra.mxu0 0.0
    %787 = vmatprep.subr.mxu0 0.0
    %788 = vmatpush1.xpose.msra.mxu0 0.0
    %789 = vmatprep.subr.mxu0 0.0
    %790 = vmatpush1.xpose.msra.mxu0 0.0
    %791 = vmatprep.subr.mxu0 0.0
    %792 = vmatpush1.xpose.msra.mxu0 0.0
    %793 = vmatprep.subr.mxu0 0.0
    %794 = vmatpush1.xpose.msra.mxu0 0.0
    %795 = vmatprep.subr.mxu0 0.0
    %796 = vmatpush1.xpose.msra.mxu0 0.0
    %797 = vmatprep.subr.mxu0 0.0
    %798 = vmatpush1.xpose.msra.mxu0 0.0
    %799 = vmatprep.subr.mxu0 0.0
    %800 = vmatpush1.xpose.msra.mxu0 0.0
    %801 = vmatprep.subr.mxu0 0.0
    %802 = vmatpush1.xpose.msra.mxu0 0.0
    %803 = vmatprep.subr.mxu0 0.0
    %804 = vmatpush1.xpose.msra.mxu0 0.0
    %805 = vmatprep.mubr.f32.mxu0 0.0
    %806 = vmatmul.mubr.f32.gmra.mrb[0].mxu0 %v737
    %v807 = vpop.f32.mrb[0].mxu0
    %v808 = vadd.f32 0.0, %v807
    %v809 = vpop.f32.mrb[0].mxu0
    %810 = vdwg.mxu0
    %v811 = vadd.f32 %v263, %v51
    %v812 = vadd.f32 %v341, %v52
    %v813 = vadd.f32 %v419, %v53
    %v814 = vadd.f32 %v497, %v54
    %v815 = vadd.f32 %v574, %v55
    %v816 = vadd.f32 %v652, %v56
    %v817 = vadd.f32 %v730, %v57
    %v818 = vadd.f32 %v808, %v58
    %v819 = vsel %vm191, %v811, -inf
    %820 = vmax.xlane.f32.xlu0 %v819
    %v821 = vpop.xlane.xlu0 %820
    %v822 = vsel %vm191, %v812, -inf
    %823 = vmax.xlane.f32.xlu0 %v822
    %v824 = vpop.xlane.xlu0 %823
    %v825 = vsel %vm191, %v813, -inf
    %826 = vmax.xlane.f32.xlu0 %v825
    %v827 = vpop.xlane.xlu0 %826
    %v828 = vsel %vm191, %v814, -inf
    %829 = vmax.xlane.f32.xlu0 %v828
    %v830 = vpop.xlane.xlu0 %829
    %v831 = vsel %vm191, %v815, -inf
    %832 = vmax.xlane.f32.xlu0 %v831
    %v833 = vpop.xlane.xlu0 %832
    %v834 = vsel %vm191, %v816, -inf
    %835 = vmax.xlane.f32.xlu0 %v834
    %v836 = vpop.xlane.xlu0 %835
    %v837 = vsel %vm191, %v817, -inf
    %838 = vmax.xlane.f32.xlu0 %v837
    %v839 = vpop.xlane.xlu0 %838
    %v840 = vsel %vm191, %v818, -inf
    %841 = vmax.xlane.f32.xlu0 %v840
    %v842 = vpop.xlane.xlu0 %841
    %v843 = vsub.f32 %v811, %v821
    %v844 = vsub.f32 %v812, %v824
    %v845 = vsub.f32 %v813, %v827
    %v846 = vsub.f32 %v814, %v830
    %v847 = vsub.f32 %v815, %v833
    %v848 = vsub.f32 %v816, %v836
    %v849 = vsub.f32 %v817, %v839
    %v850 = vsub.f32 %v818, %v842
    %v851 = vmul.f32 %v843, 1.442695
    %v852 = vpow.pop %v851
    %v853 = vmul.f32 %v844, 1.442695
    %v854 = vpow.pop %v853
    %v855 = vmul.f32 %v845, 1.442695
    %v856 = vpow.pop %v855
    %v857 = vmul.f32 %v846, 1.442695
    %v858 = vpow.pop %v857
    %v859 = vmul.f32 %v847, 1.442695
    %v860 = vpow.pop %v859
    %v861 = vmul.f32 %v848, 1.442695
    %v862 = vpow.pop %v861
    %v863 = vmul.f32 %v849, 1.442695
    %v864 = vpow.pop %v863
    %v865 = vmul.f32 %v850, 1.442695
    %v866 = vpow.pop %v865
    %v867 = vsel %vm191, %v852, 0.0
    %868 = vadd.xlane.f32.xlu0 %v867
    %v869 = vpop.xlane.xlu0 %868
    %v870 = vsel %vm191, %v854, 0.0
    %871 = vadd.xlane.f32.xlu0 %v870
    %v872 = vpop.xlane.xlu0 %871
    %v873 = vsel %vm191, %v856, 0.0
    %874 = vadd.xlane.f32.xlu0 %v873
    %v875 = vpop.xlane.xlu0 %874
    %v876 = vsel %vm191, %v858, 0.0
    %877 = vadd.xlane.f32.xlu0 %v876
    %v878 = vpop.xlane.xlu0 %877
    %v879 = vsel %vm191, %v860, 0.0
    %880 = vadd.xlane.f32.xlu0 %v879
    %v881 = vpop.xlane.xlu0 %880
    %v882 = vsel %vm191, %v862, 0.0
    %883 = vadd.xlane.f32.xlu0 %v882
    %v884 = vpop.xlane.xlu0 %883
    %v885 = vsel %vm191, %v864, 0.0
    %886 = vadd.xlane.f32.xlu0 %v885
    %v887 = vpop.xlane.xlu0 %886
    %v888 = vsel %vm191, %v866, 0.0
    %889 = vadd.xlane.f32.xlu0 %v888
    %v890 = vpop.xlane.xlu0 %889
    %v891 = vrcp.pop %v869
    %v892 = vrcp.pop %v872
    %v893 = vrcp.pop %v875
    %v894 = vrcp.pop %v878
    %v895 = vrcp.pop %v881
    %v896 = vrcp.pop %v884
    %v897 = vrcp.pop %v887
    %v898 = vrcp.pop %v890
    %v899 = vmul.f32 %v852, %v891
    %v900 = vmul.f32 %v854, %v892
    %v901 = vmul.f32 %v856, %v893
    %v902 = vmul.f32 %v858, %v894
    %v903 = vmul.f32 %v860, %v895
    %v904 = vmul.f32 %v862, %v896
    %v905 = vmul.f32 %v864, %v897
    %v906 = vmul.f32 %v866, %v898
    %907 = vrot.lane.b32.xlu0 %v182, 64
    %v908 = vpop.permute.xlu0 %907
    %v911 = vsel %vm191, %v899, 0
    %913 = vmatprep.subr.mxu0 0.0
    %914 = vmatpush1.msra.mxu0 %v908
    %915 = vmatprep.subr.mxu0 0.0
    %916 = vmatpush1.msra.mxu0 0.0
    %917 = vmatprep.subr.mxu0 0.0
    %918 = vmatpush1.msra.mxu0 0.0
    %919 = vmatprep.subr.mxu0 0.0
    %920 = vmatpush1.msra.mxu0 0.0
    %921 = vmatprep.subr.mxu0 0.0
    %922 = vmatpush1.msra.mxu0 0.0
    %923 = vmatprep.subr.mxu0 0.0
    %924 = vmatpush1.msra.mxu0 0.0
    %925 = vmatprep.subr.mxu0 0.0
    %926 = vmatpush1.msra.mxu0 0.0
    %927 = vmatprep.subr.mxu0 0.0
    %928 = vmatpush1.msra.mxu0 0.0
    %929 = vmatprep.subr.mxu0 0.0
    %930 = vmatpush1.msra.mxu0 0.0
    %931 = vmatprep.subr.mxu0 0.0
    %932 = vmatpush1.msra.mxu0 0.0
    %933 = vmatprep.subr.mxu0 0.0
    %934 = vmatpush1.msra.mxu0 0.0
    %935 = vmatprep.subr.mxu0 0.0
    %936 = vmatpush1.msra.mxu0 0.0
    %937 = vmatprep.subr.mxu0 0.0
    %938 = vmatpush1.msra.mxu0 0.0
    %939 = vmatprep.subr.mxu0 0.0
    %940 = vmatpush1.msra.mxu0 0.0
    %941 = vmatprep.subr.mxu0 0.0
    %942 = vmatpush1.msra.mxu0 0.0
    %943 = vmatprep.subr.mxu0 0.0
    %944 = vmatpush1.msra.mxu0 0.0
    %945 = vmatprep.subr.mxu0 0.0
    %946 = vmatpush1.msra.mxu0 0.0
    %947 = vmatprep.subr.mxu0 0.0
    %948 = vmatpush1.msra.mxu0 0.0
    %949 = vmatprep.subr.mxu0 0.0
    %950 = vmatpush1.msra.mxu0 0.0
    %951 = vmatprep.subr.mxu0 0.0
    %952 = vmatpush1.msra.mxu0 0.0
    %953 = vmatprep.subr.mxu0 0.0
    %954 = vmatpush1.msra.mxu0 0.0
    %955 = vmatprep.subr.mxu0 0.0
    %956 = vmatpush1.msra.mxu0 0.0
    %957 = vmatprep.subr.mxu0 0.0
    %958 = vmatpush1.msra.mxu0 0.0
    %959 = vmatprep.subr.mxu0 0.0
    %960 = vmatpush1.msra.mxu0 0.0
    %961 = vmatprep.subr.mxu0 0.0
    %962 = vmatpush1.msra.mxu0 0.0
    %963 = vmatprep.subr.mxu0 0.0
    %964 = vmatpush1.msra.mxu0 0.0
    %965 = vmatprep.subr.mxu0 0.0
    %966 = vmatpush1.msra.mxu0 0.0
    %967 = vmatprep.subr.mxu0 0.0
    %968 = vmatpush1.msra.mxu0 0.0
    %969 = vmatprep.subr.mxu0 0.0
    %970 = vmatpush1.msra.mxu0 0.0
    %971 = vmatprep.subr.mxu0 0.0
    %972 = vmatpush1.msra.mxu0 0.0
    %973 = vmatprep.subr.mxu0 0.0
    %974 = vmatpush1.msra.mxu0 0.0
    %975 = vmatprep.subr.mxu0 0.0
    %976 = vmatpush1.msra.mxu0 0.0
    %977 = vmatprep.mubr.f32.mxu0 0.0
    %978 = vmatmul.mubr.f32.gmra.mrb[0].mxu0 %v911
    %v979 = vpop.f32.mrb[0].mxu0
    %v980 = vadd.f32 0.0, %v979
    %v981 = vpop.f32.mrb[0].mxu0
    %982 = vdwg.mxu0
    %983 = vrot.lane.b32.xlu0 %v182, 56
    %v984 = vpop.permute.xlu0 %983
    %v987 = vsel %vm191, %v900, 0
    %989 = vmatprep.subr.mxu0 0.0
    %990 = vmatpush1.msra.mxu0 %v984
    %991 = vmatprep.subr.mxu0 0.0
    %992 = vmatpush1.msra.mxu0 0.0
    %993 = vmatprep.subr.mxu0 0.0
    %994 = vmatpush1.msra.mxu0 0.0
    %995 = vmatprep.subr.mxu0 0.0
    %996 = vmatpush1.msra.mxu0 0.0
    %997 = vmatprep.subr.mxu0 0.0
    %998 = vmatpush1.msra.mxu0 0.0
    %999 = vmatprep.subr.mxu0 0.0
    %1000 = vmatpush1.msra.mxu0 0.0
    %1001 = vmatprep.subr.mxu0 0.0
    %1002 = vmatpush1.msra.mxu0 0.0
    %1003 = vmatprep.subr.mxu0 0.0
    %1004 = vmatpush1.msra.mxu0 0.0
    %1005 = vmatprep.subr.mxu0 0.0
    %1006 = vmatpush1.msra.mxu0 0.0
    %1007 = vmatprep.subr.mxu0 0.0
    %1008 = vmatpush1.msra.mxu0 0.0
    %1009 = vmatprep.subr.mxu0 0.0
    %1010 = vmatpush1.msra.mxu0 0.0
    %1011 = vmatprep.subr.mxu0 0.0
    %1012 = vmatpush1.msra.mxu0 0.0
    %1013 = vmatprep.subr.mxu0 0.0
    %1014 = vmatpush1.msra.mxu0 0.0
    %1015 = vmatprep.subr.mxu0 0.0
    %1016 = vmatpush1.msra.mxu0 0.0
    %1017 = vmatprep.subr.mxu0 0.0
    %1018 = vmatpush1.msra.mxu0 0.0
    %1019 = vmatprep.subr.mxu0 0.0
    %1020 = vmatpush1.msra.mxu0 0.0
    %1021 = vmatprep.subr.mxu0 0.0
    %1022 = vmatpush1.msra.mxu0 0.0
    %1023 = vmatprep.subr.mxu0 0.0
    %1024 = vmatpush1.msra.mxu0 0.0
    %1025 = vmatprep.subr.mxu0 0.0
    %1026 = vmatpush1.msra.mxu0 0.0
    %1027 = vmatprep.subr.mxu0 0.0
    %1028 = vmatpush1.msra.mxu0 0.0
    %1029 = vmatprep.subr.mxu0 0.0
    %1030 = vmatpush1.msra.mxu0 0.0
    %1031 = vmatprep.subr.mxu0 0.0
    %1032 = vmatpush1.msra.mxu0 0.0
    %1033 = vmatprep.subr.mxu0 0.0
    %1034 = vmatpush1.msra.mxu0 0.0
    %1035 = vmatprep.subr.mxu0 0.0
    %1036 = vmatpush1.msra.mxu0 0.0
    %1037 = vmatprep.subr.mxu0 0.0
    %1038 = vmatpush1.msra.mxu0 0.0
    %1039 = vmatprep.subr.mxu0 0.0
    %1040 = vmatpush1.msra.mxu0 0.0
    %1041 = vmatprep.subr.mxu0 0.0
    %1042 = vmatpush1.msra.mxu0 0.0
    %1043 = vmatprep.subr.mxu0 0.0
    %1044 = vmatpush1.msra.mxu0 0.0
    %1045 = vmatprep.subr.mxu0 0.0
    %1046 = vmatpush1.msra.mxu0 0.0
    %1047 = vmatprep.subr.mxu0 0.0
    %1048 = vmatpush1.msra.mxu0 0.0
    %1049 = vmatprep.subr.mxu0 0.0
    %1050 = vmatpush1.msra.mxu0 0.0
    %1051 = vmatprep.subr.mxu0 0.0
    %1052 = vmatpush1.msra.mxu0 0.0
    %1053 = vmatprep.mubr.f32.mxu0 0.0
    %1054 = vmatmul.mubr.f32.gmra.mrb[0].mxu0 %v987
    %v1055 = vpop.f32.mrb[0].mxu0
    %v1056 = vadd.f32 0.0, %v1055
    %v1057 = vpop.f32.mrb[0].mxu0
    %1058 = vdwg.mxu0
    %1059 = vrot.lane.b32.xlu0 %v182, 48
    %v1060 = vpop.permute.xlu0 %1059
    %v1063 = vsel %vm191, %v901, 0
    %1065 = vmatprep.subr.mxu0 0.0
    %1066 = vmatpush1.msra.mxu0 %v1060
    %1067 = vmatprep.subr.mxu0 0.0
    %1068 = vmatpush1.msra.mxu0 0.0
    %1069 = vmatprep.subr.mxu0 0.0
    %1070 = vmatpush1.msra.mxu0 0.0
    %1071 = vmatprep.subr.mxu0 0.0
    %1072 = vmatpush1.msra.mxu0 0.0
    %1073 = vmatprep.subr.mxu0 0.0
    %1074 = vmatpush1.msra.mxu0 0.0
    %1075 = vmatprep.subr.mxu0 0.0
    %1076 = vmatpush1.msra.mxu0 0.0
    %1077 = vmatprep.subr.mxu0 0.0
    %1078 = vmatpush1.msra.mxu0 0.0
    %1079 = vmatprep.subr.mxu0 0.0
    %1080 = vmatpush1.msra.mxu0 0.0
    %1081 = vmatprep.subr.mxu0 0.0
    %1082 = vmatpush1.msra.mxu0 0.0
    %1083 = vmatprep.subr.mxu0 0.0
    %1084 = vmatpush1.msra.mxu0 0.0
    %1085 = vmatprep.subr.mxu0 0.0
    %1086 = vmatpush1.msra.mxu0 0.0
    %1087 = vmatprep.subr.mxu0 0.0
    %1088 = vmatpush1.msra.mxu0 0.0
    %1089 = vmatprep.subr.mxu0 0.0
    %1090 = vmatpush1.msra.mxu0 0.0
    %1091 = vmatprep.subr.mxu0 0.0
    %1092 = vmatpush1.msra.mxu0 0.0
    %1093 = vmatprep.subr.mxu0 0.0
    %1094 = vmatpush1.msra.mxu0 0.0
    %1095 = vmatprep.subr.mxu0 0.0
    %1096 = vmatpush1.msra.mxu0 0.0
    %1097 = vmatprep.subr.mxu0 0.0
    %1098 = vmatpush1.msra.mxu0 0.0
    %1099 = vmatprep.subr.mxu0 0.0
    %1100 = vmatpush1.msra.mxu0 0.0
    %1101 = vmatprep.subr.mxu0 0.0
    %1102 = vmatpush1.msra.mxu0 0.0
    %1103 = vmatprep.subr.mxu0 0.0
    %1104 = vmatpush1.msra.mxu0 0.0
    %1105 = vmatprep.subr.mxu0 0.0
    %1106 = vmatpush1.msra.mxu0 0.0
    %1107 = vmatprep.subr.mxu0 0.0
    %1108 = vmatpush1.msra.mxu0 0.0
    %1109 = vmatprep.subr.mxu0 0.0
    %1110 = vmatpush1.msra.mxu0 0.0
    %1111 = vmatprep.subr.mxu0 0.0
    %1112 = vmatpush1.msra.mxu0 0.0
    %1113 = vmatprep.subr.mxu0 0.0
    %1114 = vmatpush1.msra.mxu0 0.0
    %1115 = vmatprep.subr.mxu0 0.0
    %1116 = vmatpush1.msra.mxu0 0.0
    %1117 = vmatprep.subr.mxu0 0.0
    %1118 = vmatpush1.msra.mxu0 0.0
    %1119 = vmatprep.subr.mxu0 0.0
    %1120 = vmatpush1.msra.mxu0 0.0
    %1121 = vmatprep.subr.mxu0 0.0
    %1122 = vmatpush1.msra.mxu0 0.0
    %1123 = vmatprep.subr.mxu0 0.0
    %1124 = vmatpush1.msra.mxu0 0.0
    %1125 = vmatprep.subr.mxu0 0.0
    %1126 = vmatpush1.msra.mxu0 0.0
    %1127 = vmatprep.subr.mxu0 0.0
    %1128 = vmatpush1.msra.mxu0 0.0
    %1129 = vmatprep.mubr.f32.mxu0 0.0
    %1130 = vmatmul.mubr.f32.gmra.mrb[0].mxu0 %v1063
    %v1131 = vpop.f32.mrb[0].mxu0
    %v1132 = vadd.f32 0.0, %v1131
    %v1133 = vpop.f32.mrb[0].mxu0
    %1134 = vdwg.mxu0
    %1135 = vrot.lane.b32.xlu0 %v182, 40
    %v1136 = vpop.permute.xlu0 %1135
    %v1139 = vsel %vm191, %v902, 0
    %1141 = vmatprep.subr.mxu0 0.0
    %1142 = vmatpush1.msra.mxu0 %v1136
    %1143 = vmatprep.subr.mxu0 0.0
    %1144 = vmatpush1.msra.mxu0 0.0
    %1145 = vmatprep.subr.mxu0 0.0
    %1146 = vmatpush1.msra.mxu0 0.0
    %1147 = vmatprep.subr.mxu0 0.0
    %1148 = vmatpush1.msra.mxu0 0.0
    %1149 = vmatprep.subr.mxu0 0.0
    %1150 = vmatpush1.msra.mxu0 0.0
    %1151 = vmatprep.subr.mxu0 0.0
    %1152 = vmatpush1.msra.mxu0 0.0
    %1153 = vmatprep.subr.mxu0 0.0
    %1154 = vmatpush1.msra.mxu0 0.0
    %1155 = vmatprep.subr.mxu0 0.0
    %1156 = vmatpush1.msra.mxu0 0.0
    %1157 = vmatprep.subr.mxu0 0.0
    %1158 = vmatpush1.msra.mxu0 0.0
    %1159 = vmatprep.subr.mxu0 0.0
    %1160 = vmatpush1.msra.mxu0 0.0
    %1161 = vmatprep.subr.mxu0 0.0
    %1162 = vmatpush1.msra.mxu0 0.0
    %1163 = vmatprep.subr.mxu0 0.0
    %1164 = vmatpush1.msra.mxu0 0.0
    %1165 = vmatprep.subr.mxu0 0.0
    %1166 = vmatpush1.msra.mxu0 0.0
    %1167 = vmatprep.subr.mxu0 0.0
    %1168 = vmatpush1.msra.mxu0 0.0
    %1169 = vmatprep.subr.mxu0 0.0
    %1170 = vmatpush1.msra.mxu0 0.0
    %1171 = vmatprep.subr.mxu0 0.0
    %1172 = vmatpush1.msra.mxu0 0.0
    %1173 = vmatprep.subr.mxu0 0.0
    %1174 = vmatpush1.msra.mxu0 0.0
    %1175 = vmatprep.subr.mxu0 0.0
    %1176 = vmatpush1.msra.mxu0 0.0
    %1177 = vmatprep.subr.mxu0 0.0
    %1178 = vmatpush1.msra.mxu0 0.0
    %1179 = vmatprep.subr.mxu0 0.0
    %1180 = vmatpush1.msra.mxu0 0.0
    %1181 = vmatprep.subr.mxu0 0.0
    %1182 = vmatpush1.msra.mxu0 0.0
    %1183 = vmatprep.subr.mxu0 0.0
    %1184 = vmatpush1.msra.mxu0 0.0
    %1185 = vmatprep.subr.mxu0 0.0
    %1186 = vmatpush1.msra.mxu0 0.0
    %1187 = vmatprep.subr.mxu0 0.0
    %1188 = vmatpush1.msra.mxu0 0.0
    %1189 = vmatprep.subr.mxu0 0.0
    %1190 = vmatpush1.msra.mxu0 0.0
    %1191 = vmatprep.subr.mxu0 0.0
    %1192 = vmatpush1.msra.mxu0 0.0
    %1193 = vmatprep.subr.mxu0 0.0
    %1194 = vmatpush1.msra.mxu0 0.0
    %1195 = vmatprep.subr.mxu0 0.0
    %1196 = vmatpush1.msra.mxu0 0.0
    %1197 = vmatprep.subr.mxu0 0.0
    %1198 = vmatpush1.msra.mxu0 0.0
    %1199 = vmatprep.subr.mxu0 0.0
    %1200 = vmatpush1.msra.mxu0 0.0
    %1201 = vmatprep.subr.mxu0 0.0
    %1202 = vmatpush1.msra.mxu0 0.0
    %1203 = vmatprep.subr.mxu0 0.0
    %1204 = vmatpush1.msra.mxu0 0.0
    %1205 = vmatprep.mubr.f32.mxu0 0.0
    %1206 = vmatmul.mubr.f32.gmra.mrb[0].mxu0 %v1139
    %v1207 = vpop.f32.mrb[0].mxu0
    %v1208 = vadd.f32 0.0, %v1207
    %v1209 = vpop.f32.mrb[0].mxu0
    %1210 = vdwg.mxu0
    %1212 = vrot.lane.b32.xlu0 %v1056, 8
    %v1213 = vpop.permute.xlu0 %1212
    %1216 = vrot.lane.b32.xlu0 %v1132, 16
    %v1217 = vpop.permute.xlu0 %1216
    %1220 = vrot.lane.b32.xlu0 %v1208, 24
    %v1221 = vpop.permute.xlu0 %1220
    %v1223 = vsel %vm191, %v980, %v1213
    %vm1224 = vcmask 130048
    %v1225 = vsel %vm1224, %v1223, %v1217
    %vm1226 = vcmask 195584
    %v1227 = vsel %vm1226, %v1225, %v1221
    %1228 = vrot.lane.b32.xlu0 %v185, 64
    %v1229 = vpop.permute.xlu0 %1228
    %v1232 = vsel %vm191, %v903, 0
    %1234 = vmatprep.subr.mxu0 0.0
    %1235 = vmatpush1.msra.mxu0 %v1229
    %1236 = vmatprep.subr.mxu0 0.0
    %1237 = vmatpush1.msra.mxu0 0.0
    %1238 = vmatprep.subr.mxu0 0.0
    %1239 = vmatpush1.msra.mxu0 0.0
    %1240 = vmatprep.subr.mxu0 0.0
    %1241 = vmatpush1.msra.mxu0 0.0
    %1242 = vmatprep.subr.mxu0 0.0
    %1243 = vmatpush1.msra.mxu0 0.0
    %1244 = vmatprep.subr.mxu0 0.0
    %1245 = vmatpush1.msra.mxu0 0.0
    %1246 = vmatprep.subr.mxu0 0.0
    %1247 = vmatpush1.msra.mxu0 0.0
    %1248 = vmatprep.subr.mxu0 0.0
    %1249 = vmatpush1.msra.mxu0 0.0
    %1250 = vmatprep.subr.mxu0 0.0
    %1251 = vmatpush1.msra.mxu0 0.0
    %1252 = vmatprep.subr.mxu0 0.0
    %1253 = vmatpush1.msra.mxu0 0.0
    %1254 = vmatprep.subr.mxu0 0.0
    %1255 = vmatpush1.msra.mxu0 0.0
    %1256 = vmatprep.subr.mxu0 0.0
    %1257 = vmatpush1.msra.mxu0 0.0
    %1258 = vmatprep.subr.mxu0 0.0
    %1259 = vmatpush1.msra.mxu0 0.0
    %1260 = vmatprep.subr.mxu0 0.0
    %1261 = vmatpush1.msra.mxu0 0.0
    %1262 = vmatprep.subr.mxu0 0.0
    %1263 = vmatpush1.msra.mxu0 0.0
    %1264 = vmatprep.subr.mxu0 0.0
    %1265 = vmatpush1.msra.mxu0 0.0
    %1266 = vmatprep.subr.mxu0 0.0
    %1267 = vmatpush1.msra.mxu0 0.0
    %1268 = vmatprep.subr.mxu0 0.0
    %1269 = vmatpush1.msra.mxu0 0.0
    %1270 = vmatprep.subr.mxu0 0.0
    %1271 = vmatpush1.msra.mxu0 0.0
    %1272 = vmatprep.subr.mxu0 0.0
    %1273 = vmatpush1.msra.mxu0 0.0
    %1274 = vmatprep.subr.mxu0 0.0
    %1275 = vmatpush1.msra.mxu0 0.0
    %1276 = vmatprep.subr.mxu0 0.0
    %1277 = vmatpush1.msra.mxu0 0.0
    %1278 = vmatprep.subr.mxu0 0.0
    %1279 = vmatpush1.msra.mxu0 0.0
    %1280 = vmatprep.subr.mxu0 0.0
    %1281 = vmatpush1.msra.mxu0 0.0
    %1282 = vmatprep.subr.mxu0 0.0
    %1283 = vmatpush1.msra.mxu0 0.0
    %1284 = vmatprep.subr.mxu0 0.0
    %1285 = vmatpush1.msra.mxu0 0.0
    %1286 = vmatprep.subr.mxu0 0.0
    %1287 = vmatpush1.msra.mxu0 0.0
    %1288 = vmatprep.subr.mxu0 0.0
    %1289 = vmatpush1.msra.mxu0 0.0
    %1290 = vmatprep.subr.mxu0 0.0
    %1291 = vmatpush1.msra.mxu0 0.0
    %1292 = vmatprep.subr.mxu0 0.0
    %1293 = vmatpush1.msra.mxu0 0.0
    %1294 = vmatprep.subr.mxu0 0.0
    %1295 = vmatpush1.msra.mxu0 0.0
    %1296 = vmatprep.subr.mxu0 0.0
    %1297 = vmatpush1.msra.mxu0 0.0
    %1298 = vmatprep.mubr.f32.mxu0 0.0
    %1299 = vmatmul.mubr.f32.gmra.mrb[0].mxu0 %v1232
    %v1300 = vpop.f32.mrb[0].mxu0
    %v1301 = vadd.f32 0.0, %v1300
    %v1302 = vpop.f32.mrb[0].mxu0
    %1303 = vdwg.mxu0
    %1304 = vrot.lane.b32.xlu0 %v185, 56
    %v1305 = vpop.permute.xlu0 %1304
    %v1308 = vsel %vm191, %v904, 0
    %1310 = vmatprep.subr.mxu0 0.0
    %1311 = vmatpush1.msra.mxu0 %v1305
    %1312 = vmatprep.subr.mxu0 0.0
    %1313 = vmatpush1.msra.mxu0 0.0
    %1314 = vmatprep.subr.mxu0 0.0
    %1315 = vmatpush1.msra.mxu0 0.0
    %1316 = vmatprep.subr.mxu0 0.0
    %1317 = vmatpush1.msra.mxu0 0.0
    %1318 = vmatprep.subr.mxu0 0.0
    %1319 = vmatpush1.msra.mxu0 0.0
    %1320 = vmatprep.subr.mxu0 0.0
    %1321 = vmatpush1.msra.mxu0 0.0
    %1322 = vmatprep.subr.mxu0 0.0
    %1323 = vmatpush1.msra.mxu0 0.0
    %1324 = vmatprep.subr.mxu0 0.0
    %1325 = vmatpush1.msra.mxu0 0.0
    %1326 = vmatprep.subr.mxu0 0.0
    %1327 = vmatpush1.msra.mxu0 0.0
    %1328 = vmatprep.subr.mxu0 0.0
    %1329 = vmatpush1.msra.mxu0 0.0
    %1330 = vmatprep.subr.mxu0 0.0
    %1331 = vmatpush1.msra.mxu0 0.0
    %1332 = vmatprep.subr.mxu0 0.0
    %1333 = vmatpush1.msra.mxu0 0.0
    %1334 = vmatprep.subr.mxu0 0.0
    %1335 = vmatpush1.msra.mxu0 0.0
    %1336 = vmatprep.subr.mxu0 0.0
    %1337 = vmatpush1.msra.mxu0 0.0
    %1338 = vmatprep.subr.mxu0 0.0
    %1339 = vmatpush1.msra.mxu0 0.0
    %1340 = vmatprep.subr.mxu0 0.0
    %1341 = vmatpush1.msra.mxu0 0.0
    %1342 = vmatprep.subr.mxu0 0.0
    %1343 = vmatpush1.msra.mxu0 0.0
    %1344 = vmatprep.subr.mxu0 0.0
    %1345 = vmatpush1.msra.mxu0 0.0
    %1346 = vmatprep.subr.mxu0 0.0
    %1347 = vmatpush1.msra.mxu0 0.0
    %1348 = vmatprep.subr.mxu0 0.0
    %1349 = vmatpush1.msra.mxu0 0.0
    %1350 = vmatprep.subr.mxu0 0.0
    %1351 = vmatpush1.msra.mxu0 0.0
    %1352 = vmatprep.subr.mxu0 0.0
    %1353 = vmatpush1.msra.mxu0 0.0
    %1354 = vmatprep.subr.mxu0 0.0
    %1355 = vmatpush1.msra.mxu0 0.0
    %1356 = vmatprep.subr.mxu0 0.0
    %1357 = vmatpush1.msra.mxu0 0.0
    %1358 = vmatprep.subr.mxu0 0.0
    %1359 = vmatpush1.msra.mxu0 0.0
    %1360 = vmatprep.subr.mxu0 0.0
    %1361 = vmatpush1.msra.mxu0 0.0
    %1362 = vmatprep.subr.mxu0 0.0
    %1363 = vmatpush1.msra.mxu0 0.0
    %1364 = vmatprep.subr.mxu0 0.0
    %1365 = vmatpush1.msra.mxu0 0.0
    %1366 = vmatprep.subr.mxu0 0.0
    %1367 = vmatpush1.msra.mxu0 0.0
    %1368 = vmatprep.subr.mxu0 0.0
    %1369 = vmatpush1.msra.mxu0 0.0
    %1370 = vmatprep.subr.mxu0 0.0
    %1371 = vmatpush1.msra.mxu0 0.0
    %1372 = vmatprep.subr.mxu0 0.0
    %1373 = vmatpush1.msra.mxu0 0.0
    %1374 = vmatprep.mubr.f32.mxu0 0.0
    %1375 = vmatmul.mubr.f32.gmra.mrb[0].mxu0 %v1308
    %v1376 = vpop.f32.mrb[0].mxu0
    %v1377 = vadd.f32 0.0, %v1376
    %v1378 = vpop.f32.mrb[0].mxu0
    %1379 = vdwg.mxu0
    %1380 = vrot.lane.b32.xlu0 %v185, 48
    %v1381 = vpop.permute.xlu0 %1380
    %v1384 = vsel %vm191, %v905, 0
    %1386 = vmatprep.subr.mxu0 0.0
    %1387 = vmatpush1.msra.mxu0 %v1381
    %1388 = vmatprep.subr.mxu0 0.0
    %1389 = vmatpush1.msra.mxu0 0.0
    %1390 = vmatprep.subr.mxu0 0.0
    %1391 = vmatpush1.msra.mxu0 0.0
    %1392 = vmatprep.subr.mxu0 0.0
    %1393 = vmatpush1.msra.mxu0 0.0
    %1394 = vmatprep.subr.mxu0 0.0
    %1395 = vmatpush1.msra.mxu0 0.0
    %1396 = vmatprep.subr.mxu0 0.0
    %1397 = vmatpush1.msra.mxu0 0.0
    %1398 = vmatprep.subr.mxu0 0.0
    %1399 = vmatpush1.msra.mxu0 0.0
    %1400 = vmatprep.subr.mxu0 0.0
    %1401 = vmatpush1.msra.mxu0 0.0
    %1402 = vmatprep.subr.mxu0 0.0
    %1403 = vmatpush1.msra.mxu0 0.0
    %1404 = vmatprep.subr.mxu0 0.0
    %1405 = vmatpush1.msra.mxu0 0.0
    %1406 = vmatprep.subr.mxu0 0.0
    %1407 = vmatpush1.msra.mxu0 0.0
    %1408 = vmatprep.subr.mxu0 0.0
    %1409 = vmatpush1.msra.mxu0 0.0
    %1410 = vmatprep.subr.mxu0 0.0
    %1411 = vmatpush1.msra.mxu0 0.0
    %1412 = vmatprep.subr.mxu0 0.0
    %1413 = vmatpush1.msra.mxu0 0.0
    %1414 = vmatprep.subr.mxu0 0.0
    %1415 = vmatpush1.msra.mxu0 0.0
    %1416 = vmatprep.subr.mxu0 0.0
    %1417 = vmatpush1.msra.mxu0 0.0
    %1418 = vmatprep.subr.mxu0 0.0
    %1419 = vmatpush1.msra.mxu0 0.0
    %1420 = vmatprep.subr.mxu0 0.0
    %1421 = vmatpush1.msra.mxu0 0.0
    %1422 = vmatprep.subr.mxu0 0.0
    %1423 = vmatpush1.msra.mxu0 0.0
    %1424 = vmatprep.subr.mxu0 0.0
    %1425 = vmatpush1.msra.mxu0 0.0
    %1426 = vmatprep.subr.mxu0 0.0
    %1427 = vmatpush1.msra.mxu0 0.0
    %1428 = vmatprep.subr.mxu0 0.0
    %1429 = vmatpush1.msra.mxu0 0.0
    %1430 = vmatprep.subr.mxu0 0.0
    %1431 = vmatpush1.msra.mxu0 0.0
    %1432 = vmatprep.subr.mxu0 0.0
    %1433 = vmatpush1.msra.mxu0 0.0
    %1434 = vmatprep.subr.mxu0 0.0
    %1435 = vmatpush1.msra.mxu0 0.0
    %1436 = vmatprep.subr.mxu0 0.0
    %1437 = vmatpush1.msra.mxu0 0.0
    %1438 = vmatprep.subr.mxu0 0.0
    %1439 = vmatpush1.msra.mxu0 0.0
    %1440 = vmatprep.subr.mxu0 0.0
    %1441 = vmatpush1.msra.mxu0 0.0
    %1442 = vmatprep.subr.mxu0 0.0
    %1443 = vmatpush1.msra.mxu0 0.0
    %1444 = vmatprep.subr.mxu0 0.0
    %1445 = vmatpush1.msra.mxu0 0.0
    %1446 = vmatprep.subr.mxu0 0.0
    %1447 = vmatpush1.msra.mxu0 0.0
    %1448 = vmatprep.subr.mxu0 0.0
    %1449 = vmatpush1.msra.mxu0 0.0
    %1450 = vmatprep.mubr.f32.mxu0 0.0
    %1451 = vmatmul.mubr.f32.gmra.mrb[0].mxu0 %v1384
    %v1452 = vpop.f32.mrb[0].mxu0
    %v1453 = vadd.f32 0.0, %v1452
    %v1454 = vpop.f32.mrb[0].mxu0
    %1455 = vdwg.mxu0
    %1456 = vrot.lane.b32.xlu0 %v185, 40
    %v1457 = vpop.permute.xlu0 %1456
    %v1460 = vsel %vm191, %v906, 0
    %1462 = vmatprep.subr.mxu0 0.0
    %1463 = vmatpush1.msra.mxu0 %v1457
    %1464 = vmatprep.subr.mxu0 0.0
    %1465 = vmatpush1.msra.mxu0 0.0
    %1466 = vmatprep.subr.mxu0 0.0
    %1467 = vmatpush1.msra.mxu0 0.0
    %1468 = vmatprep.subr.mxu0 0.0
    %1469 = vmatpush1.msra.mxu0 0.0
    %1470 = vmatprep.subr.mxu0 0.0
    %1471 = vmatpush1.msra.mxu0 0.0
    %1472 = vmatprep.subr.mxu0 0.0
    %1473 = vmatpush1.msra.mxu0 0.0
    %1474 = vmatprep.subr.mxu0 0.0
    %1475 = vmatpush1.msra.mxu0 0.0
    %1476 = vmatprep.subr.mxu0 0.0
    %1477 = vmatpush1.msra.mxu0 0.0
    %1478 = vmatprep.subr.mxu0 0.0
    %1479 = vmatpush1.msra.mxu0 0.0
    %1480 = vmatprep.subr.mxu0 0.0
    %1481 = vmatpush1.msra.mxu0 0.0
    %1482 = vmatprep.subr.mxu0 0.0
    %1483 = vmatpush1.msra.mxu0 0.0
    %1484 = vmatprep.subr.mxu0 0.0
    %1485 = vmatpush1.msra.mxu0 0.0
    %1486 = vmatprep.subr.mxu0 0.0
    %1487 = vmatpush1.msra.mxu0 0.0
    %1488 = vmatprep.subr.mxu0 0.0
    %1489 = vmatpush1.msra.mxu0 0.0
    %1490 = vmatprep.subr.mxu0 0.0
    %1491 = vmatpush1.msra.mxu0 0.0
    %1492 = vmatprep.subr.mxu0 0.0
    %1493 = vmatpush1.msra.mxu0 0.0
    %1494 = vmatprep.subr.mxu0 0.0
    %1495 = vmatpush1.msra.mxu0 0.0
    %1496 = vmatprep.subr.mxu0 0.0
    %1497 = vmatpush1.msra.mxu0 0.0
    %1498 = vmatprep.subr.mxu0 0.0
    %1499 = vmatpush1.msra.mxu0 0.0
    %1500 = vmatprep.subr.mxu0 0.0
    %1501 = vmatpush1.msra.mxu0 0.0
    %1502 = vmatprep.subr.mxu0 0.0
    %1503 = vmatpush1.msra.mxu0 0.0
    %1504 = vmatprep.subr.mxu0 0.0
    %1505 = vmatpush1.msra.mxu0 0.0
    %1506 = vmatprep.subr.mxu0 0.0
    %1507 = vmatpush1.msra.mxu0 0.0
    %1508 = vmatprep.subr.mxu0 0.0
    %1509 = vmatpush1.msra.mxu0 0.0
    %1510 = vmatprep.subr.mxu0 0.0
    %1511 = vmatpush1.msra.mxu0 0.0
    %1512 = vmatprep.subr.mxu0 0.0
    %1513 = vmatpush1.msra.mxu0 0.0
    %1514 = vmatprep.subr.mxu0 0.0
    %1515 = vmatpush1.msra.mxu0 0.0
    %1516 = vmatprep.subr.mxu0 0.0
    %1517 = vmatpush1.msra.mxu0 0.0
    %1518 = vmatprep.subr.mxu0 0.0
    %1519 = vmatpush1.msra.mxu0 0.0
    %1520 = vmatprep.subr.mxu0 0.0
    %1521 = vmatpush1.msra.mxu0 0.0
    %1522 = vmatprep.subr.mxu0 0.0
    %1523 = vmatpush1.msra.mxu0 0.0
    %1524 = vmatprep.subr.mxu0 0.0
    %1525 = vmatpush1.msra.mxu0 0.0
    %1526 = vmatprep.mubr.f32.mxu0 0.0
    %1527 = vmatmul.mubr.f32.gmra.mrb[0].mxu0 %v1460
    %v1528 = vpop.f32.mrb[0].mxu0
    %v1529 = vadd.f32 0.0, %v1528
    %v1530 = vpop.f32.mrb[0].mxu0
    %1531 = vdwg.mxu0
    %1533 = vrot.lane.b32.xlu0 %v1377, 8
    %v1534 = vpop.permute.xlu0 %1533
    %1537 = vrot.lane.b32.xlu0 %v1453, 16
    %v1538 = vpop.permute.xlu0 %1537
    %1541 = vrot.lane.b32.xlu0 %v1529, 24
    %v1542 = vpop.permute.xlu0 %1541
    %v1544 = vsel %vm191, %v1301, %v1534
    %v1545 = vsel %vm1224, %v1544, %v1538
    %v1546 = vsel %vm1226, %v1545, %v1542
    %v1547 = vpack.c.bf16 %v1546, %v1227
    %v1548 = vld [vmem:[%s4] sm:$0xf]
    %v1549 = vld [vmem:[%s4 + $0x4] sm:$0xf]
    %v1550 = vld [vmem:[%s4 + $0x8] sm:$0xf]
    %v1551 = vld [vmem:[%s4 + $0xc] sm:$0xf]
    %v1552 = vld [vmem:[%s5] sm:$0x1]
    %v1554 = vlaneseq
    %v1555 = vshrl.u32 %v1554, 7
    %v1556 = vsub.s32 0, %v1555
    %v1557 = vrot.slane %v1552, %v1556
    %v1563 = vunpack.c.l.b16 %v1548
    %v1564 = vunpack.c.l.b16 %v1549
    %v1565 = vunpack.c.l.b16 %v1550
    %v1566 = vunpack.c.l.b16 %v1551
    %v1567 = vpack.c.b16 %v1564, %v1563
    %v1568 = vpack.c.b16 %v1566, %v1565
    %v1572 = vsel %vm61, %v1547, 0
    %1574 = vmatprep.subr.bf16.mxu0 0
    %1575 = vmatpush1.bf16.msra.mxu0 %v1567
    %1576 = vmatprep.subr.bf16.mxu0 0
    %1577 = vmatpush1.bf16.msra.mxu0 %v1568
    %1578 = vmatprep.subr.bf16.mxu0 0
    %1579 = vmatpush1.bf16.msra.mxu0 0
    %1580 = vmatprep.subr.bf16.mxu0 0
    %1581 = vmatpush1.bf16.msra.mxu0 0
    %1582 = vmatprep.subr.bf16.mxu0 0
    %1583 = vmatpush1.bf16.msra.mxu0 0
    %1584 = vmatprep.subr.bf16.mxu0 0
    %1585 = vmatpush1.bf16.msra.mxu0 0
    %1586 = vmatprep.subr.bf16.mxu0 0
    %1587 = vmatpush1.bf16.msra.mxu0 0
    %1588 = vmatprep.subr.bf16.mxu0 0
    %1589 = vmatpush1.bf16.msra.mxu0 0
    %1590 = vmatprep.subr.bf16.mxu0 0
    %1591 = vmatpush1.bf16.msra.mxu0 0
    %1592 = vmatprep.subr.bf16.mxu0 0
    %1593 = vmatpush1.bf16.msra.mxu0 0
    %1594 = vmatprep.subr.bf16.mxu0 0
    %1595 = vmatpush1.bf16.msra.mxu0 0
    %1596 = vmatprep.subr.bf16.mxu0 0
    %1597 = vmatpush1.bf16.msra.mxu0 0
    %1598 = vmatprep.subr.bf16.mxu0 0
    %1599 = vmatpush1.bf16.msra.mxu0 0
    %1600 = vmatprep.subr.bf16.mxu0 0
    %1601 = vmatpush1.bf16.msra.mxu0 0
    %1602 = vmatprep.subr.bf16.mxu0 0
    %1603 = vmatpush1.bf16.msra.mxu0 0
    %1604 = vmatprep.subr.bf16.mxu0 0
    %1605 = vmatpush1.bf16.msra.mxu0 0
    %1606 = vmatprep.mubr.bf16.mxu0 0
    %1607 = vmatmul.mubr.bf16.gmra.mrb[0].mxu0 %v1572
    %v1608 = vpop.f32.mrb[0].mxu0
    %v1609 = vadd.f32 %v1557, %v1608
    %v1610 = vpop.f32.mrb[0].mxu0
    %v1611 = vpop.f32.mrb[0].mxu0
    %v1612 = vadd.f32 %v1557, %v1611
    %v1613 = vpop.f32.mrb[0].mxu0
    %1614 = vdwg.mxu0
    %v1615 = vadd.f32 %v49, %v1609
    %v1616 = vadd.f32 %v50, %v1612
    %v1617 = vld [vmem:[%s8] sm:$0x1]
    %v1618 = vld [vmem:[%s9] sm:$0x1]
    %v1619 = vsel %vm61, %v1615, 0.0
    %1620 = vadd.xlane.f32.xlu0 %v1619
    %v1621 = vpop.xlane.xlu0 %1620
    %v1622 = vsel %vm61, %v1616, 0.0
    %1623 = vadd.xlane.f32.xlu0 %v1622
    %v1624 = vpop.xlane.xlu0 %1623
    %v1625 = vmul.f32 %v1621, %v68
    %v1626 = vmul.f32 %v1624, %v68
    %v1627 = vsub.f32 %v1615, %v1625
    %v1628 = vsub.f32 %v1616, %v1626
    %v1629 = vmul.f32 %v1627, %v1627
    %v1630 = vmul.f32 %v1628, %v1628
    %v1631 = vsel %vm61, %v1629, 0.0
    %1632 = vadd.xlane.f32.xlu0 %v1631
    %v1633 = vpop.xlane.xlu0 %1632
    %v1634 = vsel %vm61, %v1630, 0.0
    %1635 = vadd.xlane.f32.xlu0 %v1634
    %v1636 = vpop.xlane.xlu0 %1635
    %v1637 = vmul.f32 %v1633, %v81
    %v1638 = vmul.f32 %v1636, %v81
    %v1640 = vlaneseq
    %v1641 = vshrl.u32 %v1640, 7
    %v1642 = vsub.s32 0, %v1641
    %v1643 = vrot.slane %v1617, %v1642
    %v1645 = vmul.f32 %v1643, %v1627
    %v1646 = vmul.f32 %v1643, %v1628
    %v1647 = vrsqrt.pop %v1637
    %v1648 = vmul.f32 %v1637, %v1647
    %vm1649 = vcmp.eq.f32.partialorder %v1637, inf
    %v1650 = vsel %vm1649, %v1637, %v1648
    %vm1651 = vcmp.eq.f32.partialorder %v1637, 0.0
    %v1652 = vand.u32 %v1637, 2147483648
    %v1653 = vsel %vm1651, %v1652, %v1650
    %v1654 = vrsqrt.pop %v1638
    %v1655 = vmul.f32 %v1638, %v1654
    %vm1656 = vcmp.eq.f32.partialorder %v1638, inf
    %v1657 = vsel %vm1656, %v1638, %v1655
    %vm1658 = vcmp.eq.f32.partialorder %v1638, 0.0
    %v1659 = vand.u32 %v1638, 2147483648
    %v1660 = vsel %vm1658, %v1659, %v1657
    %v1661 = vadd.f32 %v1653, 1e-06
    %v1662 = vadd.f32 %v1660, 1e-06
    %v1663 = vrcp.pop %v1661
    %v1664 = vmul.f32 %v1645, %v1663
    %v1665 = vrcp.pop %v1662
    %v1666 = vmul.f32 %v1646, %v1665
    %v1668 = vlaneseq
    %v1669 = vshrl.u32 %v1668, 7
    %v1670 = vsub.s32 0, %v1669
    %v1671 = vrot.slane %v1618, %v1670
    %v1673 = vadd.f32 %v1664, %v1671
    %v1674 = vadd.f32 %v1666, %v1671
    %v1675 = vpack.c.bf16 %v1674, %v1673
    %v1676 = vld [vmem:[%s10] sm:$0xff]
    %v1677 = vld [vmem:[%s10 + $0x8] sm:$0xff]
    %v1678 = vld [vmem:[%s10 + $0x10] sm:$0xff]
    %v1679 = vld [vmem:[%s10 + $0x18] sm:$0xff]
    %v1680 = vld [vmem:[%s10 + $0x20] sm:$0xff]
    %v1681 = vld [vmem:[%s10 + $0x28] sm:$0xff]
    %v1682 = vld [vmem:[%s10 + $0x30] sm:$0xff]
    %v1683 = vld [vmem:[%s10 + $0x38] sm:$0xff]
    %v1684 = vld [vmem:[%s10 + $0x40] sm:$0xff]
    %v1685 = vld [vmem:[%s10 + $0x48] sm:$0xff]
    %v1686 = vld [vmem:[%s10 + $0x50] sm:$0xff]
    %v1687 = vld [vmem:[%s10 + $0x58] sm:$0xff]
    %v1688 = vld [vmem:[%s10 + $0x60] sm:$0xff]
    %v1689 = vld [vmem:[%s10 + $0x68] sm:$0xff]
    %v1690 = vld [vmem:[%s10 + $0x70] sm:$0xff]
    %v1691 = vld [vmem:[%s10 + $0x78] sm:$0xff]
    %v1692 = vld [vmem:[%s10 + $0x80] sm:$0xff]
    %v1693 = vld [vmem:[%s10 + $0x88] sm:$0xff]
    %v1694 = vld [vmem:[%s10 + $0x90] sm:$0xff]
    %v1695 = vld [vmem:[%s10 + $0x98] sm:$0xff]
    %v1696 = vld [vmem:[%s10 + $0xa0] sm:$0xff]
    %v1697 = vld [vmem:[%s10 + $0xa8] sm:$0xff]
    %v1698 = vld [vmem:[%s10 + $0xb0] sm:$0xff]
    %v1699 = vld [vmem:[%s10 + $0xb8] sm:$0xff]
    %v1700 = vld [vmem:[%s10 + $0xc0] sm:$0xff]
    %v1701 = vld [vmem:[%s10 + $0xc8] sm:$0xff]
    %v1702 = vld [vmem:[%s10 + $0xd0] sm:$0xff]
    %v1703 = vld [vmem:[%s10 + $0xd8] sm:$0xff]
    %v1704 = vld [vmem:[%s10 + $0xe0] sm:$0xff]
    %v1705 = vld [vmem:[%s10 + $0xe8] sm:$0xff]
    %v1706 = vld [vmem:[%s10 + $0xf0] sm:$0xff]
    %v1707 = vld [vmem:[%s10 + $0xf8] sm:$0xff]
    %v1708 = vld [vmem:[%s11] sm:$0xff]
    %v1709 = vld [vmem:[%s11 + $0x8] sm:$0xff]
    %v1712 = vlaneseq
    %v1713 = vshrl.u32 %v1712, 7
    %v1714 = vsub.s32 0, %v1713
    %v1715 = vrot.slane %v1708, %v1714
    %v1716 = vlaneseq
    %v1717 = vshrl.u32 %v1716, 7
    %v1718 = vsub.s32 1, %v1717
    %v1719 = vrot.slane %v1708, %v1718
    %v1720 = vlaneseq
    %v1721 = vshrl.u32 %v1720, 7
    %v1722 = vsub.s32 2, %v1721
    %v1723 = vrot.slane %v1708, %v1722
    %v1724 = vlaneseq
    %v1725 = vshrl.u32 %v1724, 7
    %v1726 = vsub.s32 3, %v1725
    %v1727 = vrot.slane %v1708, %v1726
    %v1728 = vlaneseq
    %v1729 = vshrl.u32 %v1728, 7
    %v1730 = vsub.s32 4, %v1729
    %v1731 = vrot.slane %v1708, %v1730
    %v1732 = vlaneseq
    %v1733 = vshrl.u32 %v1732, 7
    %v1734 = vsub.s32 5, %v1733
    %v1735 = vrot.slane %v1708, %v1734
    %v1736 = vlaneseq
    %v1737 = vshrl.u32 %v1736, 7
    %v1738 = vsub.s32 6, %v1737
    %v1739 = vrot.slane %v1708, %v1738
    %v1740 = vlaneseq
    %v1741 = vshrl.u32 %v1740, 7
    %v1742 = vsub.s32 7, %v1741
    %v1743 = vrot.slane %v1708, %v1742
    %v1744 = vlaneseq
    %v1745 = vshrl.u32 %v1744, 7
    %v1746 = vsub.s32 0, %v1745
    %v1747 = vrot.slane %v1709, %v1746
    %v1748 = vlaneseq
    %v1749 = vshrl.u32 %v1748, 7
    %v1750 = vsub.s32 1, %v1749
    %v1751 = vrot.slane %v1709, %v1750
    %v1752 = vlaneseq
    %v1753 = vshrl.u32 %v1752, 7
    %v1754 = vsub.s32 2, %v1753
    %v1755 = vrot.slane %v1709, %v1754
    %v1756 = vlaneseq
    %v1757 = vshrl.u32 %v1756, 7
    %v1758 = vsub.s32 3, %v1757
    %v1759 = vrot.slane %v1709, %v1758
    %v1760 = vlaneseq
    %v1761 = vshrl.u32 %v1760, 7
    %v1762 = vsub.s32 4, %v1761
    %v1763 = vrot.slane %v1709, %v1762
    %v1764 = vlaneseq
    %v1765 = vshrl.u32 %v1764, 7
    %v1766 = vsub.s32 5, %v1765
    %v1767 = vrot.slane %v1709, %v1766
    %v1768 = vlaneseq
    %v1769 = vshrl.u32 %v1768, 7
    %v1770 = vsub.s32 6, %v1769
    %v1771 = vrot.slane %v1709, %v1770
    %v1772 = vlaneseq
    %v1773 = vshrl.u32 %v1772, 7
    %v1774 = vsub.s32 7, %v1773
    %v1775 = vrot.slane %v1709, %v1774
    %v1824 = vunpack.c.l.b16 %v1676
    %v1825 = vunpack.c.h.b16 %v1676
    %v1826 = vunpack.c.l.b16 %v1677
    %v1827 = vunpack.c.h.b16 %v1677
    %v1828 = vunpack.c.l.b16 %v1678
    %v1829 = vunpack.c.h.b16 %v1678
    %v1830 = vunpack.c.l.b16 %v1679
    %v1831 = vunpack.c.h.b16 %v1679
    %v1832 = vunpack.c.l.b16 %v1680
    %v1833 = vunpack.c.h.b16 %v1680
    %v1834 = vunpack.c.l.b16 %v1681
    %v1835 = vunpack.c.h.b16 %v1681
    %v1836 = vunpack.c.l.b16 %v1682
    %v1837 = vunpack.c.h.b16 %v1682
    %v1838 = vunpack.c.l.b16 %v1683
    %v1839 = vunpack.c.h.b16 %v1683
    %v1840 = vunpack.c.l.b16 %v1684
    %v1841 = vunpack.c.h.b16 %v1684
    %v1842 = vunpack.c.l.b16 %v1685
    %v1843 = vunpack.c.h.b16 %v1685
    %v1844 = vunpack.c.l.b16 %v1686
    %v1845 = vunpack.c.h.b16 %v1686
    %v1846 = vunpack.c.l.b16 %v1687
    %v1847 = vunpack.c.h.b16 %v1687
    %v1848 = vunpack.c.l.b16 %v1688
    %v1849 = vunpack.c.h.b16 %v1688
    %v1850 = vunpack.c.l.b16 %v1689
    %v1851 = vunpack.c.h.b16 %v1689
    %v1852 = vunpack.c.l.b16 %v1690
    %v1853 = vunpack.c.h.b16 %v1690
    %v1854 = vunpack.c.l.b16 %v1691
    %v1855 = vunpack.c.h.b16 %v1691
    %v1856 = vunpack.c.l.b16 %v1692
    %v1857 = vunpack.c.h.b16 %v1692
    %v1858 = vunpack.c.l.b16 %v1693
    %v1859 = vunpack.c.h.b16 %v1693
    %v1860 = vunpack.c.l.b16 %v1694
    %v1861 = vunpack.c.h.b16 %v1694
    %v1862 = vunpack.c.l.b16 %v1695
    %v1863 = vunpack.c.h.b16 %v1695
    %v1864 = vunpack.c.l.b16 %v1696
    %v1865 = vunpack.c.h.b16 %v1696
    %v1866 = vunpack.c.l.b16 %v1697
    %v1867 = vunpack.c.h.b16 %v1697
    %v1868 = vunpack.c.l.b16 %v1698
    %v1869 = vunpack.c.h.b16 %v1698
    %v1870 = vunpack.c.l.b16 %v1699
    %v1871 = vunpack.c.h.b16 %v1699
    %v1872 = vunpack.c.l.b16 %v1700
    %v1873 = vunpack.c.h.b16 %v1700
    %v1874 = vunpack.c.l.b16 %v1701
    %v1875 = vunpack.c.h.b16 %v1701
    %v1876 = vunpack.c.l.b16 %v1702
    %v1877 = vunpack.c.h.b16 %v1702
    %v1878 = vunpack.c.l.b16 %v1703
    %v1879 = vunpack.c.h.b16 %v1703
    %v1880 = vunpack.c.l.b16 %v1704
    %v1881 = vunpack.c.h.b16 %v1704
    %v1882 = vunpack.c.l.b16 %v1705
    %v1883 = vunpack.c.h.b16 %v1705
    %v1884 = vunpack.c.l.b16 %v1706
    %v1885 = vunpack.c.h.b16 %v1706
    %v1886 = vunpack.c.l.b16 %v1707
    %v1887 = vunpack.c.h.b16 %v1707
    %v1888 = vpack.c.b16 %v1840, %v1824
    %v1889 = vpack.c.b16 %v1841, %v1825
    %v1890 = vpack.c.b16 %v1842, %v1826
    %v1891 = vpack.c.b16 %v1843, %v1827
    %v1892 = vpack.c.b16 %v1844, %v1828
    %v1893 = vpack.c.b16 %v1845, %v1829
    %v1894 = vpack.c.b16 %v1846, %v1830
    %v1895 = vpack.c.b16 %v1847, %v1831
    %v1896 = vpack.c.b16 %v1848, %v1832
    %v1897 = vpack.c.b16 %v1849, %v1833
    %v1898 = vpack.c.b16 %v1850, %v1834
    %v1899 = vpack.c.b16 %v1851, %v1835
    %v1900 = vpack.c.b16 %v1852, %v1836
    %v1901 = vpack.c.b16 %v1853, %v1837
    %v1902 = vpack.c.b16 %v1854, %v1838
    %v1903 = vpack.c.b16 %v1855, %v1839
    %v1904 = vpack.c.b16 %v1872, %v1856
    %v1905 = vpack.c.b16 %v1873, %v1857
    %v1906 = vpack.c.b16 %v1874, %v1858
    %v1907 = vpack.c.b16 %v1875, %v1859
    %v1908 = vpack.c.b16 %v1876, %v1860
    %v1909 = vpack.c.b16 %v1877, %v1861
    %v1910 = vpack.c.b16 %v1878, %v1862
    %v1911 = vpack.c.b16 %v1879, %v1863
    %v1912 = vpack.c.b16 %v1880, %v1864
    %v1913 = vpack.c.b16 %v1881, %v1865
    %v1914 = vpack.c.b16 %v1882, %v1866
    %v1915 = vpack.c.b16 %v1883, %v1867
    %v1916 = vpack.c.b16 %v1884, %v1868
    %v1917 = vpack.c.b16 %v1885, %v1869
    %v1918 = vpack.c.b16 %v1886, %v1870
    %v1919 = vpack.c.b16 %v1887, %v1871
    %v1953 = vsel %vm61, %v1675, 0
    %1955 = vmatprep.subr.bf16.mxu0 %v1889
    %1956 = vmatpush1.bf16.msra.mxu0 %v1888
    %1957 = vmatprep.subr.bf16.mxu0 %v1905
    %1958 = vmatpush1.bf16.msra.mxu0 %v1904
    %1959 = vmatprep.subr.bf16.mxu0 0
    %1960 = vmatpush1.bf16.msra.mxu0 0
    %1961 = vmatprep.subr.bf16.mxu0 0
    %1962 = vmatpush1.bf16.msra.mxu0 0
    %1963 = vmatprep.subr.bf16.mxu0 0
    %1964 = vmatpush1.bf16.msra.mxu0 0
    %1965 = vmatprep.subr.bf16.mxu0 0
    %1966 = vmatpush1.bf16.msra.mxu0 0
    %1967 = vmatprep.subr.bf16.mxu0 0
    %1968 = vmatpush1.bf16.msra.mxu0 0
    %1969 = vmatprep.subr.bf16.mxu0 0
    %1970 = vmatpush1.bf16.msra.mxu0 0
    %1971 = vmatprep.subr.bf16.mxu0 0
    %1972 = vmatpush1.bf16.msra.mxu0 0
    %1973 = vmatprep.subr.bf16.mxu0 0
    %1974 = vmatpush1.bf16.msra.mxu0 0
    %1975 = vmatprep.subr.bf16.mxu0 0
    %1976 = vmatpush1.bf16.msra.mxu0 0
    %1977 = vmatprep.subr.bf16.mxu0 0
    %1978 = vmatpush1.bf16.msra.mxu0 0
    %1979 = vmatprep.subr.bf16.mxu0 0
    %1980 = vmatpush1.bf16.msra.mxu0 0
    %1981 = vmatprep.subr.bf16.mxu0 0
    %1982 = vmatpush1.bf16.msra.mxu0 0
    %1983 = vmatprep.subr.bf16.mxu0 0
    %1984 = vmatpush1.bf16.msra.mxu0 0
    %1985 = vmatprep.subr.bf16.mxu0 0
    %1986 = vmatpush1.bf16.msra.mxu0 0
    %1987 = vmatprep.mubr.bf16.mxu0 0
    %1988 = vmatmul.mubr.bf16.gmra.mrb[0].mxu0 %v1953
    %v1989 = vpop.f32.mrb[0].mxu0
    %v1990 = vadd.f32 %v1715, %v1989
    %v1991 = vpop.f32.mrb[0].mxu0
    %v1992 = vadd.f32 %v1719, %v1991
    %v1993 = vpop.f32.mrb[0].mxu0
    %v1994 = vadd.f32 %v1715, %v1993
    %v1995 = vpop.f32.mrb[0].mxu0
    %v1996 = vadd.f32 %v1719, %v1995
    %1997 = vdwg.mxu0
    %1998 = vmatprep.subr.bf16.mxu0 %v1891
    %1999 = vmatpush1.bf16.msra.mxu0 %v1890
    %2000 = vmatprep.subr.bf16.mxu0 %v1907
    %2001 = vmatpush1.bf16.msra.mxu0 %v1906
    %2002 = vmatprep.subr.bf16.mxu0 0
    %2003 = vmatpush1.bf16.msra.mxu0 0
    %2004 = vmatprep.subr.bf16.mxu0 0
    %2005 = vmatpush1.bf16.msra.mxu0 0
    %2006 = vmatprep.subr.bf16.mxu0 0
    %2007 = vmatpush1.bf16.msra.mxu0 0
    %2008 = vmatprep.subr.bf16.mxu0 0
    %2009 = vmatpush1.bf16.msra.mxu0 0
    %2010 = vmatprep.subr.bf16.mxu0 0
    %2011 = vmatpush1.bf16.msra.mxu0 0
    %2012 = vmatprep.subr.bf16.mxu0 0
    %2013 = vmatpush1.bf16.msra.mxu0 0
    %2014 = vmatprep.subr.bf16.mxu0 0
    %2015 = vmatpush1.bf16.msra.mxu0 0
    %2016 = vmatprep.subr.bf16.mxu0 0
    %2017 = vmatpush1.bf16.msra.mxu0 0
    %2018 = vmatprep.subr.bf16.mxu0 0
    %2019 = vmatpush1.bf16.msra.mxu0 0
    %2020 = vmatprep.subr.bf16.mxu0 0
    %2021 = vmatpush1.bf16.msra.mxu0 0
    %2022 = vmatprep.subr.bf16.mxu0 0
    %2023 = vmatpush1.bf16.msra.mxu0 0
    %2024 = vmatprep.subr.bf16.mxu0 0
    %2025 = vmatpush1.bf16.msra.mxu0 0
    %2026 = vmatprep.subr.bf16.mxu0 0
    %2027 = vmatpush1.bf16.msra.mxu0 0
    %2028 = vmatprep.subr.bf16.mxu0 0
    %2029 = vmatpush1.bf16.msra.mxu0 0
    %2030 = vmatprep.mubr.bf16.mxu0 0
    %2031 = vmatmul.mubr.bf16.gmra.mrb[0].mxu0 %v1953
    %v2032 = vpop.f32.mrb[0].mxu0
    %v2033 = vadd.f32 %v1723, %v2032
    %v2034 = vpop.f32.mrb[0].mxu0
    %v2035 = vadd.f32 %v1727, %v2034
    %v2036 = vpop.f32.mrb[0].mxu0
    %v2037 = vadd.f32 %v1723, %v2036
    %v2038 = vpop.f32.mrb[0].mxu0
    %v2039 = vadd.f32 %v1727, %v2038
    %2040 = vdwg.mxu0
    %2041 = vmatprep.subr.bf16.mxu0 %v1893
    %2042 = vmatpush1.bf16.msra.mxu0 %v1892
    %2043 = vmatprep.subr.bf16.mxu0 %v1909
    %2044 = vmatpush1.bf16.msra.mxu0 %v1908
    %2045 = vmatprep.subr.bf16.mxu0 0
    %2046 = vmatpush1.bf16.msra.mxu0 0
    %2047 = vmatprep.subr.bf16.mxu0 0
    %2048 = vmatpush1.bf16.msra.mxu0 0
    %2049 = vmatprep.subr.bf16.mxu0 0
    %2050 = vmatpush1.bf16.msra.mxu0 0
    %2051 = vmatprep.subr.bf16.mxu0 0
    %2052 = vmatpush1.bf16.msra.mxu0 0
    %2053 = vmatprep.subr.bf16.mxu0 0
    %2054 = vmatpush1.bf16.msra.mxu0 0
    %2055 = vmatprep.subr.bf16.mxu0 0
    %2056 = vmatpush1.bf16.msra.mxu0 0
    %2057 = vmatprep.subr.bf16.mxu0 0
    %2058 = vmatpush1.bf16.msra.mxu0 0
    %2059 = vmatprep.subr.bf16.mxu0 0
    %2060 = vmatpush1.bf16.msra.mxu0 0
    %2061 = vmatprep.subr.bf16.mxu0 0
    %2062 = vmatpush1.bf16.msra.mxu0 0
    %2063 = vmatprep.subr.bf16.mxu0 0
    %2064 = vmatpush1.bf16.msra.mxu0 0
    %2065 = vmatprep.subr.bf16.mxu0 0
    %2066 = vmatpush1.bf16.msra.mxu0 0
    %2067 = vmatprep.subr.bf16.mxu0 0
    %2068 = vmatpush1.bf16.msra.mxu0 0
    %2069 = vmatprep.subr.bf16.mxu0 0
    %2070 = vmatpush1.bf16.msra.mxu0 0
    %2071 = vmatprep.subr.bf16.mxu0 0
    %2072 = vmatpush1.bf16.msra.mxu0 0
    %2073 = vmatprep.mubr.bf16.mxu0 0
    %2074 = vmatmul.mubr.bf16.gmra.mrb[0].mxu0 %v1953
    %v2075 = vpop.f32.mrb[0].mxu0
    %v2076 = vadd.f32 %v1731, %v2075
    %v2077 = vpop.f32.mrb[0].mxu0
    %v2078 = vadd.f32 %v1735, %v2077
    %v2079 = vpop.f32.mrb[0].mxu0
    %v2080 = vadd.f32 %v1731, %v2079
    %v2081 = vpop.f32.mrb[0].mxu0
    %v2082 = vadd.f32 %v1735, %v2081
    %2083 = vdwg.mxu0
    %2084 = vmatprep.subr.bf16.mxu0 %v1895
    %2085 = vmatpush1.bf16.msra.mxu0 %v1894
    %2086 = vmatprep.subr.bf16.mxu0 %v1911
    %2087 = vmatpush1.bf16.msra.mxu0 %v1910
    %2088 = vmatprep.subr.bf16.mxu0 0
    %2089 = vmatpush1.bf16.msra.mxu0 0
    %2090 = vmatprep.subr.bf16.mxu0 0
    %2091 = vmatpush1.bf16.msra.mxu0 0
    %2092 = vmatprep.subr.bf16.mxu0 0
    %2093 = vmatpush1.bf16.msra.mxu0 0
    %2094 = vmatprep.subr.bf16.mxu0 0
    %2095 = vmatpush1.bf16.msra.mxu0 0
    %2096 = vmatprep.subr.bf16.mxu0 0
    %2097 = vmatpush1.bf16.msra.mxu0 0
    %2098 = vmatprep.subr.bf16.mxu0 0
    %2099 = vmatpush1.bf16.msra.mxu0 0
    %2100 = vmatprep.subr.bf16.mxu0 0
    %2101 = vmatpush1.bf16.msra.mxu0 0
    %2102 = vmatprep.subr.bf16.mxu0 0
    %2103 = vmatpush1.bf16.msra.mxu0 0
    %2104 = vmatprep.subr.bf16.mxu0 0
    %2105 = vmatpush1.bf16.msra.mxu0 0
    %2106 = vmatprep.subr.bf16.mxu0 0
    %2107 = vmatpush1.bf16.msra.mxu0 0
    %2108 = vmatprep.subr.bf16.mxu0 0
    %2109 = vmatpush1.bf16.msra.mxu0 0
    %2110 = vmatprep.subr.bf16.mxu0 0
    %2111 = vmatpush1.bf16.msra.mxu0 0
    %2112 = vmatprep.subr.bf16.mxu0 0
    %2113 = vmatpush1.bf16.msra.mxu0 0
    %2114 = vmatprep.subr.bf16.mxu0 0
    %2115 = vmatpush1.bf16.msra.mxu0 0
    %2116 = vmatprep.mubr.bf16.mxu0 0
    %2117 = vmatmul.mubr.bf16.gmra.mrb[0].mxu0 %v1953
    %v2118 = vpop.f32.mrb[0].mxu0
    %v2119 = vadd.f32 %v1739, %v2118
    %v2120 = vpop.f32.mrb[0].mxu0
    %v2121 = vadd.f32 %v1743, %v2120
    %v2122 = vpop.f32.mrb[0].mxu0
    %v2123 = vadd.f32 %v1739, %v2122
    %v2124 = vpop.f32.mrb[0].mxu0
    %v2125 = vadd.f32 %v1743, %v2124
    %2126 = vdwg.mxu0
    %2127 = vmatprep.subr.bf16.mxu0 %v1897
    %2128 = vmatpush1.bf16.msra.mxu0 %v1896
    %2129 = vmatprep.subr.bf16.mxu0 %v1913
    %2130 = vmatpush1.bf16.msra.mxu0 %v1912
    %2131 = vmatprep.subr.bf16.mxu0 0
    %2132 = vmatpush1.bf16.msra.mxu0 0
    %2133 = vmatprep.subr.bf16.mxu0 0
    %2134 = vmatpush1.bf16.msra.mxu0 0
    %2135 = vmatprep.subr.bf16.mxu0 0
    %2136 = vmatpush1.bf16.msra.mxu0 0
    %2137 = vmatprep.subr.bf16.mxu0 0
    %2138 = vmatpush1.bf16.msra.mxu0 0
    %2139 = vmatprep.subr.bf16.mxu0 0
    %2140 = vmatpush1.bf16.msra.mxu0 0
    %2141 = vmatprep.subr.bf16.mxu0 0
    %2142 = vmatpush1.bf16.msra.mxu0 0
    %2143 = vmatprep.subr.bf16.mxu0 0
    %2144 = vmatpush1.bf16.msra.mxu0 0
    %2145 = vmatprep.subr.bf16.mxu0 0
    %2146 = vmatpush1.bf16.msra.mxu0 0
    %2147 = vmatprep.subr.bf16.mxu0 0
    %2148 = vmatpush1.bf16.msra.mxu0 0
    %2149 = vmatprep.subr.bf16.mxu0 0
    %2150 = vmatpush1.bf16.msra.mxu0 0
    %2151 = vmatprep.subr.bf16.mxu0 0
    %2152 = vmatpush1.bf16.msra.mxu0 0
    %2153 = vmatprep.subr.bf16.mxu0 0
    %2154 = vmatpush1.bf16.msra.mxu0 0
    %2155 = vmatprep.subr.bf16.mxu0 0
    %2156 = vmatpush1.bf16.msra.mxu0 0
    %2157 = vmatprep.subr.bf16.mxu0 0
    %2158 = vmatpush1.bf16.msra.mxu0 0
    %2159 = vmatprep.mubr.bf16.mxu0 0
    %2160 = vmatmul.mubr.bf16.gmra.mrb[0].mxu0 %v1953
    %v2161 = vpop.f32.mrb[0].mxu0
    %v2162 = vadd.f32 %v1747, %v2161
    %v2163 = vpop.f32.mrb[0].mxu0
    %v2164 = vadd.f32 %v1751, %v2163
    %v2165 = vpop.f32.mrb[0].mxu0
    %v2166 = vadd.f32 %v1747, %v2165
    %v2167 = vpop.f32.mrb[0].mxu0
    %v2168 = vadd.f32 %v1751, %v2167
    %2169 = vdwg.mxu0
    %2170 = vmatprep.subr.bf16.mxu0 %v1899
    %2171 = vmatpush1.bf16.msra.mxu0 %v1898
    %2172 = vmatprep.subr.bf16.mxu0 %v1915
    %2173 = vmatpush1.bf16.msra.mxu0 %v1914
    %2174 = vmatprep.subr.bf16.mxu0 0
    %2175 = vmatpush1.bf16.msra.mxu0 0
    %2176 = vmatprep.subr.bf16.mxu0 0
    %2177 = vmatpush1.bf16.msra.mxu0 0
    %2178 = vmatprep.subr.bf16.mxu0 0
    %2179 = vmatpush1.bf16.msra.mxu0 0
    %2180 = vmatprep.subr.bf16.mxu0 0
    %2181 = vmatpush1.bf16.msra.mxu0 0
    %2182 = vmatprep.subr.bf16.mxu0 0
    %2183 = vmatpush1.bf16.msra.mxu0 0
    %2184 = vmatprep.subr.bf16.mxu0 0
    %2185 = vmatpush1.bf16.msra.mxu0 0
    %2186 = vmatprep.subr.bf16.mxu0 0
    %2187 = vmatpush1.bf16.msra.mxu0 0
    %2188 = vmatprep.subr.bf16.mxu0 0
    %2189 = vmatpush1.bf16.msra.mxu0 0
    %2190 = vmatprep.subr.bf16.mxu0 0
    %2191 = vmatpush1.bf16.msra.mxu0 0
    %2192 = vmatprep.subr.bf16.mxu0 0
    %2193 = vmatpush1.bf16.msra.mxu0 0
    %2194 = vmatprep.subr.bf16.mxu0 0
    %2195 = vmatpush1.bf16.msra.mxu0 0
    %2196 = vmatprep.subr.bf16.mxu0 0
    %2197 = vmatpush1.bf16.msra.mxu0 0
    %2198 = vmatprep.subr.bf16.mxu0 0
    %2199 = vmatpush1.bf16.msra.mxu0 0
    %2200 = vmatprep.subr.bf16.mxu0 0
    %2201 = vmatpush1.bf16.msra.mxu0 0
    %2202 = vmatprep.mubr.bf16.mxu0 0
    %2203 = vmatmul.mubr.bf16.gmra.mrb[0].mxu0 %v1953
    %v2204 = vpop.f32.mrb[0].mxu0
    %v2205 = vadd.f32 %v1755, %v2204
    %v2206 = vpop.f32.mrb[0].mxu0
    %v2207 = vadd.f32 %v1759, %v2206
    %v2208 = vpop.f32.mrb[0].mxu0
    %v2209 = vadd.f32 %v1755, %v2208
    %v2210 = vpop.f32.mrb[0].mxu0
    %v2211 = vadd.f32 %v1759, %v2210
    %2212 = vdwg.mxu0
    %2213 = vmatprep.subr.bf16.mxu0 %v1901
    %2214 = vmatpush1.bf16.msra.mxu0 %v1900
    %2215 = vmatprep.subr.bf16.mxu0 %v1917
    %2216 = vmatpush1.bf16.msra.mxu0 %v1916
    %2217 = vmatprep.subr.bf16.mxu0 0
    %2218 = vmatpush1.bf16.msra.mxu0 0
    %2219 = vmatprep.subr.bf16.mxu0 0
    %2220 = vmatpush1.bf16.msra.mxu0 0
    %2221 = vmatprep.subr.bf16.mxu0 0
    %2222 = vmatpush1.bf16.msra.mxu0 0
    %2223 = vmatprep.subr.bf16.mxu0 0
    %2224 = vmatpush1.bf16.msra.mxu0 0
    %2225 = vmatprep.subr.bf16.mxu0 0
    %2226 = vmatpush1.bf16.msra.mxu0 0
    %2227 = vmatprep.subr.bf16.mxu0 0
    %2228 = vmatpush1.bf16.msra.mxu0 0
    %2229 = vmatprep.subr.bf16.mxu0 0
    %2230 = vmatpush1.bf16.msra.mxu0 0
    %2231 = vmatprep.subr.bf16.mxu0 0
    %2232 = vmatpush1.bf16.msra.mxu0 0
    %2233 = vmatprep.subr.bf16.mxu0 0
    %2234 = vmatpush1.bf16.msra.mxu0 0
    %2235 = vmatprep.subr.bf16.mxu0 0
    %2236 = vmatpush1.bf16.msra.mxu0 0
    %2237 = vmatprep.subr.bf16.mxu0 0
    %2238 = vmatpush1.bf16.msra.mxu0 0
    %2239 = vmatprep.subr.bf16.mxu0 0
    %2240 = vmatpush1.bf16.msra.mxu0 0
    %2241 = vmatprep.subr.bf16.mxu0 0
    %2242 = vmatpush1.bf16.msra.mxu0 0
    %2243 = vmatprep.subr.bf16.mxu0 0
    %2244 = vmatpush1.bf16.msra.mxu0 0
    %2245 = vmatprep.mubr.bf16.mxu0 0
    %2246 = vmatmul.mubr.bf16.gmra.mrb[0].mxu0 %v1953
    %v2247 = vpop.f32.mrb[0].mxu0
    %v2248 = vadd.f32 %v1763, %v2247
    %v2249 = vpop.f32.mrb[0].mxu0
    %v2250 = vadd.f32 %v1767, %v2249
    %v2251 = vpop.f32.mrb[0].mxu0
    %v2252 = vadd.f32 %v1763, %v2251
    %v2253 = vpop.f32.mrb[0].mxu0
    %v2254 = vadd.f32 %v1767, %v2253
    %2255 = vdwg.mxu0
    %2256 = vmatprep.subr.bf16.mxu0 %v1903
    %2257 = vmatpush1.bf16.msra.mxu0 %v1902
    %2258 = vmatprep.subr.bf16.mxu0 %v1919
    %2259 = vmatpush1.bf16.msra.mxu0 %v1918
    %2260 = vmatprep.subr.bf16.mxu0 0
    %2261 = vmatpush1.bf16.msra.mxu0 0
    %2262 = vmatprep.subr.bf16.mxu0 0
    %2263 = vmatpush1.bf16.msra.mxu0 0
    %2264 = vmatprep.subr.bf16.mxu0 0
    %2265 = vmatpush1.bf16.msra.mxu0 0
    %2266 = vmatprep.subr.bf16.mxu0 0
    %2267 = vmatpush1.bf16.msra.mxu0 0
    %2268 = vmatprep.subr.bf16.mxu0 0
    %2269 = vmatpush1.bf16.msra.mxu0 0
    %2270 = vmatprep.subr.bf16.mxu0 0
    %2271 = vmatpush1.bf16.msra.mxu0 0
    %2272 = vmatprep.subr.bf16.mxu0 0
    %2273 = vmatpush1.bf16.msra.mxu0 0
    %2274 = vmatprep.subr.bf16.mxu0 0
    %2275 = vmatpush1.bf16.msra.mxu0 0
    %2276 = vmatprep.subr.bf16.mxu0 0
    %2277 = vmatpush1.bf16.msra.mxu0 0
    %2278 = vmatprep.subr.bf16.mxu0 0
    %2279 = vmatpush1.bf16.msra.mxu0 0
    %2280 = vmatprep.subr.bf16.mxu0 0
    %2281 = vmatpush1.bf16.msra.mxu0 0
    %2282 = vmatprep.subr.bf16.mxu0 0
    %2283 = vmatpush1.bf16.msra.mxu0 0
    %2284 = vmatprep.subr.bf16.mxu0 0
    %2285 = vmatpush1.bf16.msra.mxu0 0
    %2286 = vmatprep.subr.bf16.mxu0 0
    %2287 = vmatpush1.bf16.msra.mxu0 0
    %2288 = vmatprep.mubr.bf16.mxu0 0
    %2289 = vmatmul.mubr.bf16.gmra.mrb[0].mxu0 %v1953
    %v2290 = vpop.f32.mrb[0].mxu0
    %v2291 = vadd.f32 %v1771, %v2290
    %v2292 = vpop.f32.mrb[0].mxu0
    %v2293 = vadd.f32 %v1775, %v2292
    %v2294 = vpop.f32.mrb[0].mxu0
    %v2295 = vadd.f32 %v1771, %v2294
    %v2296 = vpop.f32.mrb[0].mxu0
    %v2297 = vadd.f32 %v1775, %v2296
    %2298 = vdwg.mxu0
    %v2299 = vmax.f32 %v1990, 0.0
    %v2300 = vmax.f32 %v1992, 0.0
    %v2301 = vmax.f32 %v2033, 0.0
    %v2302 = vmax.f32 %v2035, 0.0
    %v2303 = vmax.f32 %v2076, 0.0
    %v2304 = vmax.f32 %v2078, 0.0
    %v2305 = vmax.f32 %v2119, 0.0
    %v2306 = vmax.f32 %v2121, 0.0
    %v2307 = vmax.f32 %v2162, 0.0
    %v2308 = vmax.f32 %v2164, 0.0
    %v2309 = vmax.f32 %v2205, 0.0
    %v2310 = vmax.f32 %v2207, 0.0
    %v2311 = vmax.f32 %v2248, 0.0
    %v2312 = vmax.f32 %v2250, 0.0
    %v2313 = vmax.f32 %v2291, 0.0
    %v2314 = vmax.f32 %v2293, 0.0
    %v2315 = vmax.f32 %v1994, 0.0
    %v2316 = vmax.f32 %v1996, 0.0
    %v2317 = vmax.f32 %v2037, 0.0
    %v2318 = vmax.f32 %v2039, 0.0
    %v2319 = vmax.f32 %v2080, 0.0
    %v2320 = vmax.f32 %v2082, 0.0
    %v2321 = vmax.f32 %v2123, 0.0
    %v2322 = vmax.f32 %v2125, 0.0
    %v2323 = vmax.f32 %v2166, 0.0
    %v2324 = vmax.f32 %v2168, 0.0
    %v2325 = vmax.f32 %v2209, 0.0
    %v2326 = vmax.f32 %v2211, 0.0
    %v2327 = vmax.f32 %v2252, 0.0
    %v2328 = vmax.f32 %v2254, 0.0
    %v2329 = vmax.f32 %v2295, 0.0
    %v2330 = vmax.f32 %v2297, 0.0
    %v2331 = vpack.c.bf16 %v2315, %v2299
    %v2332 = vpack.c.bf16 %v2316, %v2300
    %v2333 = vpack.c.bf16 %v2317, %v2301
    %v2334 = vpack.c.bf16 %v2318, %v2302
    %v2335 = vpack.c.bf16 %v2319, %v2303
    %v2336 = vpack.c.bf16 %v2320, %v2304
    %v2337 = vpack.c.bf16 %v2321, %v2305
    %v2338 = vpack.c.bf16 %v2322, %v2306
    %v2339 = vpack.c.bf16 %v2323, %v2307
    %v2340 = vpack.c.bf16 %v2324, %v2308
    %v2341 = vpack.c.bf16 %v2325, %v2309
    %v2342 = vpack.c.bf16 %v2326, %v2310
    %v2343 = vpack.c.bf16 %v2327, %v2311
    %v2344 = vpack.c.bf16 %v2328, %v2312
    %v2345 = vpack.c.bf16 %v2329, %v2313
    %v2346 = vpack.c.bf16 %v2330, %v2314
    %v2347 = vld [vmem:[%s12] sm:$0xf]
    %v2348 = vld [vmem:[%s12 + $0x4] sm:$0xf]
    %v2349 = vld [vmem:[%s12 + $0x8] sm:$0xf]
    %v2350 = vld [vmem:[%s12 + $0xc] sm:$0xf]
    %v2351 = vld [vmem:[%s12 + $0x10] sm:$0xf]
    %v2352 = vld [vmem:[%s12 + $0x14] sm:$0xf]
    %v2353 = vld [vmem:[%s12 + $0x18] sm:$0xf]
    %v2354 = vld [vmem:[%s12 + $0x1c] sm:$0xf]
    %v2355 = vld [vmem:[%s12 + $0x20] sm:$0xf]
    %v2356 = vld [vmem:[%s12 + $0x24] sm:$0xf]
    %v2357 = vld [vmem:[%s12 + $0x28] sm:$0xf]
    %v2358 = vld [vmem:[%s12 + $0x2c] sm:$0xf]
    %v2359 = vld [vmem:[%s12 + $0x30] sm:$0xf]
    %v2360 = vld [vmem:[%s12 + $0x34] sm:$0xf]
    %v2361 = vld [vmem:[%s12 + $0x38] sm:$0xf]
    %v2362 = vld [vmem:[%s12 + $0x3c] sm:$0xf]
    %v2363 = vld [vmem:[%s12 + $0x40] sm:$0xf]
    %v2364 = vld [vmem:[%s12 + $0x44] sm:$0xf]
    %v2365 = vld [vmem:[%s12 + $0x48] sm:$0xf]
    %v2366 = vld [vmem:[%s12 + $0x4c] sm:$0xf]
    %v2367 = vld [vmem:[%s12 + $0x50] sm:$0xf]
    %v2368 = vld [vmem:[%s12 + $0x54] sm:$0xf]
    %v2369 = vld [vmem:[%s12 + $0x58] sm:$0xf]
    %v2370 = vld [vmem:[%s12 + $0x5c] sm:$0xf]
    %v2371 = vld [vmem:[%s12 + $0x60] sm:$0xf]
    %v2372 = vld [vmem:[%s12 + $0x64] sm:$0xf]
    %v2373 = vld [vmem:[%s12 + $0x68] sm:$0xf]
    %v2374 = vld [vmem:[%s12 + $0x6c] sm:$0xf]
    %v2375 = vld [vmem:[%s12 + $0x70] sm:$0xf]
    %v2376 = vld [vmem:[%s12 + $0x74] sm:$0xf]
    %v2377 = vld [vmem:[%s12 + $0x78] sm:$0xf]
    %v2378 = vld [vmem:[%s12 + $0x7c] sm:$0xf]
    %v2379 = vld [vmem:[%s12 + $0x80] sm:$0xf]
    %v2380 = vld [vmem:[%s12 + $0x84] sm:$0xf]
    %v2381 = vld [vmem:[%s12 + $0x88] sm:$0xf]
    %v2382 = vld [vmem:[%s12 + $0x8c] sm:$0xf]
    %v2383 = vld [vmem:[%s12 + $0x90] sm:$0xf]
    %v2384 = vld [vmem:[%s12 + $0x94] sm:$0xf]
    %v2385 = vld [vmem:[%s12 + $0x98] sm:$0xf]
    %v2386 = vld [vmem:[%s12 + $0x9c] sm:$0xf]
    %v2387 = vld [vmem:[%s12 + $0xa0] sm:$0xf]
    %v2388 = vld [vmem:[%s12 + $0xa4] sm:$0xf]
    %v2389 = vld [vmem:[%s12 + $0xa8] sm:$0xf]
    %v2390 = vld [vmem:[%s12 + $0xac] sm:$0xf]
    %v2391 = vld [vmem:[%s12 + $0xb0] sm:$0xf]
    %v2392 = vld [vmem:[%s12 + $0xb4] sm:$0xf]
    %v2393 = vld [vmem:[%s12 + $0xb8] sm:$0xf]
    %v2394 = vld [vmem:[%s12 + $0xbc] sm:$0xf]
    %v2395 = vld [vmem:[%s12 + $0xc0] sm:$0xf]
    %v2396 = vld [vmem:[%s12 + $0xc4] sm:$0xf]
    %v2397 = vld [vmem:[%s12 + $0xc8] sm:$0xf]
    %v2398 = vld [vmem:[%s12 + $0xcc] sm:$0xf]
    %v2399 = vld [vmem:[%s12 + $0xd0] sm:$0xf]
    %v2400 = vld [vmem:[%s12 + $0xd4] sm:$0xf]
    %v2401 = vld [vmem:[%s12 + $0xd8] sm:$0xf]
    %v2402 = vld [vmem:[%s12 + $0xdc] sm:$0xf]
    %v2403 = vld [vmem:[%s12 + $0xe0] sm:$0xf]
    %v2404 = vld [vmem:[%s12 + $0xe4] sm:$0xf]
    %v2405 = vld [vmem:[%s12 + $0xe8] sm:$0xf]
    %v2406 = vld [vmem:[%s12 + $0xec] sm:$0xf]
    %v2407 = vld [vmem:[%s12 + $0xf0] sm:$0xf]
    %v2408 = vld [vmem:[%s12 + $0xf4] sm:$0xf]
    %v2409 = vld [vmem:[%s12 + $0xf8] sm:$0xf]
    %v2410 = vld [vmem:[%s12 + $0xfc] sm:$0xf]
    %v2411 = vld [vmem:[%s12 + $0x100] sm:$0xf]
    %v2412 = vld [vmem:[%s12 + $0x104] sm:$0xf]
    %v2413 = vld [vmem:[%s12 + $0x108] sm:$0xf]
    %v2414 = vld [vmem:[%s12 + $0x10c] sm:$0xf]
    %v2415 = vld [vmem:[%s12 + $0x110] sm:$0xf]
    %v2416 = vld [vmem:[%s12 + $0x114] sm:$0xf]
    %v2417 = vld [vmem:[%s12 + $0x118] sm:$0xf]
    %v2418 = vld [vmem:[%s12 + $0x11c] sm:$0xf]
    %v2419 = vld [vmem:[%s12 + $0x120] sm:$0xf]
    %v2420 = vld [vmem:[%s12 + $0x124] sm:$0xf]
    %v2421 = vld [vmem:[%s12 + $0x128] sm:$0xf]
    %v2422 = vld [vmem:[%s12 + $0x12c] sm:$0xf]
    %v2423 = vld [vmem:[%s12 + $0x130] sm:$0xf]
    %v2424 = vld [vmem:[%s12 + $0x134] sm:$0xf]
    %v2425 = vld [vmem:[%s12 + $0x138] sm:$0xf]
    %v2426 = vld [vmem:[%s12 + $0x13c] sm:$0xf]
    %v2427 = vld [vmem:[%s12 + $0x140] sm:$0xf]
    %v2428 = vld [vmem:[%s12 + $0x144] sm:$0xf]
    %v2429 = vld [vmem:[%s12 + $0x148] sm:$0xf]
    %v2430 = vld [vmem:[%s12 + $0x14c] sm:$0xf]
    %v2431 = vld [vmem:[%s12 + $0x150] sm:$0xf]
    %v2432 = vld [vmem:[%s12 + $0x154] sm:$0xf]
    %v2433 = vld [vmem:[%s12 + $0x158] sm:$0xf]
    %v2434 = vld [vmem:[%s12 + $0x15c] sm:$0xf]
    %v2435 = vld [vmem:[%s12 + $0x160] sm:$0xf]
    %v2436 = vld [vmem:[%s12 + $0x164] sm:$0xf]
    %v2437 = vld [vmem:[%s12 + $0x168] sm:$0xf]
    %v2438 = vld [vmem:[%s12 + $0x16c] sm:$0xf]
    %v2439 = vld [vmem:[%s12 + $0x170] sm:$0xf]
    %v2440 = vld [vmem:[%s12 + $0x174] sm:$0xf]
    %v2441 = vld [vmem:[%s12 + $0x178] sm:$0xf]
    %v2442 = vld [vmem:[%s12 + $0x17c] sm:$0xf]
    %v2443 = vld [vmem:[%s12 + $0x180] sm:$0xf]
    %v2444 = vld [vmem:[%s12 + $0x184] sm:$0xf]
    %v2445 = vld [vmem:[%s12 + $0x188] sm:$0xf]
    %v2446 = vld [vmem:[%s12 + $0x18c] sm:$0xf]
    %v2447 = vld [vmem:[%s12 + $0x190] sm:$0xf]
    %v2448 = vld [vmem:[%s12 + $0x194] sm:$0xf]
    %v2449 = vld [vmem:[%s12 + $0x198] sm:$0xf]
    %v2450 = vld [vmem:[%s12 + $0x19c] sm:$0xf]
    %v2451 = vld [vmem:[%s12 + $0x1a0] sm:$0xf]
    %v2452 = vld [vmem:[%s12 + $0x1a4] sm:$0xf]
    %v2453 = vld [vmem:[%s12 + $0x1a8] sm:$0xf]
    %v2454 = vld [vmem:[%s12 + $0x1ac] sm:$0xf]
    %v2455 = vld [vmem:[%s12 + $0x1b0] sm:$0xf]
    %v2456 = vld [vmem:[%s12 + $0x1b4] sm:$0xf]
    %v2457 = vld [vmem:[%s12 + $0x1b8] sm:$0xf]
    %v2458 = vld [vmem:[%s12 + $0x1bc] sm:$0xf]
    %v2459 = vld [vmem:[%s12 + $0x1c0] sm:$0xf]
    %v2460 = vld [vmem:[%s12 + $0x1c4] sm:$0xf]
    %v2461 = vld [vmem:[%s12 + $0x1c8] sm:$0xf]
    %v2462 = vld [vmem:[%s12 + $0x1cc] sm:$0xf]
    %v2463 = vld [vmem:[%s12 + $0x1d0] sm:$0xf]
    %v2464 = vld [vmem:[%s12 + $0x1d4] sm:$0xf]
    %v2465 = vld [vmem:[%s12 + $0x1d8] sm:$0xf]
    %v2466 = vld [vmem:[%s12 + $0x1dc] sm:$0xf]
    %v2467 = vld [vmem:[%s12 + $0x1e0] sm:$0xf]
    %v2468 = vld [vmem:[%s12 + $0x1e4] sm:$0xf]
    %v2469 = vld [vmem:[%s12 + $0x1e8] sm:$0xf]
    %v2470 = vld [vmem:[%s12 + $0x1ec] sm:$0xf]
    %v2471 = vld [vmem:[%s12 + $0x1f0] sm:$0xf]
    %v2472 = vld [vmem:[%s12 + $0x1f4] sm:$0xf]
    %v2473 = vld [vmem:[%s12 + $0x1f8] sm:$0xf]
    %v2474 = vld [vmem:[%s12 + $0x1fc] sm:$0xf]
    %v2475 = vld [vmem:[%s12 + $0x200] sm:$0xf]
    %v2476 = vld [vmem:[%s12 + $0x204] sm:$0xf]
    %v2477 = vld [vmem:[%s12 + $0x208] sm:$0xf]
    %v2478 = vld [vmem:[%s12 + $0x20c] sm:$0xf]
    %v2479 = vld [vmem:[%s12 + $0x210] sm:$0xf]
    %v2480 = vld [vmem:[%s12 + $0x214] sm:$0xf]
    %v2481 = vld [vmem:[%s12 + $0x218] sm:$0xf]
    %v2482 = vld [vmem:[%s12 + $0x21c] sm:$0xf]
    %v2483 = vld [vmem:[%s12 + $0x220] sm:$0xf]
    %v2484 = vld [vmem:[%s12 + $0x224] sm:$0xf]
    %v2485 = vld [vmem:[%s12 + $0x228] sm:$0xf]
    %v2486 = vld [vmem:[%s12 + $0x22c] sm:$0xf]
    %v2487 = vld [vmem:[%s12 + $0x230] sm:$0xf]
    %v2488 = vld [vmem:[%s12 + $0x234] sm:$0xf]
    %v2489 = vld [vmem:[%s12 + $0x238] sm:$0xf]
    %v2490 = vld [vmem:[%s12 + $0x23c] sm:$0xf]
    %v2491 = vld [vmem:[%s12 + $0x240] sm:$0xf]
    %v2492 = vld [vmem:[%s12 + $0x244] sm:$0xf]
    %v2493 = vld [vmem:[%s12 + $0x248] sm:$0xf]
    %v2494 = vld [vmem:[%s12 + $0x24c] sm:$0xf]
    %v2495 = vld [vmem:[%s12 + $0x250] sm:$0xf]
    %v2496 = vld [vmem:[%s12 + $0x254] sm:$0xf]
    %v2497 = vld [vmem:[%s12 + $0x258] sm:$0xf]
    %v2498 = vld [vmem:[%s12 + $0x25c] sm:$0xf]
    %v2499 = vld [vmem:[%s12 + $0x260] sm:$0xf]
    %v2500 = vld [vmem:[%s12 + $0x264] sm:$0xf]
    %v2501 = vld [vmem:[%s12 + $0x268] sm:$0xf]
    %v2502 = vld [vmem:[%s12 + $0x26c] sm:$0xf]
    %v2503 = vld [vmem:[%s12 + $0x270] sm:$0xf]
    %v2504 = vld [vmem:[%s12 + $0x274] sm:$0xf]
    %v2505 = vld [vmem:[%s12 + $0x278] sm:$0xf]
    %v2506 = vld [vmem:[%s12 + $0x27c] sm:$0xf]
    %v2507 = vld [vmem:[%s12 + $0x280] sm:$0xf]
    %v2508 = vld [vmem:[%s12 + $0x284] sm:$0xf]
    %v2509 = vld [vmem:[%s12 + $0x288] sm:$0xf]
    %v2510 = vld [vmem:[%s12 + $0x28c] sm:$0xf]
    %v2511 = vld [vmem:[%s12 + $0x290] sm:$0xf]
    %v2512 = vld [vmem:[%s12 + $0x294] sm:$0xf]
    %v2513 = vld [vmem:[%s12 + $0x298] sm:$0xf]
    %v2514 = vld [vmem:[%s12 + $0x29c] sm:$0xf]
    %v2515 = vld [vmem:[%s12 + $0x2a0] sm:$0xf]
    %v2516 = vld [vmem:[%s12 + $0x2a4] sm:$0xf]
    %v2517 = vld [vmem:[%s12 + $0x2a8] sm:$0xf]
    %v2518 = vld [vmem:[%s12 + $0x2ac] sm:$0xf]
    %v2519 = vld [vmem:[%s12 + $0x2b0] sm:$0xf]
    %v2520 = vld [vmem:[%s12 + $0x2b4] sm:$0xf]
    %v2521 = vld [vmem:[%s12 + $0x2b8] sm:$0xf]
    %v2522 = vld [vmem:[%s12 + $0x2bc] sm:$0xf]
    %v2523 = vld [vmem:[%s12 + $0x2c0] sm:$0xf]
    %v2524 = vld [vmem:[%s12 + $0x2c4] sm:$0xf]
    %v2525 = vld [vmem:[%s12 + $0x2c8] sm:$0xf]
    %v2526 = vld [vmem:[%s12 + $0x2cc] sm:$0xf]
    %v2527 = vld [vmem:[%s12 + $0x2d0] sm:$0xf]
    %v2528 = vld [vmem:[%s12 + $0x2d4] sm:$0xf]
    %v2529 = vld [vmem:[%s12 + $0x2d8] sm:$0xf]
    %v2530 = vld [vmem:[%s12 + $0x2dc] sm:$0xf]
    %v2531 = vld [vmem:[%s12 + $0x2e0] sm:$0xf]
    %v2532 = vld [vmem:[%s12 + $0x2e4] sm:$0xf]
    %v2533 = vld [vmem:[%s12 + $0x2e8] sm:$0xf]
    %v2534 = vld [vmem:[%s12 + $0x2ec] sm:$0xf]
    %v2535 = vld [vmem:[%s12 + $0x2f0] sm:$0xf]
    %v2536 = vld [vmem:[%s12 + $0x2f4] sm:$0xf]
    %v2537 = vld [vmem:[%s12 + $0x2f8] sm:$0xf]
    %v2538 = vld [vmem:[%s12 + $0x2fc] sm:$0xf]
    %v2539 = vld [vmem:[%s12 + $0x300] sm:$0xf]
    %v2540 = vld [vmem:[%s12 + $0x304] sm:$0xf]
    %v2541 = vld [vmem:[%s12 + $0x308] sm:$0xf]
    %v2542 = vld [vmem:[%s12 + $0x30c] sm:$0xf]
    %v2543 = vld [vmem:[%s12 + $0x310] sm:$0xf]
    %v2544 = vld [vmem:[%s12 + $0x314] sm:$0xf]
    %v2545 = vld [vmem:[%s12 + $0x318] sm:$0xf]
    %v2546 = vld [vmem:[%s12 + $0x31c] sm:$0xf]
    %v2547 = vld [vmem:[%s12 + $0x320] sm:$0xf]
    %v2548 = vld [vmem:[%s12 + $0x324] sm:$0xf]
    %v2549 = vld [vmem:[%s12 + $0x328] sm:$0xf]
    %v2550 = vld [vmem:[%s12 + $0x32c] sm:$0xf]
    %v2551 = vld [vmem:[%s12 + $0x330] sm:$0xf]
    %v2552 = vld [vmem:[%s12 + $0x334] sm:$0xf]
    %v2553 = vld [vmem:[%s12 + $0x338] sm:$0xf]
    %v2554 = vld [vmem:[%s12 + $0x33c] sm:$0xf]
    %v2555 = vld [vmem:[%s12 + $0x340] sm:$0xf]
    %v2556 = vld [vmem:[%s12 + $0x344] sm:$0xf]
    %v2557 = vld [vmem:[%s12 + $0x348] sm:$0xf]
    %v2558 = vld [vmem:[%s12 + $0x34c] sm:$0xf]
    %v2559 = vld [vmem:[%s12 + $0x350] sm:$0xf]
    %v2560 = vld [vmem:[%s12 + $0x354] sm:$0xf]
    %v2561 = vld [vmem:[%s12 + $0x358] sm:$0xf]
    %v2562 = vld [vmem:[%s12 + $0x35c] sm:$0xf]
    %v2563 = vld [vmem:[%s12 + $0x360] sm:$0xf]
    %v2564 = vld [vmem:[%s12 + $0x364] sm:$0xf]
    %v2565 = vld [vmem:[%s12 + $0x368] sm:$0xf]
    %v2566 = vld [vmem:[%s12 + $0x36c] sm:$0xf]
    %v2567 = vld [vmem:[%s12 + $0x370] sm:$0xf]
    %v2568 = vld [vmem:[%s12 + $0x374] sm:$0xf]
    %v2569 = vld [vmem:[%s12 + $0x378] sm:$0xf]
    %v2570 = vld [vmem:[%s12 + $0x37c] sm:$0xf]
    %v2571 = vld [vmem:[%s12 + $0x380] sm:$0xf]
    %v2572 = vld [vmem:[%s12 + $0x384] sm:$0xf]
    %v2573 = vld [vmem:[%s12 + $0x388] sm:$0xf]
    %v2574 = vld [vmem:[%s12 + $0x38c] sm:$0xf]
    %v2575 = vld [vmem:[%s12 + $0x390] sm:$0xf]
    %v2576 = vld [vmem:[%s12 + $0x394] sm:$0xf]
    %v2577 = vld [vmem:[%s12 + $0x398] sm:$0xf]
    %v2578 = vld [vmem:[%s12 + $0x39c] sm:$0xf]
    %v2579 = vld [vmem:[%s12 + $0x3a0] sm:$0xf]
    %v2580 = vld [vmem:[%s12 + $0x3a4] sm:$0xf]
    %v2581 = vld [vmem:[%s12 + $0x3a8] sm:$0xf]
    %v2582 = vld [vmem:[%s12 + $0x3ac] sm:$0xf]
    %v2583 = vld [vmem:[%s12 + $0x3b0] sm:$0xf]
    %v2584 = vld [vmem:[%s12 + $0x3b4] sm:$0xf]
    %v2585 = vld [vmem:[%s12 + $0x3b8] sm:$0xf]
    %v2586 = vld [vmem:[%s12 + $0x3bc] sm:$0xf]
    %v2587 = vld [vmem:[%s12 + $0x3c0] sm:$0xf]
    %v2588 = vld [vmem:[%s12 + $0x3c4] sm:$0xf]
    %v2589 = vld [vmem:[%s12 + $0x3c8] sm:$0xf]
    %v2590 = vld [vmem:[%s12 + $0x3cc] sm:$0xf]
    %v2591 = vld [vmem:[%s12 + $0x3d0] sm:$0xf]
    %v2592 = vld [vmem:[%s12 + $0x3d4] sm:$0xf]
    %v2593 = vld [vmem:[%s12 + $0x3d8] sm:$0xf]
    %v2594 = vld [vmem:[%s12 + $0x3dc] sm:$0xf]
    %v2595 = vld [vmem:[%s12 + $0x3e0] sm:$0xf]
    %v2596 = vld [vmem:[%s12 + $0x3e4] sm:$0xf]
    %v2597 = vld [vmem:[%s12 + $0x3e8] sm:$0xf]
    %v2598 = vld [vmem:[%s12 + $0x3ec] sm:$0xf]
    %v2599 = vld [vmem:[%s12 + $0x3f0] sm:$0xf]
    %v2600 = vld [vmem:[%s12 + $0x3f4] sm:$0xf]
    %v2601 = vld [vmem:[%s12 + $0x3f8] sm:$0xf]
    %v2602 = vld [vmem:[%s12 + $0x3fc] sm:$0xf]
    %v2603 = vld [vmem:[%s13] sm:$0x1]
    %v2605 = vlaneseq
    %v2606 = vshrl.u32 %v2605, 7
    %v2607 = vsub.s32 0, %v2606
    %v2608 = vrot.slane %v2603, %v2607
    %v2866 = vunpack.c.l.b16 %v2347
    %v2867 = vunpack.c.l.b16 %v2348
    %v2868 = vunpack.c.l.b16 %v2349
    %v2869 = vunpack.c.l.b16 %v2350
    %v2870 = vunpack.c.l.b16 %v2351
    %v2871 = vunpack.c.l.b16 %v2352
    %v2872 = vunpack.c.l.b16 %v2353
    %v2873 = vunpack.c.l.b16 %v2354
    %v2874 = vunpack.c.l.b16 %v2355
    %v2875 = vunpack.c.l.b16 %v2356
    %v2876 = vunpack.c.l.b16 %v2357
    %v2877 = vunpack.c.l.b16 %v2358
    %v2878 = vunpack.c.l.b16 %v2359
    %v2879 = vunpack.c.l.b16 %v2360
    %v2880 = vunpack.c.l.b16 %v2361
    %v2881 = vunpack.c.l.b16 %v2362
    %v2882 = vunpack.c.l.b16 %v2363
    %v2883 = vunpack.c.l.b16 %v2364
    %v2884 = vunpack.c.l.b16 %v2365
    %v2885 = vunpack.c.l.b16 %v2366
    %v2886 = vunpack.c.l.b16 %v2367
    %v2887 = vunpack.c.l.b16 %v2368
    %v2888 = vunpack.c.l.b16 %v2369
    %v2889 = vunpack.c.l.b16 %v2370
    %v2890 = vunpack.c.l.b16 %v2371
    %v2891 = vunpack.c.l.b16 %v2372
    %v2892 = vunpack.c.l.b16 %v2373
    %v2893 = vunpack.c.l.b16 %v2374
    %v2894 = vunpack.c.l.b16 %v2375
    %v2895 = vunpack.c.l.b16 %v2376
    %v2896 = vunpack.c.l.b16 %v2377
    %v2897 = vunpack.c.l.b16 %v2378
    %v2898 = vunpack.c.l.b16 %v2379
    %v2899 = vunpack.c.l.b16 %v2380
    %v2900 = vunpack.c.l.b16 %v2381
    %v2901 = vunpack.c.l.b16 %v2382
    %v2902 = vunpack.c.l.b16 %v2383
    %v2903 = vunpack.c.l.b16 %v2384
    %v2904 = vunpack.c.l.b16 %v2385
    %v2905 = vunpack.c.l.b16 %v2386
    %v2906 = vunpack.c.l.b16 %v2387
    %v2907 = vunpack.c.l.b16 %v2388
    %v2908 = vunpack.c.l.b16 %v2389
    %v2909 = vunpack.c.l.b16 %v2390
    %v2910 = vunpack.c.l.b16 %v2391
    %v2911 = vunpack.c.l.b16 %v2392
    %v2912 = vunpack.c.l.b16 %v2393
    %v2913 = vunpack.c.l.b16 %v2394
    %v2914 = vunpack.c.l.b16 %v2395
    %v2915 = vunpack.c.l.b16 %v2396
    %v2916 = vunpack.c.l.b16 %v2397
    %v2917 = vunpack.c.l.b16 %v2398
    %v2918 = vunpack.c.l.b16 %v2399
    %v2919 = vunpack.c.l.b16 %v2400
    %v2920 = vunpack.c.l.b16 %v2401
    %v2921 = vunpack.c.l.b16 %v2402
    %v2922 = vunpack.c.l.b16 %v2403
    %v2923 = vunpack.c.l.b16 %v2404
    %v2924 = vunpack.c.l.b16 %v2405
    %v2925 = vunpack.c.l.b16 %v2406
    %v2926 = vunpack.c.l.b16 %v2407
    %v2927 = vunpack.c.l.b16 %v2408
    %v2928 = vunpack.c.l.b16 %v2409
    %v2929 = vunpack.c.l.b16 %v2410
    %v2930 = vunpack.c.l.b16 %v2411
    %v2931 = vunpack.c.l.b16 %v2412
    %v2932 = vunpack.c.l.b16 %v2413
    %v2933 = vunpack.c.l.b16 %v2414
    %v2934 = vunpack.c.l.b16 %v2415
    %v2935 = vunpack.c.l.b16 %v2416
    %v2936 = vunpack.c.l.b16 %v2417
    %v2937 = vunpack.c.l.b16 %v2418
    %v2938 = vunpack.c.l.b16 %v2419
    %v2939 = vunpack.c.l.b16 %v2420
    %v2940 = vunpack.c.l.b16 %v2421
    %v2941 = vunpack.c.l.b16 %v2422
    %v2942 = vunpack.c.l.b16 %v2423
    %v2943 = vunpack.c.l.b16 %v2424
    %v2944 = vunpack.c.l.b16 %v2425
    %v2945 = vunpack.c.l.b16 %v2426
    %v2946 = vunpack.c.l.b16 %v2427
    %v2947 = vunpack.c.l.b16 %v2428
    %v2948 = vunpack.c.l.b16 %v2429
    %v2949 = vunpack.c.l.b16 %v2430
    %v2950 = vunpack.c.l.b16 %v2431
    %v2951 = vunpack.c.l.b16 %v2432
    %v2952 = vunpack.c.l.b16 %v2433
    %v2953 = vunpack.c.l.b16 %v2434
    %v2954 = vunpack.c.l.b16 %v2435
    %v2955 = vunpack.c.l.b16 %v2436
    %v2956 = vunpack.c.l.b16 %v2437
    %v2957 = vunpack.c.l.b16 %v2438
    %v2958 = vunpack.c.l.b16 %v2439
    %v2959 = vunpack.c.l.b16 %v2440
    %v2960 = vunpack.c.l.b16 %v2441
    %v2961 = vunpack.c.l.b16 %v2442
    %v2962 = vunpack.c.l.b16 %v2443
    %v2963 = vunpack.c.l.b16 %v2444
    %v2964 = vunpack.c.l.b16 %v2445
    %v2965 = vunpack.c.l.b16 %v2446
    %v2966 = vunpack.c.l.b16 %v2447
    %v2967 = vunpack.c.l.b16 %v2448
    %v2968 = vunpack.c.l.b16 %v2449
    %v2969 = vunpack.c.l.b16 %v2450
    %v2970 = vunpack.c.l.b16 %v2451
    %v2971 = vunpack.c.l.b16 %v2452
    %v2972 = vunpack.c.l.b16 %v2453
    %v2973 = vunpack.c.l.b16 %v2454
    %v2974 = vunpack.c.l.b16 %v2455
    %v2975 = vunpack.c.l.b16 %v2456
    %v2976 = vunpack.c.l.b16 %v2457
    %v2977 = vunpack.c.l.b16 %v2458
    %v2978 = vunpack.c.l.b16 %v2459
    %v2979 = vunpack.c.l.b16 %v2460
    %v2980 = vunpack.c.l.b16 %v2461
    %v2981 = vunpack.c.l.b16 %v2462
    %v2982 = vunpack.c.l.b16 %v2463
    %v2983 = vunpack.c.l.b16 %v2464
    %v2984 = vunpack.c.l.b16 %v2465
    %v2985 = vunpack.c.l.b16 %v2466
    %v2986 = vunpack.c.l.b16 %v2467
    %v2987 = vunpack.c.l.b16 %v2468
    %v2988 = vunpack.c.l.b16 %v2469
    %v2989 = vunpack.c.l.b16 %v2470
    %v2990 = vunpack.c.l.b16 %v2471
    %v2991 = vunpack.c.l.b16 %v2472
    %v2992 = vunpack.c.l.b16 %v2473
    %v2993 = vunpack.c.l.b16 %v2474
    %v2994 = vunpack.c.l.b16 %v2475
    %v2995 = vunpack.c.l.b16 %v2476
    %v2996 = vunpack.c.l.b16 %v2477
    %v2997 = vunpack.c.l.b16 %v2478
    %v2998 = vunpack.c.l.b16 %v2479
    %v2999 = vunpack.c.l.b16 %v2480
    %v3000 = vunpack.c.l.b16 %v2481
    %v3001 = vunpack.c.l.b16 %v2482
    %v3002 = vunpack.c.l.b16 %v2483
    %v3003 = vunpack.c.l.b16 %v2484
    %v3004 = vunpack.c.l.b16 %v2485
    %v3005 = vunpack.c.l.b16 %v2486
    %v3006 = vunpack.c.l.b16 %v2487
    %v3007 = vunpack.c.l.b16 %v2488
    %v3008 = vunpack.c.l.b16 %v2489
    %v3009 = vunpack.c.l.b16 %v2490
    %v3010 = vunpack.c.l.b16 %v2491
    %v3011 = vunpack.c.l.b16 %v2492
    %v3012 = vunpack.c.l.b16 %v2493
    %v3013 = vunpack.c.l.b16 %v2494
    %v3014 = vunpack.c.l.b16 %v2495
    %v3015 = vunpack.c.l.b16 %v2496
    %v3016 = vunpack.c.l.b16 %v2497
    %v3017 = vunpack.c.l.b16 %v2498
    %v3018 = vunpack.c.l.b16 %v2499
    %v3019 = vunpack.c.l.b16 %v2500
    %v3020 = vunpack.c.l.b16 %v2501
    %v3021 = vunpack.c.l.b16 %v2502
    %v3022 = vunpack.c.l.b16 %v2503
    %v3023 = vunpack.c.l.b16 %v2504
    %v3024 = vunpack.c.l.b16 %v2505
    %v3025 = vunpack.c.l.b16 %v2506
    %v3026 = vunpack.c.l.b16 %v2507
    %v3027 = vunpack.c.l.b16 %v2508
    %v3028 = vunpack.c.l.b16 %v2509
    %v3029 = vunpack.c.l.b16 %v2510
    %v3030 = vunpack.c.l.b16 %v2511
    %v3031 = vunpack.c.l.b16 %v2512
    %v3032 = vunpack.c.l.b16 %v2513
    %v3033 = vunpack.c.l.b16 %v2514
    %v3034 = vunpack.c.l.b16 %v2515
    %v3035 = vunpack.c.l.b16 %v2516
    %v3036 = vunpack.c.l.b16 %v2517
    %v3037 = vunpack.c.l.b16 %v2518
    %v3038 = vunpack.c.l.b16 %v2519
    %v3039 = vunpack.c.l.b16 %v2520
    %v3040 = vunpack.c.l.b16 %v2521
    %v3041 = vunpack.c.l.b16 %v2522
    %v3042 = vunpack.c.l.b16 %v2523
    %v3043 = vunpack.c.l.b16 %v2524
    %v3044 = vunpack.c.l.b16 %v2525
    %v3045 = vunpack.c.l.b16 %v2526
    %v3046 = vunpack.c.l.b16 %v2527
    %v3047 = vunpack.c.l.b16 %v2528
    %v3048 = vunpack.c.l.b16 %v2529
    %v3049 = vunpack.c.l.b16 %v2530
    %v3050 = vunpack.c.l.b16 %v2531
    %v3051 = vunpack.c.l.b16 %v2532
    %v3052 = vunpack.c.l.b16 %v2533
    %v3053 = vunpack.c.l.b16 %v2534
    %v3054 = vunpack.c.l.b16 %v2535
    %v3055 = vunpack.c.l.b16 %v2536
    %v3056 = vunpack.c.l.b16 %v2537
    %v3057 = vunpack.c.l.b16 %v2538
    %v3058 = vunpack.c.l.b16 %v2539
    %v3059 = vunpack.c.l.b16 %v2540
    %v3060 = vunpack.c.l.b16 %v2541
    %v3061 = vunpack.c.l.b16 %v2542
    %v3062 = vunpack.c.l.b16 %v2543
    %v3063 = vunpack.c.l.b16 %v2544
    %v3064 = vunpack.c.l.b16 %v2545
    %v3065 = vunpack.c.l.b16 %v2546
    %v3066 = vunpack.c.l.b16 %v2547
    %v3067 = vunpack.c.l.b16 %v2548
    %v3068 = vunpack.c.l.b16 %v2549
    %v3069 = vunpack.c.l.b16 %v2550
    %v3070 = vunpack.c.l.b16 %v2551
    %v3071 = vunpack.c.l.b16 %v2552
    %v3072 = vunpack.c.l.b16 %v2553
    %v3073 = vunpack.c.l.b16 %v2554
    %v3074 = vunpack.c.l.b16 %v2555
    %v3075 = vunpack.c.l.b16 %v2556
    %v3076 = vunpack.c.l.b16 %v2557
    %v3077 = vunpack.c.l.b16 %v2558
    %v3078 = vunpack.c.l.b16 %v2559
    %v3079 = vunpack.c.l.b16 %v2560
    %v3080 = vunpack.c.l.b16 %v2561
    %v3081 = vunpack.c.l.b16 %v2562
    %v3082 = vunpack.c.l.b16 %v2563
    %v3083 = vunpack.c.l.b16 %v2564
    %v3084 = vunpack.c.l.b16 %v2565
    %v3085 = vunpack.c.l.b16 %v2566
    %v3086 = vunpack.c.l.b16 %v2567
    %v3087 = vunpack.c.l.b16 %v2568
    %v3088 = vunpack.c.l.b16 %v2569
    %v3089 = vunpack.c.l.b16 %v2570
    %v3090 = vunpack.c.l.b16 %v2571
    %v3091 = vunpack.c.l.b16 %v2572
    %v3092 = vunpack.c.l.b16 %v2573
    %v3093 = vunpack.c.l.b16 %v2574
    %v3094 = vunpack.c.l.b16 %v2575
    %v3095 = vunpack.c.l.b16 %v2576
    %v3096 = vunpack.c.l.b16 %v2577
    %v3097 = vunpack.c.l.b16 %v2578
    %v3098 = vunpack.c.l.b16 %v2579
    %v3099 = vunpack.c.l.b16 %v2580
    %v3100 = vunpack.c.l.b16 %v2581
    %v3101 = vunpack.c.l.b16 %v2582
    %v3102 = vunpack.c.l.b16 %v2583
    %v3103 = vunpack.c.l.b16 %v2584
    %v3104 = vunpack.c.l.b16 %v2585
    %v3105 = vunpack.c.l.b16 %v2586
    %v3106 = vunpack.c.l.b16 %v2587
    %v3107 = vunpack.c.l.b16 %v2588
    %v3108 = vunpack.c.l.b16 %v2589
    %v3109 = vunpack.c.l.b16 %v2590
    %v3110 = vunpack.c.l.b16 %v2591
    %v3111 = vunpack.c.l.b16 %v2592
    %v3112 = vunpack.c.l.b16 %v2593
    %v3113 = vunpack.c.l.b16 %v2594
    %v3114 = vunpack.c.l.b16 %v2595
    %v3115 = vunpack.c.l.b16 %v2596
    %v3116 = vunpack.c.l.b16 %v2597
    %v3117 = vunpack.c.l.b16 %v2598
    %v3118 = vunpack.c.l.b16 %v2599
    %v3119 = vunpack.c.l.b16 %v2600
    %v3120 = vunpack.c.l.b16 %v2601
    %v3121 = vunpack.c.l.b16 %v2602
    %v3122 = vpack.c.b16 %v2867, %v2866
    %v3123 = vpack.c.b16 %v2869, %v2868
    %v3124 = vpack.c.b16 %v2871, %v2870
    %v3125 = vpack.c.b16 %v2873, %v2872
    %v3126 = vpack.c.b16 %v2875, %v2874
    %v3127 = vpack.c.b16 %v2877, %v2876
    %v3128 = vpack.c.b16 %v2879, %v2878
    %v3129 = vpack.c.b16 %v2881, %v2880
    %v3130 = vpack.c.b16 %v2883, %v2882
    %v3131 = vpack.c.b16 %v2885, %v2884
    %v3132 = vpack.c.b16 %v2887, %v2886
    %v3133 = vpack.c.b16 %v2889, %v2888
    %v3134 = vpack.c.b16 %v2891, %v2890
    %v3135 = vpack.c.b16 %v2893, %v2892
    %v3136 = vpack.c.b16 %v2895, %v2894
    %v3137 = vpack.c.b16 %v2897, %v2896
    %v3138 = vpack.c.b16 %v2899, %v2898
    %v3139 = vpack.c.b16 %v2901, %v2900
    %v3140 = vpack.c.b16 %v2903, %v2902
    %v3141 = vpack.c.b16 %v2905, %v2904
    %v3142 = vpack.c.b16 %v2907, %v2906
    %v3143 = vpack.c.b16 %v2909, %v2908
    %v3144 = vpack.c.b16 %v2911, %v2910
    %v3145 = vpack.c.b16 %v2913, %v2912
    %v3146 = vpack.c.b16 %v2915, %v2914
    %v3147 = vpack.c.b16 %v2917, %v2916
    %v3148 = vpack.c.b16 %v2919, %v2918
    %v3149 = vpack.c.b16 %v2921, %v2920
    %v3150 = vpack.c.b16 %v2923, %v2922
    %v3151 = vpack.c.b16 %v2925, %v2924
    %v3152 = vpack.c.b16 %v2927, %v2926
    %v3153 = vpack.c.b16 %v2929, %v2928
    %v3154 = vpack.c.b16 %v2931, %v2930
    %v3155 = vpack.c.b16 %v2933, %v2932
    %v3156 = vpack.c.b16 %v2935, %v2934
    %v3157 = vpack.c.b16 %v2937, %v2936
    %v3158 = vpack.c.b16 %v2939, %v2938
    %v3159 = vpack.c.b16 %v2941, %v2940
    %v3160 = vpack.c.b16 %v2943, %v2942
    %v3161 = vpack.c.b16 %v2945, %v2944
    %v3162 = vpack.c.b16 %v2947, %v2946
    %v3163 = vpack.c.b16 %v2949, %v2948
    %v3164 = vpack.c.b16 %v2951, %v2950
    %v3165 = vpack.c.b16 %v2953, %v2952
    %v3166 = vpack.c.b16 %v2955, %v2954
    %v3167 = vpack.c.b16 %v2957, %v2956
    %v3168 = vpack.c.b16 %v2959, %v2958
    %v3169 = vpack.c.b16 %v2961, %v2960
    %v3170 = vpack.c.b16 %v2963, %v2962
    %v3171 = vpack.c.b16 %v2965, %v2964
    %v3172 = vpack.c.b16 %v2967, %v2966
    %v3173 = vpack.c.b16 %v2969, %v2968
    %v3174 = vpack.c.b16 %v2971, %v2970
    %v3175 = vpack.c.b16 %v2973, %v2972
    %v3176 = vpack.c.b16 %v2975, %v2974
    %v3177 = vpack.c.b16 %v2977, %v2976
    %v3178 = vpack.c.b16 %v2979, %v2978
    %v3179 = vpack.c.b16 %v2981, %v2980
    %v3180 = vpack.c.b16 %v2983, %v2982
    %v3181 = vpack.c.b16 %v2985, %v2984
    %v3182 = vpack.c.b16 %v2987, %v2986
    %v3183 = vpack.c.b16 %v2989, %v2988
    %v3184 = vpack.c.b16 %v2991, %v2990
    %v3185 = vpack.c.b16 %v2993, %v2992
    %v3186 = vpack.c.b16 %v2995, %v2994
    %v3187 = vpack.c.b16 %v2997, %v2996
    %v3188 = vpack.c.b16 %v2999, %v2998
    %v3189 = vpack.c.b16 %v3001, %v3000
    %v3190 = vpack.c.b16 %v3003, %v3002
    %v3191 = vpack.c.b16 %v3005, %v3004
    %v3192 = vpack.c.b16 %v3007, %v3006
    %v3193 = vpack.c.b16 %v3009, %v3008
    %v3194 = vpack.c.b16 %v3011, %v3010
    %v3195 = vpack.c.b16 %v3013, %v3012
    %v3196 = vpack.c.b16 %v3015, %v3014
    %v3197 = vpack.c.b16 %v3017, %v3016
    %v3198 = vpack.c.b16 %v3019, %v3018
    %v3199 = vpack.c.b16 %v3021, %v3020
    %v3200 = vpack.c.b16 %v3023, %v3022
    %v3201 = vpack.c.b16 %v3025, %v3024
    %v3202 = vpack.c.b16 %v3027, %v3026
    %v3203 = vpack.c.b16 %v3029, %v3028
    %v3204 = vpack.c.b16 %v3031, %v3030
    %v3205 = vpack.c.b16 %v3033, %v3032
    %v3206 = vpack.c.b16 %v3035, %v3034
    %v3207 = vpack.c.b16 %v3037, %v3036
    %v3208 = vpack.c.b16 %v3039, %v3038
    %v3209 = vpack.c.b16 %v3041, %v3040
    %v3210 = vpack.c.b16 %v3043, %v3042
    %v3211 = vpack.c.b16 %v3045, %v3044
    %v3212 = vpack.c.b16 %v3047, %v3046
    %v3213 = vpack.c.b16 %v3049, %v3048
    %v3214 = vpack.c.b16 %v3051, %v3050
    %v3215 = vpack.c.b16 %v3053, %v3052
    %v3216 = vpack.c.b16 %v3055, %v3054
    %v3217 = vpack.c.b16 %v3057, %v3056
    %v3218 = vpack.c.b16 %v3059, %v3058
    %v3219 = vpack.c.b16 %v3061, %v3060
    %v3220 = vpack.c.b16 %v3063, %v3062
    %v3221 = vpack.c.b16 %v3065, %v3064
    %v3222 = vpack.c.b16 %v3067, %v3066
    %v3223 = vpack.c.b16 %v3069, %v3068
    %v3224 = vpack.c.b16 %v3071, %v3070
    %v3225 = vpack.c.b16 %v3073, %v3072
    %v3226 = vpack.c.b16 %v3075, %v3074
    %v3227 = vpack.c.b16 %v3077, %v3076
    %v3228 = vpack.c.b16 %v3079, %v3078
    %v3229 = vpack.c.b16 %v3081, %v3080
    %v3230 = vpack.c.b16 %v3083, %v3082
    %v3231 = vpack.c.b16 %v3085, %v3084
    %v3232 = vpack.c.b16 %v3087, %v3086
    %v3233 = vpack.c.b16 %v3089, %v3088
    %v3234 = vpack.c.b16 %v3091, %v3090
    %v3235 = vpack.c.b16 %v3093, %v3092
    %v3236 = vpack.c.b16 %v3095, %v3094
    %v3237 = vpack.c.b16 %v3097, %v3096
    %v3238 = vpack.c.b16 %v3099, %v3098
    %v3239 = vpack.c.b16 %v3101, %v3100
    %v3240 = vpack.c.b16 %v3103, %v3102
    %v3241 = vpack.c.b16 %v3105, %v3104
    %v3242 = vpack.c.b16 %v3107, %v3106
    %v3243 = vpack.c.b16 %v3109, %v3108
    %v3244 = vpack.c.b16 %v3111, %v3110
    %v3245 = vpack.c.b16 %v3113, %v3112
    %v3246 = vpack.c.b16 %v3115, %v3114
    %v3247 = vpack.c.b16 %v3117, %v3116
    %v3248 = vpack.c.b16 %v3119, %v3118
    %v3249 = vpack.c.b16 %v3121, %v3120
    %3378 = vmatprep.subr.bf16.mxu0 0
    %3379 = vmatpush1.bf16.msra.mxu0 %v3122
    %3380 = vmatprep.subr.bf16.mxu0 0
    %3381 = vmatpush1.bf16.msra.mxu0 %v3123
    %3382 = vmatprep.subr.bf16.mxu0 0
    %3383 = vmatpush1.bf16.msra.mxu0 %v3124
    %3384 = vmatprep.subr.bf16.mxu0 0
    %3385 = vmatpush1.bf16.msra.mxu0 %v3125
    %3386 = vmatprep.subr.bf16.mxu0 0
    %3387 = vmatpush1.bf16.msra.mxu0 %v3126
    %3388 = vmatprep.subr.bf16.mxu0 0
    %3389 = vmatpush1.bf16.msra.mxu0 %v3127
    %3390 = vmatprep.subr.bf16.mxu0 0
    %3391 = vmatpush1.bf16.msra.mxu0 %v3128
    %3392 = vmatprep.subr.bf16.mxu0 0
    %3393 = vmatpush1.bf16.msra.mxu0 %v3129
    %3394 = vmatprep.subr.bf16.mxu0 0
    %3395 = vmatpush1.bf16.msra.mxu0 %v3130
    %3396 = vmatprep.subr.bf16.mxu0 0
    %3397 = vmatpush1.bf16.msra.mxu0 %v3131
    %3398 = vmatprep.subr.bf16.mxu0 0
    %3399 = vmatpush1.bf16.msra.mxu0 %v3132
    %3400 = vmatprep.subr.bf16.mxu0 0
    %3401 = vmatpush1.bf16.msra.mxu0 %v3133
    %3402 = vmatprep.subr.bf16.mxu0 0
    %3403 = vmatpush1.bf16.msra.mxu0 %v3134
    %3404 = vmatprep.subr.bf16.mxu0 0
    %3405 = vmatpush1.bf16.msra.mxu0 %v3135
    %3406 = vmatprep.subr.bf16.mxu0 0
    %3407 = vmatpush1.bf16.msra.mxu0 %v3136
    %3408 = vmatprep.subr.bf16.mxu0 0
    %3409 = vmatpush1.bf16.msra.mxu0 %v3137
    %3410 = vmatprep.mubr.bf16.mxu0 %v2332
    %3411 = vmatmul.mubr.bf16.gmra.mrb[0].mxu0 %v2331
    %v3412 = vpop.f32.mrb[0].mxu0
    %v3413 = vadd.f32 %v2608, %v3412
    %v3414 = vpop.f32.mrb[0].mxu0
    %v3415 = vpop.f32.mrb[0].mxu0
    %v3416 = vadd.f32 %v2608, %v3415
    %v3417 = vpop.f32.mrb[0].mxu0
    %3418 = vdwg.mxu0
    %3419 = vmatprep.subr.bf16.mxu0 0
    %3420 = vmatpush1.bf16.msra.mxu0 %v3138
    %3421 = vmatprep.subr.bf16.mxu0 0
    %3422 = vmatpush1.bf16.msra.mxu0 %v3139
    %3423 = vmatprep.subr.bf16.mxu0 0
    %3424 = vmatpush1.bf16.msra.mxu0 %v3140
    %3425 = vmatprep.subr.bf16.mxu0 0
    %3426 = vmatpush1.bf16.msra.mxu0 %v3141
    %3427 = vmatprep.subr.bf16.mxu0 0
    %3428 = vmatpush1.bf16.msra.mxu0 %v3142
    %3429 = vmatprep.subr.bf16.mxu0 0
    %3430 = vmatpush1.bf16.msra.mxu0 %v3143
    %3431 = vmatprep.subr.bf16.mxu0 0
    %3432 = vmatpush1.bf16.msra.mxu0 %v3144
    %3433 = vmatprep.subr.bf16.mxu0 0
    %3434 = vmatpush1.bf16.msra.mxu0 %v3145
    %3435 = vmatprep.subr.bf16.mxu0 0
    %3436 = vmatpush1.bf16.msra.mxu0 %v3146
    %3437 = vmatprep.subr.bf16.mxu0 0
    %3438 = vmatpush1.bf16.msra.mxu0 %v3147
    %3439 = vmatprep.subr.bf16.mxu0 0
    %3440 = vmatpush1.bf16.msra.mxu0 %v3148
    %3441 = vmatprep.subr.bf16.mxu0 0
    %3442 = vmatpush1.bf16.msra.mxu0 %v3149
    %3443 = vmatprep.subr.bf16.mxu0 0
    %3444 = vmatpush1.bf16.msra.mxu0 %v3150
    %3445 = vmatprep.subr.bf16.mxu0 0
    %3446 = vmatpush1.bf16.msra.mxu0 %v3151
    %3447 = vmatprep.subr.bf16.mxu0 0
    %3448 = vmatpush1.bf16.msra.mxu0 %v3152
    %3449 = vmatprep.subr.bf16.mxu0 0
    %3450 = vmatpush1.bf16.msra.mxu0 %v3153
    %3451 = vmatprep.mubr.bf16.mxu0 %v2334
    %3452 = vmatmul.mubr.bf16.gmra.mrb[0].mxu0 %v2333
    %v3453 = vpop.f32.mrb[0].mxu0
    %v3454 = vadd.f32 %v3413, %v3453
    %v3455 = vpop.f32.mrb[0].mxu0
    %v3456 = vpop.f32.mrb[0].mxu0
    %v3457 = vadd.f32 %v3416, %v3456
    %v3458 = vpop.f32.mrb[0].mxu0
    %3459 = vdwg.mxu0
    %3460 = vmatprep.subr.bf16.mxu0 0
    %3461 = vmatpush1.bf16.msra.mxu0 %v3154
    %3462 = vmatprep.subr.bf16.mxu0 0
    %3463 = vmatpush1.bf16.msra.mxu0 %v3155
    %3464 = vmatprep.subr.bf16.mxu0 0
    %3465 = vmatpush1.bf16.msra.mxu0 %v3156
    %3466 = vmatprep.subr.bf16.mxu0 0
    %3467 = vmatpush1.bf16.msra.mxu0 %v3157
    %3468 = vmatprep.subr.bf16.mxu0 0
    %3469 = vmatpush1.bf16.msra.mxu0 %v3158
    %3470 = vmatprep.subr.bf16.mxu0 0
    %3471 = vmatpush1.bf16.msra.mxu0 %v3159
    %3472 = vmatprep.subr.bf16.mxu0 0
    %3473 = vmatpush1.bf16.msra.mxu0 %v3160
    %3474 = vmatprep.subr.bf16.mxu0 0
    %3475 = vmatpush1.bf16.msra.mxu0 %v3161
    %3476 = vmatprep.subr.bf16.mxu0 0
    %3477 = vmatpush1.bf16.msra.mxu0 %v3162
    %3478 = vmatprep.subr.bf16.mxu0 0
    %3479 = vmatpush1.bf16.msra.mxu0 %v3163
    %3480 = vmatprep.subr.bf16.mxu0 0
    %3481 = vmatpush1.bf16.msra.mxu0 %v3164
    %3482 = vmatprep.subr.bf16.mxu0 0
    %3483 = vmatpush1.bf16.msra.mxu0 %v3165
    %3484 = vmatprep.subr.bf16.mxu0 0
    %3485 = vmatpush1.bf16.msra.mxu0 %v3166
    %3486 = vmatprep.subr.bf16.mxu0 0
    %3487 = vmatpush1.bf16.msra.mxu0 %v3167
    %3488 = vmatprep.subr.bf16.mxu0 0
    %3489 = vmatpush1.bf16.msra.mxu0 %v3168
    %3490 = vmatprep.subr.bf16.mxu0 0
    %3491 = vmatpush1.bf16.msra.mxu0 %v3169
    %3492 = vmatprep.mubr.bf16.mxu0 %v2336
    %3493 = vmatmul.mubr.bf16.gmra.mrb[0].mxu0 %v2335
    %v3494 = vpop.f32.mrb[0].mxu0
    %v3495 = vadd.f32 %v3454, %v3494
    %v3496 = vpop.f32.mrb[0].mxu0
    %v3497 = vpop.f32.mrb[0].mxu0
    %v3498 = vadd.f32 %v3457, %v3497
    %v3499 = vpop.f32.mrb[0].mxu0
    %3500 = vdwg.mxu0
    %3501 = vmatprep.subr.bf16.mxu0 0
    %3502 = vmatpush1.bf16.msra.mxu0 %v3170
    %3503 = vmatprep.subr.bf16.mxu0 0
    %3504 = vmatpush1.bf16.msra.mxu0 %v3171
    %3505 = vmatprep.subr.bf16.mxu0 0
    %3506 = vmatpush1.bf16.msra.mxu0 %v3172
    %3507 = vmatprep.subr.bf16.mxu0 0
    %3508 = vmatpush1.bf16.msra.mxu0 %v3173
    %3509 = vmatprep.subr.bf16.mxu0 0
    %3510 = vmatpush1.bf16.msra.mxu0 %v3174
    %3511 = vmatprep.subr.bf16.mxu0 0
    %3512 = vmatpush1.bf16.msra.mxu0 %v3175
    %3513 = vmatprep.subr.bf16.mxu0 0
    %3514 = vmatpush1.bf16.msra.mxu0 %v3176
    %3515 = vmatprep.subr.bf16.mxu0 0
    %3516 = vmatpush1.bf16.msra.mxu0 %v3177
    %3517 = vmatprep.subr.bf16.mxu0 0
    %3518 = vmatpush1.bf16.msra.mxu0 %v3178
    %3519 = vmatprep.subr.bf16.mxu0 0
    %3520 = vmatpush1.bf16.msra.mxu0 %v3179
    %3521 = vmatprep.subr.bf16.mxu0 0
    %3522 = vmatpush1.bf16.msra.mxu0 %v3180
    %3523 = vmatprep.subr.bf16.mxu0 0
    %3524 = vmatpush1.bf16.msra.mxu0 %v3181
    %3525 = vmatprep.subr.bf16.mxu0 0
    %3526 = vmatpush1.bf16.msra.mxu0 %v3182
    %3527 = vmatprep.subr.bf16.mxu0 0
    %3528 = vmatpush1.bf16.msra.mxu0 %v3183
    %3529 = vmatprep.subr.bf16.mxu0 0
    %3530 = vmatpush1.bf16.msra.mxu0 %v3184
    %3531 = vmatprep.subr.bf16.mxu0 0
    %3532 = vmatpush1.bf16.msra.mxu0 %v3185
    %3533 = vmatprep.mubr.bf16.mxu0 %v2338
    %3534 = vmatmul.mubr.bf16.gmra.mrb[0].mxu0 %v2337
    %v3535 = vpop.f32.mrb[0].mxu0
    %v3536 = vadd.f32 %v3495, %v3535
    %v3537 = vpop.f32.mrb[0].mxu0
    %v3538 = vpop.f32.mrb[0].mxu0
    %v3539 = vadd.f32 %v3498, %v3538
    %v3540 = vpop.f32.mrb[0].mxu0
    %3541 = vdwg.mxu0
    %3542 = vmatprep.subr.bf16.mxu0 0
    %3543 = vmatpush1.bf16.msra.mxu0 %v3186
    %3544 = vmatprep.subr.bf16.mxu0 0
    %3545 = vmatpush1.bf16.msra.mxu0 %v3187
    %3546 = vmatprep.subr.bf16.mxu0 0
    %3547 = vmatpush1.bf16.msra.mxu0 %v3188
    %3548 = vmatprep.subr.bf16.mxu0 0
    %3549 = vmatpush1.bf16.msra.mxu0 %v3189
    %3550 = vmatprep.subr.bf16.mxu0 0
    %3551 = vmatpush1.bf16.msra.mxu0 %v3190
    %3552 = vmatprep.subr.bf16.mxu0 0
    %3553 = vmatpush1.bf16.msra.mxu0 %v3191
    %3554 = vmatprep.subr.bf16.mxu0 0
    %3555 = vmatpush1.bf16.msra.mxu0 %v3192
    %3556 = vmatprep.subr.bf16.mxu0 0
    %3557 = vmatpush1.bf16.msra.mxu0 %v3193
    %3558 = vmatprep.subr.bf16.mxu0 0
    %3559 = vmatpush1.bf16.msra.mxu0 %v3194
    %3560 = vmatprep.subr.bf16.mxu0 0
    %3561 = vmatpush1.bf16.msra.mxu0 %v3195
    %3562 = vmatprep.subr.bf16.mxu0 0
    %3563 = vmatpush1.bf16.msra.mxu0 %v3196
    %3564 = vmatprep.subr.bf16.mxu0 0
    %3565 = vmatpush1.bf16.msra.mxu0 %v3197
    %3566 = vmatprep.subr.bf16.mxu0 0
    %3567 = vmatpush1.bf16.msra.mxu0 %v3198
    %3568 = vmatprep.subr.bf16.mxu0 0
    %3569 = vmatpush1.bf16.msra.mxu0 %v3199
    %3570 = vmatprep.subr.bf16.mxu0 0
    %3571 = vmatpush1.bf16.msra.mxu0 %v3200
    %3572 = vmatprep.subr.bf16.mxu0 0
    %3573 = vmatpush1.bf16.msra.mxu0 %v3201
    %3574 = vmatprep.mubr.bf16.mxu0 %v2340
    %3575 = vmatmul.mubr.bf16.gmra.mrb[0].mxu0 %v2339
    %v3576 = vpop.f32.mrb[0].mxu0
    %v3577 = vadd.f32 %v3536, %v3576
    %v3578 = vpop.f32.mrb[0].mxu0
    %v3579 = vpop.f32.mrb[0].mxu0
    %v3580 = vadd.f32 %v3539, %v3579
    %v3581 = vpop.f32.mrb[0].mxu0
    %3582 = vdwg.mxu0
    %3583 = vmatprep.subr.bf16.mxu0 0
    %3584 = vmatpush1.bf16.msra.mxu0 %v3202
    %3585 = vmatprep.subr.bf16.mxu0 0
    %3586 = vmatpush1.bf16.msra.mxu0 %v3203
    %3587 = vmatprep.subr.bf16.mxu0 0
    %3588 = vmatpush1.bf16.msra.mxu0 %v3204
    %3589 = vmatprep.subr.bf16.mxu0 0
    %3590 = vmatpush1.bf16.msra.mxu0 %v3205
    %3591 = vmatprep.subr.bf16.mxu0 0
    %3592 = vmatpush1.bf16.msra.mxu0 %v3206
    %3593 = vmatprep.subr.bf16.mxu0 0
    %3594 = vmatpush1.bf16.msra.mxu0 %v3207
    %3595 = vmatprep.subr.bf16.mxu0 0
    %3596 = vmatpush1.bf16.msra.mxu0 %v3208
    %3597 = vmatprep.subr.bf16.mxu0 0
    %3598 = vmatpush1.bf16.msra.mxu0 %v3209
    %3599 = vmatprep.subr.bf16.mxu0 0
    %3600 = vmatpush1.bf16.msra.mxu0 %v3210
    %3601 = vmatprep.subr.bf16.mxu0 0
    %3602 = vmatpush1.bf16.msra.mxu0 %v3211
    %3603 = vmatprep.subr.bf16.mxu0 0
    %3604 = vmatpush1.bf16.msra.mxu0 %v3212
    %3605 = vmatprep.subr.bf16.mxu0 0
    %3606 = vmatpush1.bf16.msra.mxu0 %v3213
    %3607 = vmatprep.subr.bf16.mxu0 0
    %3608 = vmatpush1.bf16.msra.mxu0 %v3214
    %3609 = vmatprep.subr.bf16.mxu0 0
    %3610 = vmatpush1.bf16.msra.mxu0 %v3215
    %3611 = vmatprep.subr.bf16.mxu0 0
    %3612 = vmatpush1.bf16.msra.mxu0 %v3216
    %3613 = vmatprep.subr.bf16.mxu0 0
    %3614 = vmatpush1.bf16.msra.mxu0 %v3217
    %3615 = vmatprep.mubr.bf16.mxu0 %v2342
    %3616 = vmatmul.mubr.bf16.gmra.mrb[0].mxu0 %v2341
    %v3617 = vpop.f32.mrb[0].mxu0
    %v3618 = vadd.f32 %v3577, %v3617
    %v3619 = vpop.f32.mrb[0].mxu0
    %v3620 = vpop.f32.mrb[0].mxu0
    %v3621 = vadd.f32 %v3580, %v3620
    %v3622 = vpop.f32.mrb[0].mxu0
    %3623 = vdwg.mxu0
    %3624 = vmatprep.subr.bf16.mxu0 0
    %3625 = vmatpush1.bf16.msra.mxu0 %v3218
    %3626 = vmatprep.subr.bf16.mxu0 0
    %3627 = vmatpush1.bf16.msra.mxu0 %v3219
    %3628 = vmatprep.subr.bf16.mxu0 0
    %3629 = vmatpush1.bf16.msra.mxu0 %v3220
    %3630 = vmatprep.subr.bf16.mxu0 0
    %3631 = vmatpush1.bf16.msra.mxu0 %v3221
    %3632 = vmatprep.subr.bf16.mxu0 0
    %3633 = vmatpush1.bf16.msra.mxu0 %v3222
    %3634 = vmatprep.subr.bf16.mxu0 0
    %3635 = vmatpush1.bf16.msra.mxu0 %v3223
    %3636 = vmatprep.subr.bf16.mxu0 0
    %3637 = vmatpush1.bf16.msra.mxu0 %v3224
    %3638 = vmatprep.subr.bf16.mxu0 0
    %3639 = vmatpush1.bf16.msra.mxu0 %v3225
    %3640 = vmatprep.subr.bf16.mxu0 0
    %3641 = vmatpush1.bf16.msra.mxu0 %v3226
    %3642 = vmatprep.subr.bf16.mxu0 0
    %3643 = vmatpush1.bf16.msra.mxu0 %v3227
    %3644 = vmatprep.subr.bf16.mxu0 0
    %3645 = vmatpush1.bf16.msra.mxu0 %v3228
    %3646 = vmatprep.subr.bf16.mxu0 0
    %3647 = vmatpush1.bf16.msra.mxu0 %v3229
    %3648 = vmatprep.subr.bf16.mxu0 0
    %3649 = vmatpush1.bf16.msra.mxu0 %v3230
    %3650 = vmatprep.subr.bf16.mxu0 0
    %3651 = vmatpush1.bf16.msra.mxu0 %v3231
    %3652 = vmatprep.subr.bf16.mxu0 0
    %3653 = vmatpush1.bf16.msra.mxu0 %v3232
    %3654 = vmatprep.subr.bf16.mxu0 0
    %3655 = vmatpush1.bf16.msra.mxu0 %v3233
    %3656 = vmatprep.mubr.bf16.mxu0 %v2344
    %3657 = vmatmul.mubr.bf16.gmra.mrb[0].mxu0 %v2343
    %v3658 = vpop.f32.mrb[0].mxu0
    %v3659 = vadd.f32 %v3618, %v3658
    %v3660 = vpop.f32.mrb[0].mxu0
    %v3661 = vpop.f32.mrb[0].mxu0
    %v3662 = vadd.f32 %v3621, %v3661
    %v3663 = vpop.f32.mrb[0].mxu0
    %3664 = vdwg.mxu0
    %3665 = vmatprep.subr.bf16.mxu0 0
    %3666 = vmatpush1.bf16.msra.mxu0 %v3234
    %3667 = vmatprep.subr.bf16.mxu0 0
    %3668 = vmatpush1.bf16.msra.mxu0 %v3235
    %3669 = vmatprep.subr.bf16.mxu0 0
    %3670 = vmatpush1.bf16.msra.mxu0 %v3236
    %3671 = vmatprep.subr.bf16.mxu0 0
    %3672 = vmatpush1.bf16.msra.mxu0 %v3237
    %3673 = vmatprep.subr.bf16.mxu0 0
    %3674 = vmatpush1.bf16.msra.mxu0 %v3238
    %3675 = vmatprep.subr.bf16.mxu0 0
    %3676 = vmatpush1.bf16.msra.mxu0 %v3239
    %3677 = vmatprep.subr.bf16.mxu0 0
    %3678 = vmatpush1.bf16.msra.mxu0 %v3240
    %3679 = vmatprep.subr.bf16.mxu0 0
    %3680 = vmatpush1.bf16.msra.mxu0 %v3241
    %3681 = vmatprep.subr.bf16.mxu0 0
    %3682 = vmatpush1.bf16.msra.mxu0 %v3242
    %3683 = vmatprep.subr.bf16.mxu0 0
    %3684 = vmatpush1.bf16.msra.mxu0 %v3243
    %3685 = vmatprep.subr.bf16.mxu0 0
    %3686 = vmatpush1.bf16.msra.mxu0 %v3244
    %3687 = vmatprep.subr.bf16.mxu0 0
    %3688 = vmatpush1.bf16.msra.mxu0 %v3245
    %3689 = vmatprep.subr.bf16.mxu0 0
    %3690 = vmatpush1.bf16.msra.mxu0 %v3246
    %3691 = vmatprep.subr.bf16.mxu0 0
    %3692 = vmatpush1.bf16.msra.mxu0 %v3247
    %3693 = vmatprep.subr.bf16.mxu0 0
    %3694 = vmatpush1.bf16.msra.mxu0 %v3248
    %3695 = vmatprep.subr.bf16.mxu0 0
    %3696 = vmatpush1.bf16.msra.mxu0 %v3249
    %3697 = vmatprep.mubr.bf16.mxu0 %v2346
    %3698 = vmatmul.mubr.bf16.gmra.mrb[0].mxu0 %v2345
    %v3699 = vpop.f32.mrb[0].mxu0
    %v3700 = vadd.f32 %v3659, %v3699
    %v3701 = vpop.f32.mrb[0].mxu0
    %v3702 = vpop.f32.mrb[0].mxu0
    %v3703 = vadd.f32 %v3662, %v3702
    %v3704 = vpop.f32.mrb[0].mxu0
    %3705 = vdwg.mxu0
    %v3706 = vadd.f32 %v1615, %v3700
    %v3707 = vadd.f32 %v1616, %v3703
    %3708 = vst.msk [vmem:[#allocation2] sm:$0xff] %vm61, %v3706
    %3709 = vst.msk [vmem:[#allocation2 + $0x8] sm:$0xff] %vm61, %v3707
    // Predicated region
    $region58: #{tpu_custom_call.1} parent=1 // pred_check
      _
    $region59: #{tpu_custom_call.1} parent=1 // pred_check_branch
      %3711 = sbr.rel (0) target = $region61
    $region60: #{tpu_custom_call.1} parent=1 // pred_region
      %s3713 = ssub.s32 256, 256
      %3714 = vsyncadd [#allocation3], %s3713
      %s3715 = sshll.u32 [#allocation2], 4
      %s3716 = int_to_ptr.vmem [resolvable:$true] %s3715
      %3721 = dma.vmem_to_hbm [thread:$0]  %s3716, 256, %s14, [#allocation3], 128, 128, 8
    $region61: #{tpu_custom_call.1} parent=1 // pred_fallthru
      _
    // Predicated region
    $region62: #{tpu_custom_call.1} parent=1 // pred_check
      _
    $region63: #{tpu_custom_call.1} parent=1 // pred_check_branch
      %3723 = sbr.rel (0) target = $region65
    $region64: #{tpu_custom_call.1} parent=1 // pred_region
      %3724 = dma.done [#allocation3], 256
    $region65: #{tpu_custom_call.1} parent=1 // pred_fallthru
      _
    %3725 = vsyncpa [#allocation3], 1

</llo_original>
